<compile_context>
chip_gen: v6e
topology: v6e:2x2x1
jax: 0.10.0
libtpu: 0.0.40
codegen_flags: <defaults>
</compile_context>

<pallas_src>
import functools
import math

import jax
import jax.numpy as jnp
from jax.experimental import pallas as pl
from jax.experimental.pallas import tpu as pltpu

BASE_CHANNEL_NUM = 32   # Two_way_dense_layer.base_channel_num
BN_EPS = 1e-5


# ----------------------------- Pallas kernel --------------------------------

def _dense_block_kernel(x_ref, *refs, H, W, K, c_final, c_pad):
    """Whole Dense_Block for `bb` images, fully resident in VMEM.

    x_ref   : (bb, H, W, Cin)                      f32
    refs    : per layer [w1 (Cin_i,Cb) bf16, b1 (1,Cb) f32,
                         w31 (K*K*Cb,Cg) bf16, b31 (1,Cg) f32,
                         w32 (K*K*Cg,Cg) bf16, b32 (1,Cg) f32]
              then o_ref   (bb, H, W, c_pad)       f32
              then pad_ref (bb, H+2P, Wpad, Cscr)  bf16 scratch
    """
    n_layers = (len(refs) - 2) // 6
    o_ref = refs[6 * n_layers]
    pad_ref = refs[6 * n_layers + 1]

    P = K // 2
    bb = x_ref.shape[0]
    rows = bb * H * W

    # Zero the padded scratch once per grid step.  The border stays zero across
    # all convs of the step (interior is fully overwritten before every use),
    # so no per-conv re-zeroing.  Not gated on program_id()==0: with a megacore
    # parallel split each core has its own scratch and may never run step 0.
    pad_ref[...] = jnp.zeros_like(pad_ref)

    def conv3x3_bn_relu(a, w_ref, b_ref):
        """KxK stride-1 'same' conv + BN + ReLU as ONE im2col bf16 matmul."""
        c = a.shape[-1]
        pad_ref[:, P:P + H, P:P + W, :c] = (
            a.reshape(bb, H, W, c).astype(pad_ref.dtype))      # bf16 interior
        slab = jnp.concatenate(
            [pad_ref[:, kh:kh + H, kw:kw + W, :c].reshape(rows, c)
             for kh in range(K) for kw in range(K)],
            axis=-1)                                           # (rows, K*K*c)
        y = jnp.dot(slab, w_ref[...], preferred_element_type=jnp.float32)
        return jnp.maximum(y + b_ref[...], 0.0)                # (rows, Cout) f32

    act = x_ref[...].reshape(rows, x_ref.shape[-1])            # (rows, Cin) f32
    for i in range(n_layers):
        w1, b1, w31, b31, w32, b32 = refs[6 * i:6 * i + 6]
        # conv_1x1 + BN + ReLU : one MXU matmul (BN scale folded offline).
        xb = jnp.dot(act.astype(jnp.bfloat16), w1[...],
                     preferred_element_type=jnp.float32)
        xb = jnp.maximum(xb + b1[...], 0.0)                    # (rows, Cb) f32
        br1 = conv3x3_bn_relu(xb, w31, b31)                    # (rows, Cg)
        # PyTorch applies conv_3x3_1 twice to the same tensor with the same
        # weights, so branch 2's first conv equals br1 exactly (CSE'd).
        br2 = conv3x3_bn_relu(br1, w32, b32)                   # (rows, Cg)
        act = jnp.concatenate([act, br1, br2], axis=-1)        # torch.cat(dim=1)

    if c_pad > c_final:                                        # lane-dense pad
        act = jnp.concatenate(
            [act, jnp.zeros((rows, c_pad - c_final), act.dtype)], axis=-1)
    o_ref[...] = act.reshape(bb, H, W, c_pad).astype(o_ref.dtype)


def dense_block_forward(x_nchw, layers):
    """Whole Dense_Block in a single pallas_call (NCHW in / NCHW out)."""
    N, Cin, H, W = x_nchw.shape
    x = jnp.transpose(x_nchw, (0, 2, 3, 1))                   # NCHW -> NHWC
    K = 3
    P = K // 2

    cgs = [p["conv_3x3_2"]["w"].shape[-1] for p in layers]
    c_final = Cin + 2 * sum(cgs)
    c_pad = ((c_final + 127) // 128) * 128                     # lane-dense out
    c_scr = max(max(p["conv_3x3_1"]["w"].shape[0] // (K * K),
                    p["conv_3x3_2"]["w"].shape[0] // (K * K)) for p in layers)
    w_pad = ((W + 2 * P + 7) // 8) * 8                         # sublane align

    g = 2 if (N >= 2 and N % 2 == 0) else 1                    # one step per v7x TC
    bb = N // g

    flat = []
    in_specs = [pl.BlockSpec((bb, H, W, Cin), lambda n: (n, 0, 0, 0))]
    for p in layers:
        for name in ("conv_1x1", "conv_3x3_1", "conv_3x3_2"):
            w, b = p[name]["w"], p[name]["b"]
            flat += [w, b]
            in_specs += [pl.BlockSpec(w.shape, lambda n: (0, 0)),
                         pl.BlockSpec(b.shape, lambda n: (0, 0))]

    kern = functools.partial(_dense_block_kernel, H=H, W=W, K=K,
                             c_final=c_final, c_pad=c_pad)
    out = pl.pallas_call(
        kern,
        out_shape=jax.ShapeDtypeStruct((N, H, W, c_pad), jnp.float32),
        grid=(g,),
        in_specs=in_specs,
        out_specs=pl.BlockSpec((bb, H, W, c_pad), lambda n: (n, 0, 0, 0)),
        scratch_shapes=[
            pltpu.VMEM((bb, H + 2 * P, w_pad, c_scr), jnp.bfloat16)],
        compiler_params=pltpu.CompilerParams(
            dimension_semantics=("parallel",)),
        # TODO(synk): at real PeleeNet spatial sizes add an H-row tile grid axis
        # with halo rows and set vmem_limit_bytes (v7x scoped VMEM is smaller).
    )(x, *flat)

    out = out[..., :c_final]                                   # strip lane pad
    return jnp.transpose(out, (0, 3, 1, 2))                    # NHWC -> NCHW


# ----------------------------- parameter init -------------------------------

def _init_conv_bn(key, cin, cout, k):
    """Conv2d + BatchNorm2d params with BN folded into the conv (inference).

    Returns im2col-shaped bf16 weights (k*k*cin, cout) with the BN scale folded
    in, plus an f32 (1, cout) bias (conv bias + BN shift).
    """
    kw_, kb_, kg_, kbe_, km_, kv_ = jax.random.split(key, 6)
    fan_in = cin * k * k
    bound = 1.0 / math.sqrt(fan_in)
    w = jax.random.uniform(kw_, (k, k, cin, cout), jnp.float32, -bound, bound)
    conv_b = jax.random.uniform(kb_, (cout,), jnp.float32, -bound, bound)
    gamma = jax.random.uniform(kg_, (cout,), jnp.float32, 0.5, 1.5)
    beta = jax.random.normal(kbe_, (cout,), jnp.float32) * 0.1
    run_mean = jax.random.normal(km_, (cout,), jnp.float32) * 0.1
    run_var = jax.random.uniform(kv_, (cout,), jnp.float32, 0.5, 1.5)
    scale = gamma / jnp.sqrt(run_var + BN_EPS)
    w_folded = (w * scale).reshape(k * k * cin, cout).astype(jnp.bfloat16)
    bias = ((conv_b - run_mean) * scale + beta).reshape(1, cout)
    return {"w": w_folded, "b": bias.astype(jnp.float32), "k": k}


def init_two_way_layer(key, inp_channel, bottleneck_wid, growthrate):
    growth_channel = int(BASE_CHANNEL_NUM * growthrate / 2)
    bottleneck_out = int(growth_channel * bottleneck_wid / 4)
    if bottleneck_out > inp_channel / 2:
        bottleneck_out = int(bottleneck_out / 8) * 4
        print("bottleneck_out is too big,adjust it to:", bottleneck_out)
    k1, k2, k3 = jax.random.split(key, 3)
    return {
        "conv_1x1":   _init_conv_bn(k1, inp_channel,    bottleneck_out, 1),
        "conv_3x3_1": _init_conv_bn(k2, bottleneck_out, growth_channel, 3),
        "conv_3x3_2": _init_conv_bn(k3, growth_channel, growth_channel, 3),
    }


def init_dense_block(key, layer_num, inp_channel, bottleneck_wid, growthrate):
    keys = jax.random.split(key, layer_num)
    return [
        init_two_way_layer(keys[i],
                           inp_channel + i * growthrate * BASE_CHANNEL_NUM,
                           bottleneck_wid, growthrate)
        for i in range(layer_num)
    ]


# --------------------------- pure-JAX reference ------------------------------
# Uses the same folded bf16 weights and bf16 matmul operands with f32
# accumulation, so the comparison tolerance can stay tight.

def _ref_cna(x, p, padding):
    k = p["k"]
    cout = p["w"].shape[-1]
    cin = p["w"].shape[0] // (k * k)
    w4 = p["w"].reshape(k, k, cin, cout)             # bf16, HWIO
    y = jax.lax.conv_general_dilated(
        x.astype(jnp.bfloat16), w4, window_strides=(1, 1),
        padding=[(padding, padding), (padding, padding)],
        dimension_numbers=("NHWC", "HWIO", "NHWC"),
        preferred_element_type=jnp.float32)
    return jnp.maximum(y + p["b"], 0.0)


def dense_block_ref(x_nchw, layers):
    x = jnp.transpose(x_nchw, (0, 2, 3, 1))
    for p in layers:
        xb = _ref_cna(x,  p["conv_1x1"],   0)
        b1 = _ref_cna(xb, p["conv_3x3_1"], 1)
        b2 = _ref_cna(xb, p["conv_3x3_1"], 1)   # duplicate conv, as in PyTorch
        b2 = _ref_cna(b2, p["conv_3x3_2"], 1)
        x = jnp.concatenate([x, b1, b2], axis=-1)
    return jnp.transpose(x, (0, 3, 1, 2))


# --------------------------------- main --------------------------------------

if __name__ == "__main__":
    key = jax.random.PRNGKey(0)
    kx, kp = jax.random.split(key)

    # Dense_Block(layer_num=2, inp_channel=32, bottleneck_wid=4, growthrate=1)
    N, C, H, W = 2, 32, 8, 8
    layer_num, bottleneck_wid, growthrate = 2, 4, 1

    x = jax.random.normal(kx, (N, C, H, W), jnp.float32)        # NCHW input
    layers = init_dense_block(kp, layer_num, C, bottleneck_wid, growthrate)

    out = jax.block_until_ready(dense_block_forward(x, layers))
    ref = jax.block_until_ready(dense_block_ref(x, layers))

    expected_c = C + layer_num * growthrate * BASE_CHANNEL_NUM   # 32 + 2*32 = 96
    assert out.shape == (N, expected_c, H, W), out.shape
    assert out.dtype == jnp.float32
    max_err = float(jnp.max(jnp.abs(out - ref)))
    assert jnp.allclose(out, ref, atol=5e-3, rtol=5e-3), max_err

    print("KERNEL_OK")
</pallas_src>

<mosaic_0001>
module attributes {stable_mosaic.version = 11 : i64} {
  func.func @_dense_block_kernel(%arg0: i32, %arg1: memref<1x8x8x32xf32, #tpu.memory_space<vmem>>, %arg2: memref<32x16xbf16, #tpu.memory_space<vmem>>, %arg3: memref<1x16xf32, #tpu.memory_space<vmem>>, %arg4: memref<144x16xbf16, #tpu.memory_space<vmem>>, %arg5: memref<1x16xf32, #tpu.memory_space<vmem>>, %arg6: memref<144x16xbf16, #tpu.memory_space<vmem>>, %arg7: memref<1x16xf32, #tpu.memory_space<vmem>>, %arg8: memref<64x16xbf16, #tpu.memory_space<vmem>>, %arg9: memref<1x16xf32, #tpu.memory_space<vmem>>, %arg10: memref<144x16xbf16, #tpu.memory_space<vmem>>, %arg11: memref<1x16xf32, #tpu.memory_space<vmem>>, %arg12: memref<144x16xbf16, #tpu.memory_space<vmem>>, %arg13: memref<1x16xf32, #tpu.memory_space<vmem>>, %arg14: memref<1x8x8x128xf32, #tpu.memory_space<vmem>>, %arg15: memref<1x10x16x16xbf16, #tpu.memory_space<vmem>>) attributes {dimension_semantics = [#tpu.dimension_semantics<parallel>], iteration_bounds = array<i64: 2>, scalar_prefetch = 0 : i64, scratch_operands = 1 : i64, tpu.core_type = #tpu.core_type<tc>, window_params = [{transform_indices = @transform_0, window_bounds = array<i64: 1, 8, 8, 32>}, {pipeline_mode = #tpu.pipeline_mode<synchronous>, transform_indices = @transform_1, window_bounds = array<i64: 32, 16>}, {pipeline_mode = #tpu.pipeline_mode<synchronous>, transform_indices = @transform_2, window_bounds = array<i64: 1, 16>}, {pipeline_mode = #tpu.pipeline_mode<synchronous>, transform_indices = @transform_3, window_bounds = array<i64: 144, 16>}, {pipeline_mode = #tpu.pipeline_mode<synchronous>, transform_indices = @transform_4, window_bounds = array<i64: 1, 16>}, {pipeline_mode = #tpu.pipeline_mode<synchronous>, transform_indices = @transform_5, window_bounds = array<i64: 144, 16>}, {pipeline_mode = #tpu.pipeline_mode<synchronous>, transform_indices = @transform_6, window_bounds = array<i64: 1, 16>}, {pipeline_mode = #tpu.pipeline_mode<synchronous>, transform_indices = @transform_7, window_bounds = array<i64: 64, 16>}, {pipeline_mode = #tpu.pipeline_mode<synchronous>, transform_indices = @transform_8, window_bounds = array<i64: 1, 16>}, {pipeline_mode = #tpu.pipeline_mode<synchronous>, transform_indices = @transform_9, window_bounds = array<i64: 144, 16>}, {pipeline_mode = #tpu.pipeline_mode<synchronous>, transform_indices = @transform_10, window_bounds = array<i64: 1, 16>}, {pipeline_mode = #tpu.pipeline_mode<synchronous>, transform_indices = @transform_11, window_bounds = array<i64: 144, 16>}, {pipeline_mode = #tpu.pipeline_mode<synchronous>, transform_indices = @transform_12, window_bounds = array<i64: 1, 16>}, {transform_indices = @transform_13, window_bounds = array<i64: 1, 8, 8, 128>}]} {
    %cst = arith.constant 0.000000e+00 : bf16
    %0 = vector.broadcast %cst : bf16 to vector<1x10x16x16xbf16>
    %c0 = arith.constant 0 : index
    %c0_0 = arith.constant 0 : index
    %c0_1 = arith.constant 0 : index
    %c0_2 = arith.constant 0 : index
    %1 = vector.load %arg15[%c0, %c0_0, %c0_1, %c0_2] : memref<1x10x16x16xbf16, #tpu.memory_space<vmem>>, vector<1x10x16x16xbf16>
    tpu.vector_store %arg15[%c0, %c0_0, %c0_1, %c0_2], %0 {strides = array<i32>} : memref<1x10x16x16xbf16, #tpu.memory_space<vmem>>, vector<1x10x16x16xbf16>,
    %c0_3 = arith.constant 0 : index
    %c0_4 = arith.constant 0 : index
    %c0_5 = arith.constant 0 : index
    %c0_6 = arith.constant 0 : index
    %2 = vector.load %arg1[%c0_3, %c0_4, %c0_5, %c0_6] : memref<1x8x8x32xf32, #tpu.memory_space<vmem>>, vector<1x8x8x32xf32>
    %3 = vector.shape_cast %2 : vector<1x8x8x32xf32> to vector<64x32xf32>
    %4 = arith.truncf %3 : vector<64x32xf32> to vector<64x32xbf16>
    %c0_7 = arith.constant 0 : index
    %c0_8 = arith.constant 0 : index
    %5 = vector.load %arg2[%c0_7, %c0_8] : memref<32x16xbf16, #tpu.memory_space<vmem>>, vector<32x16xbf16>
    %cst_9 = arith.constant dense<0.000000e+00> : vector<64x16xf32>
    %6 = tpu.matmul %4, %5, %cst_9 {dimension_numbers = #tpu.dot_dimension_numbers<[1], [0], [0], [1], [0, 0, 1, 1], [], []>} : vector<64x32xbf16>, vector<32x16xbf16>, vector<64x16xf32> -> vector<64x16xf32>
    %c0_10 = arith.constant 0 : index
    %c0_11 = arith.constant 0 : index
    %7 = vector.load %arg3[%c0_10, %c0_11] : memref<1x16xf32, #tpu.memory_space<vmem>>, vector<1x16xf32>
    %8 = vector.broadcast %7 : vector<1x16xf32> to vector<64x16xf32>
    %9 = arith.addf %6, %8 : vector<64x16xf32>
    %cst_12 = arith.constant 0.000000e+00 : f32
    %10 = vector.broadcast %cst_12 : f32 to vector<64x16xf32>
    %11 = arith.maximumf %9, %10 : vector<64x16xf32>
    %12 = vector.shape_cast %11 : vector<64x16xf32> to vector<1x8x8x16xf32>
    %13 = arith.truncf %12 : vector<1x8x8x16xf32> to vector<1x8x8x16xbf16>
    %c0_13 = arith.constant 0 : index
    %c1 = arith.constant 1 : index
    %c1_14 = arith.constant 1 : index
    %c0_15 = arith.constant 0 : index
    %14 = vector.load %arg15[%c0_13, %c1, %c1_14, %c0_15] : memref<1x10x16x16xbf16, #tpu.memory_space<vmem>>, vector<1x8x8x16xbf16>
    tpu.vector_store %arg15[%c0_13, %c1, %c1_14, %c0_15], %13 {strides = array<i32>} : memref<1x10x16x16xbf16, #tpu.memory_space<vmem>>, vector<1x8x8x16xbf16>,
    %c0_16 = arith.constant 0 : index
    %c0_17 = arith.constant 0 : index
    %c0_18 = arith.constant 0 : index
    %c0_19 = arith.constant 0 : index
    %15 = vector.load %arg15[%c0_16, %c0_17, %c0_18, %c0_19] : memref<1x10x16x16xbf16, #tpu.memory_space<vmem>>, vector<1x8x8x16xbf16>
    %16 = vector.shape_cast %15 : vector<1x8x8x16xbf16> to vector<64x16xbf16>
    %c0_20 = arith.constant 0 : index
    %c0_21 = arith.constant 0 : index
    %c1_22 = arith.constant 1 : index
    %c0_23 = arith.constant 0 : index
    %17 = vector.load %arg15[%c0_20, %c0_21, %c1_22, %c0_23] : memref<1x10x16x16xbf16, #tpu.memory_space<vmem>>, vector<1x8x8x16xbf16>
    %18 = vector.shape_cast %17 : vector<1x8x8x16xbf16> to vector<64x16xbf16>
    %c0_24 = arith.constant 0 : index
    %c0_25 = arith.constant 0 : index
    %c2 = arith.constant 2 : index
    %c0_26 = arith.constant 0 : index
    %19 = vector.load %arg15[%c0_24, %c0_25, %c2, %c0_26] : memref<1x10x16x16xbf16, #tpu.memory_space<vmem>>, vector<1x8x8x16xbf16>
    %20 = vector.shape_cast %19 : vector<1x8x8x16xbf16> to vector<64x16xbf16>
    %c0_27 = arith.constant 0 : index
    %c1_28 = arith.constant 1 : index
    %c0_29 = arith.constant 0 : index
    %c0_30 = arith.constant 0 : index
    %21 = vector.load %arg15[%c0_27, %c1_28, %c0_29, %c0_30] : memref<1x10x16x16xbf16, #tpu.memory_space<vmem>>, vector<1x8x8x16xbf16>
    %22 = vector.shape_cast %21 : vector<1x8x8x16xbf16> to vector<64x16xbf16>
    %c0_31 = arith.constant 0 : index
    %c1_32 = arith.constant 1 : index
    %c1_33 = arith.constant 1 : index
    %c0_34 = arith.constant 0 : index
    %23 = vector.load %arg15[%c0_31, %c1_32, %c1_33, %c0_34] : memref<1x10x16x16xbf16, #tpu.memory_space<vmem>>, vector<1x8x8x16xbf16>
    %24 = vector.shape_cast %23 : vector<1x8x8x16xbf16> to vector<64x16xbf16>
    %c0_35 = arith.constant 0 : index
    %c1_36 = arith.constant 1 : index
    %c2_37 = arith.constant 2 : index
    %c0_38 = arith.constant 0 : index
    %25 = vector.load %arg15[%c0_35, %c1_36, %c2_37, %c0_38] : memref<1x10x16x16xbf16, #tpu.memory_space<vmem>>, vector<1x8x8x16xbf16>
    %26 = vector.shape_cast %25 : vector<1x8x8x16xbf16> to vector<64x16xbf16>
    %c0_39 = arith.constant 0 : index
    %c2_40 = arith.constant 2 : index
    %c0_41 = arith.constant 0 : index
    %c0_42 = arith.constant 0 : index
    %27 = vector.load %arg15[%c0_39, %c2_40, %c0_41, %c0_42] : memref<1x10x16x16xbf16, #tpu.memory_space<vmem>>, vector<1x8x8x16xbf16>
    %28 = vector.shape_cast %27 : vector<1x8x8x16xbf16> to vector<64x16xbf16>
    %c0_43 = arith.constant 0 : index
    %c2_44 = arith.constant 2 : index
    %c1_45 = arith.constant 1 : index
    %c0_46 = arith.constant 0 : index
    %29 = vector.load %arg15[%c0_43, %c2_44, %c1_45, %c0_46] : memref<1x10x16x16xbf16, #tpu.memory_space<vmem>>, vector<1x8x8x16xbf16>
    %30 = vector.shape_cast %29 : vector<1x8x8x16xbf16> to vector<64x16xbf16>
    %c0_47 = arith.constant 0 : index
    %c2_48 = arith.constant 2 : index
    %c2_49 = arith.constant 2 : index
    %c0_50 = arith.constant 0 : index
    %31 = vector.load %arg15[%c0_47, %c2_48, %c2_49, %c0_50] : memref<1x10x16x16xbf16, #tpu.memory_space<vmem>>, vector<1x8x8x16xbf16>
    %32 = vector.shape_cast %31 : vector<1x8x8x16xbf16> to vector<64x16xbf16>
    %33 = tpu.concatenate %16, %18, %20, %22, %24, %26, %28, %30, %32 in 1 : vector<64x16xbf16>, vector<64x16xbf16>, vector<64x16xbf16>, vector<64x16xbf16>, vector<64x16xbf16>, vector<64x16xbf16>, vector<64x16xbf16>, vector<64x16xbf16>, vector<64x16xbf16> -> vector<64x144xbf16>
    %c0_51 = arith.constant 0 : index
    %c0_52 = arith.constant 0 : index
    %34 = vector.load %arg4[%c0_51, %c0_52] : memref<144x16xbf16, #tpu.memory_space<vmem>>, vector<144x16xbf16>
    %cst_53 = arith.constant dense<0.000000e+00> : vector<64x16xf32>
    %35 = tpu.matmul %33, %34, %cst_53 {dimension_numbers = #tpu.dot_dimension_numbers<[1], [0], [0], [1], [0, 0, 1, 1], [], []>} : vector<64x144xbf16>, vector<144x16xbf16>, vector<64x16xf32> -> vector<64x16xf32>
    %c0_54 = arith.constant 0 : index
    %c0_55 = arith.constant 0 : index
    %36 = vector.load %arg5[%c0_54, %c0_55] : memref<1x16xf32, #tpu.memory_space<vmem>>, vector<1x16xf32>
    %37 = vector.broadcast %36 : vector<1x16xf32> to vector<64x16xf32>
    %38 = arith.addf %35, %37 : vector<64x16xf32>
    %cst_56 = arith.constant 0.000000e+00 : f32
    %39 = vector.broadcast %cst_56 : f32 to vector<64x16xf32>
    %40 = arith.maximumf %38, %39 : vector<64x16xf32>
    %41 = vector.shape_cast %40 : vector<64x16xf32> to vector<1x8x8x16xf32>
    %42 = arith.truncf %41 : vector<1x8x8x16xf32> to vector<1x8x8x16xbf16>
    %c0_57 = arith.constant 0 : index
    %c1_58 = arith.constant 1 : index
    %c1_59 = arith.constant 1 : index
    %c0_60 = arith.constant 0 : index
    %43 = vector.load %arg15[%c0_57, %c1_58, %c1_59, %c0_60] : memref<1x10x16x16xbf16, #tpu.memory_space<vmem>>, vector<1x8x8x16xbf16>
    tpu.vector_store %arg15[%c0_57, %c1_58, %c1_59, %c0_60], %42 {strides = array<i32>} : memref<1x10x16x16xbf16, #tpu.memory_space<vmem>>, vector<1x8x8x16xbf16>,
    %c0_61 = arith.constant 0 : index
    %c0_62 = arith.constant 0 : index
    %c0_63 = arith.constant 0 : index
    %c0_64 = arith.constant 0 : index
    %44 = vector.load %arg15[%c0_61, %c0_62, %c0_63, %c0_64] : memref<1x10x16x16xbf16, #tpu.memory_space<vmem>>, vector<1x8x8x16xbf16>
    %45 = vector.shape_cast %44 : vector<1x8x8x16xbf16> to vector<64x16xbf16>
    %c0_65 = arith.constant 0 : index
    %c0_66 = arith.constant 0 : index
    %c1_67 = arith.constant 1 : index
    %c0_68 = arith.constant 0 : index
    %46 = vector.load %arg15[%c0_65, %c0_66, %c1_67, %c0_68] : memref<1x10x16x16xbf16, #tpu.memory_space<vmem>>, vector<1x8x8x16xbf16>
    %47 = vector.shape_cast %46 : vector<1x8x8x16xbf16> to vector<64x16xbf16>
    %c0_69 = arith.constant 0 : index
    %c0_70 = arith.constant 0 : index
    %c2_71 = arith.constant 2 : index
    %c0_72 = arith.constant 0 : index
    %48 = vector.load %arg15[%c0_69, %c0_70, %c2_71, %c0_72] : memref<1x10x16x16xbf16, #tpu.memory_space<vmem>>, vector<1x8x8x16xbf16>
    %49 = vector.shape_cast %48 : vector<1x8x8x16xbf16> to vector<64x16xbf16>
    %c0_73 = arith.constant 0 : index
    %c1_74 = arith.constant 1 : index
    %c0_75 = arith.constant 0 : index
    %c0_76 = arith.constant 0 : index
    %50 = vector.load %arg15[%c0_73, %c1_74, %c0_75, %c0_76] : memref<1x10x16x16xbf16, #tpu.memory_space<vmem>>, vector<1x8x8x16xbf16>
    %51 = vector.shape_cast %50 : vector<1x8x8x16xbf16> to vector<64x16xbf16>
    %c0_77 = arith.constant 0 : index
    %c1_78 = arith.constant 1 : index
    %c1_79 = arith.constant 1 : index
    %c0_80 = arith.constant 0 : index
    %52 = vector.load %arg15[%c0_77, %c1_78, %c1_79, %c0_80] : memref<1x10x16x16xbf16, #tpu.memory_space<vmem>>, vector<1x8x8x16xbf16>
    %53 = vector.shape_cast %52 : vector<1x8x8x16xbf16> to vector<64x16xbf16>
    %c0_81 = arith.constant 0 : index
    %c1_82 = arith.constant 1 : index
    %c2_83 = arith.constant 2 : index
    %c0_84 = arith.constant 0 : index
    %54 = vector.load %arg15[%c0_81, %c1_82, %c2_83, %c0_84] : memref<1x10x16x16xbf16, #tpu.memory_space<vmem>>, vector<1x8x8x16xbf16>
    %55 = vector.shape_cast %54 : vector<1x8x8x16xbf16> to vector<64x16xbf16>
    %c0_85 = arith.constant 0 : index
    %c2_86 = arith.constant 2 : index
    %c0_87 = arith.constant 0 : index
    %c0_88 = arith.constant 0 : index
    %56 = vector.load %arg15[%c0_85, %c2_86, %c0_87, %c0_88] : memref<1x10x16x16xbf16, #tpu.memory_space<vmem>>, vector<1x8x8x16xbf16>
    %57 = vector.shape_cast %56 : vector<1x8x8x16xbf16> to vector<64x16xbf16>
    %c0_89 = arith.constant 0 : index
    %c2_90 = arith.constant 2 : index
    %c1_91 = arith.constant 1 : index
    %c0_92 = arith.constant 0 : index
    %58 = vector.load %arg15[%c0_89, %c2_90, %c1_91, %c0_92] : memref<1x10x16x16xbf16, #tpu.memory_space<vmem>>, vector<1x8x8x16xbf16>
    %59 = vector.shape_cast %58 : vector<1x8x8x16xbf16> to vector<64x16xbf16>
    %c0_93 = arith.constant 0 : index
    %c2_94 = arith.constant 2 : index
    %c2_95 = arith.constant 2 : index
    %c0_96 = arith.constant 0 : index
    %60 = vector.load %arg15[%c0_93, %c2_94, %c2_95, %c0_96] : memref<1x10x16x16xbf16, #tpu.memory_space<vmem>>, vector<1x8x8x16xbf16>
    %61 = vector.shape_cast %60 : vector<1x8x8x16xbf16> to vector<64x16xbf16>
    %62 = tpu.concatenate %45, %47, %49, %51, %53, %55, %57, %59, %61 in 1 : vector<64x16xbf16>, vector<64x16xbf16>, vector<64x16xbf16>, vector<64x16xbf16>, vector<64x16xbf16>, vector<64x16xbf16>, vector<64x16xbf16>, vector<64x16xbf16>, vector<64x16xbf16> -> vector<64x144xbf16>
    %c0_97 = arith.constant 0 : index
    %c0_98 = arith.constant 0 : index
    %63 = vector.load %arg6[%c0_97, %c0_98] : memref<144x16xbf16, #tpu.memory_space<vmem>>, vector<144x16xbf16>
    %cst_99 = arith.constant dense<0.000000e+00> : vector<64x16xf32>
    %64 = tpu.matmul %62, %63, %cst_99 {dimension_numbers = #tpu.dot_dimension_numbers<[1], [0], [0], [1], [0, 0, 1, 1], [], []>} : vector<64x144xbf16>, vector<144x16xbf16>, vector<64x16xf32> -> vector<64x16xf32>
    %c0_100 = arith.constant 0 : index
    %c0_101 = arith.constant 0 : index
    %65 = vector.load %arg7[%c0_100, %c0_101] : memref<1x16xf32, #tpu.memory_space<vmem>>, vector<1x16xf32>
    %66 = vector.broadcast %65 : vector<1x16xf32> to vector<64x16xf32>
    %67 = arith.addf %64, %66 : vector<64x16xf32>
    %cst_102 = arith.constant 0.000000e+00 : f32
    %68 = vector.broadcast %cst_102 : f32 to vector<64x16xf32>
    %69 = arith.maximumf %67, %68 : vector<64x16xf32>
    %70 = tpu.concatenate %3, %40, %69 in 1 : vector<64x32xf32>, vector<64x16xf32>, vector<64x16xf32> -> vector<64x64xf32>
    %71 = arith.truncf %70 : vector<64x64xf32> to vector<64x64xbf16>
    %c0_103 = arith.constant 0 : index
    %c0_104 = arith.constant 0 : index
    %72 = vector.load %arg8[%c0_103, %c0_104] : memref<64x16xbf16, #tpu.memory_space<vmem>>, vector<64x16xbf16>
    %cst_105 = arith.constant dense<0.000000e+00> : vector<64x16xf32>
    %73 = tpu.matmul %71, %72, %cst_105 {dimension_numbers = #tpu.dot_dimension_numbers<[1], [0], [0], [1], [0, 0, 1, 1], [], []>} : vector<64x64xbf16>, vector<64x16xbf16>, vector<64x16xf32> -> vector<64x16xf32>
    %c0_106 = arith.constant 0 : index
    %c0_107 = arith.constant 0 : index
    %74 = vector.load %arg9[%c0_106, %c0_107] : memref<1x16xf32, #tpu.memory_space<vmem>>, vector<1x16xf32>
    %75 = vector.broadcast %74 : vector<1x16xf32> to vector<64x16xf32>
    %76 = arith.addf %73, %75 : vector<64x16xf32>
    %cst_108 = arith.constant 0.000000e+00 : f32
    %77 = vector.broadcast %cst_108 : f32 to vector<64x16xf32>
    %78 = arith.maximumf %76, %77 : vector<64x16xf32>
    %79 = vector.shape_cast %78 : vector<64x16xf32> to vector<1x8x8x16xf32>
    %80 = arith.truncf %79 : vector<1x8x8x16xf32> to vector<1x8x8x16xbf16>
    %c0_109 = arith.constant 0 : index
    %c1_110 = arith.constant 1 : index
    %c1_111 = arith.constant 1 : index
    %c0_112 = arith.constant 0 : index
    %81 = vector.load %arg15[%c0_109, %c1_110, %c1_111, %c0_112] : memref<1x10x16x16xbf16, #tpu.memory_space<vmem>>, vector<1x8x8x16xbf16>
    tpu.vector_store %arg15[%c0_109, %c1_110, %c1_111, %c0_112], %80 {strides = array<i32>} : memref<1x10x16x16xbf16, #tpu.memory_space<vmem>>, vector<1x8x8x16xbf16>,
    %c0_113 = arith.constant 0 : index
    %c0_114 = arith.constant 0 : index
    %c0_115 = arith.constant 0 : index
    %c0_116 = arith.constant 0 : index
    %82 = vector.load %arg15[%c0_113, %c0_114, %c0_115, %c0_116] : memref<1x10x16x16xbf16, #tpu.memory_space<vmem>>, vector<1x8x8x16xbf16>
    %83 = vector.shape_cast %82 : vector<1x8x8x16xbf16> to vector<64x16xbf16>
    %c0_117 = arith.constant 0 : index
    %c0_118 = arith.constant 0 : index
    %c1_119 = arith.constant 1 : index
    %c0_120 = arith.constant 0 : index
    %84 = vector.load %arg15[%c0_117, %c0_118, %c1_119, %c0_120] : memref<1x10x16x16xbf16, #tpu.memory_space<vmem>>, vector<1x8x8x16xbf16>
    %85 = vector.shape_cast %84 : vector<1x8x8x16xbf16> to vector<64x16xbf16>
    %c0_121 = arith.constant 0 : index
    %c0_122 = arith.constant 0 : index
    %c2_123 = arith.constant 2 : index
    %c0_124 = arith.constant 0 : index
    %86 = vector.load %arg15[%c0_121, %c0_122, %c2_123, %c0_124] : memref<1x10x16x16xbf16, #tpu.memory_space<vmem>>, vector<1x8x8x16xbf16>
    %87 = vector.shape_cast %86 : vector<1x8x8x16xbf16> to vector<64x16xbf16>
    %c0_125 = arith.constant 0 : index
    %c1_126 = arith.constant 1 : index
    %c0_127 = arith.constant 0 : index
    %c0_128 = arith.constant 0 : index
    %88 = vector.load %arg15[%c0_125, %c1_126, %c0_127, %c0_128] : memref<1x10x16x16xbf16, #tpu.memory_space<vmem>>, vector<1x8x8x16xbf16>
    %89 = vector.shape_cast %88 : vector<1x8x8x16xbf16> to vector<64x16xbf16>
    %c0_129 = arith.constant 0 : index
    %c1_130 = arith.constant 1 : index
    %c1_131 = arith.constant 1 : index
    %c0_132 = arith.constant 0 : index
    %90 = vector.load %arg15[%c0_129, %c1_130, %c1_131, %c0_132] : memref<1x10x16x16xbf16, #tpu.memory_space<vmem>>, vector<1x8x8x16xbf16>
    %91 = vector.shape_cast %90 : vector<1x8x8x16xbf16> to vector<64x16xbf16>
    %c0_133 = arith.constant 0 : index
    %c1_134 = arith.constant 1 : index
    %c2_135 = arith.constant 2 : index
    %c0_136 = arith.constant 0 : index
    %92 = vector.load %arg15[%c0_133, %c1_134, %c2_135, %c0_136] : memref<1x10x16x16xbf16, #tpu.memory_space<vmem>>, vector<1x8x8x16xbf16>
    %93 = vector.shape_cast %92 : vector<1x8x8x16xbf16> to vector<64x16xbf16>
    %c0_137 = arith.constant 0 : index
    %c2_138 = arith.constant 2 : index
    %c0_139 = arith.constant 0 : index
    %c0_140 = arith.constant 0 : index
    %94 = vector.load %arg15[%c0_137, %c2_138, %c0_139, %c0_140] : memref<1x10x16x16xbf16, #tpu.memory_space<vmem>>, vector<1x8x8x16xbf16>
    %95 = vector.shape_cast %94 : vector<1x8x8x16xbf16> to vector<64x16xbf16>
    %c0_141 = arith.constant 0 : index
    %c2_142 = arith.constant 2 : index
    %c1_143 = arith.constant 1 : index
    %c0_144 = arith.constant 0 : index
    %96 = vector.load %arg15[%c0_141, %c2_142, %c1_143, %c0_144] : memref<1x10x16x16xbf16, #tpu.memory_space<vmem>>, vector<1x8x8x16xbf16>
    %97 = vector.shape_cast %96 : vector<1x8x8x16xbf16> to vector<64x16xbf16>
    %c0_145 = arith.constant 0 : index
    %c2_146 = arith.constant 2 : index
    %c2_147 = arith.constant 2 : index
    %c0_148 = arith.constant 0 : index
    %98 = vector.load %arg15[%c0_145, %c2_146, %c2_147, %c0_148] : memref<1x10x16x16xbf16, #tpu.memory_space<vmem>>, vector<1x8x8x16xbf16>
    %99 = vector.shape_cast %98 : vector<1x8x8x16xbf16> to vector<64x16xbf16>
    %100 = tpu.concatenate %83, %85, %87, %89, %91, %93, %95, %97, %99 in 1 : vector<64x16xbf16>, vector<64x16xbf16>, vector<64x16xbf16>, vector<64x16xbf16>, vector<64x16xbf16>, vector<64x16xbf16>, vector<64x16xbf16>, vector<64x16xbf16>, vector<64x16xbf16> -> vector<64x144xbf16>
    %c0_149 = arith.constant 0 : index
    %c0_150 = arith.constant 0 : index
    %101 = vector.load %arg10[%c0_149, %c0_150] : memref<144x16xbf16, #tpu.memory_space<vmem>>, vector<144x16xbf16>
    %cst_151 = arith.constant dense<0.000000e+00> : vector<64x16xf32>
    %102 = tpu.matmul %100, %101, %cst_151 {dimension_numbers = #tpu.dot_dimension_numbers<[1], [0], [0], [1], [0, 0, 1, 1], [], []>} : vector<64x144xbf16>, vector<144x16xbf16>, vector<64x16xf32> -> vector<64x16xf32>
    %c0_152 = arith.constant 0 : index
    %c0_153 = arith.constant 0 : index
    %103 = vector.load %arg11[%c0_152, %c0_153] : memref<1x16xf32, #tpu.memory_space<vmem>>, vector<1x16xf32>
    %104 = vector.broadcast %103 : vector<1x16xf32> to vector<64x16xf32>
    %105 = arith.addf %102, %104 : vector<64x16xf32>
    %cst_154 = arith.constant 0.000000e+00 : f32
    %106 = vector.broadcast %cst_154 : f32 to vector<64x16xf32>
    %107 = arith.maximumf %105, %106 : vector<64x16xf32>
    %108 = vector.shape_cast %107 : vector<64x16xf32> to vector<1x8x8x16xf32>
    %109 = arith.truncf %108 : vector<1x8x8x16xf32> to vector<1x8x8x16xbf16>
    %c0_155 = arith.constant 0 : index
    %c1_156 = arith.constant 1 : index
    %c1_157 = arith.constant 1 : index
    %c0_158 = arith.constant 0 : index
    %110 = vector.load %arg15[%c0_155, %c1_156, %c1_157, %c0_158] : memref<1x10x16x16xbf16, #tpu.memory_space<vmem>>, vector<1x8x8x16xbf16>
    tpu.vector_store %arg15[%c0_155, %c1_156, %c1_157, %c0_158], %109 {strides = array<i32>} : memref<1x10x16x16xbf16, #tpu.memory_space<vmem>>, vector<1x8x8x16xbf16>,
    %c0_159 = arith.constant 0 : index
    %c0_160 = arith.constant 0 : index
    %c0_161 = arith.constant 0 : index
    %c0_162 = arith.constant 0 : index
    %111 = vector.load %arg15[%c0_159, %c0_160, %c0_161, %c0_162] : memref<1x10x16x16xbf16, #tpu.memory_space<vmem>>, vector<1x8x8x16xbf16>
    %112 = vector.shape_cast %111 : vector<1x8x8x16xbf16> to vector<64x16xbf16>
    %c0_163 = arith.constant 0 : index
    %c0_164 = arith.constant 0 : index
    %c1_165 = arith.constant 1 : index
    %c0_166 = arith.constant 0 : index
    %113 = vector.load %arg15[%c0_163, %c0_164, %c1_165, %c0_166] : memref<1x10x16x16xbf16, #tpu.memory_space<vmem>>, vector<1x8x8x16xbf16>
    %114 = vector.shape_cast %113 : vector<1x8x8x16xbf16> to vector<64x16xbf16>
    %c0_167 = arith.constant 0 : index
    %c0_168 = arith.constant 0 : index
    %c2_169 = arith.constant 2 : index
    %c0_170 = arith.constant 0 : index
    %115 = vector.load %arg15[%c0_167, %c0_168, %c2_169, %c0_170] : memref<1x10x16x16xbf16, #tpu.memory_space<vmem>>, vector<1x8x8x16xbf16>
    %116 = vector.shape_cast %115 : vector<1x8x8x16xbf16> to vector<64x16xbf16>
    %c0_171 = arith.constant 0 : index
    %c1_172 = arith.constant 1 : index
    %c0_173 = arith.constant 0 : index
    %c0_174 = arith.constant 0 : index
    %117 = vector.load %arg15[%c0_171, %c1_172, %c0_173, %c0_174] : memref<1x10x16x16xbf16, #tpu.memory_space<vmem>>, vector<1x8x8x16xbf16>
    %118 = vector.shape_cast %117 : vector<1x8x8x16xbf16> to vector<64x16xbf16>
    %c0_175 = arith.constant 0 : index
    %c1_176 = arith.constant 1 : index
    %c1_177 = arith.constant 1 : index
    %c0_178 = arith.constant 0 : index
    %119 = vector.load %arg15[%c0_175, %c1_176, %c1_177, %c0_178] : memref<1x10x16x16xbf16, #tpu.memory_space<vmem>>, vector<1x8x8x16xbf16>
    %120 = vector.shape_cast %119 : vector<1x8x8x16xbf16> to vector<64x16xbf16>
    %c0_179 = arith.constant 0 : index
    %c1_180 = arith.constant 1 : index
    %c2_181 = arith.constant 2 : index
    %c0_182 = arith.constant 0 : index
    %121 = vector.load %arg15[%c0_179, %c1_180, %c2_181, %c0_182] : memref<1x10x16x16xbf16, #tpu.memory_space<vmem>>, vector<1x8x8x16xbf16>
    %122 = vector.shape_cast %121 : vector<1x8x8x16xbf16> to vector<64x16xbf16>
    %c0_183 = arith.constant 0 : index
    %c2_184 = arith.constant 2 : index
    %c0_185 = arith.constant 0 : index
    %c0_186 = arith.constant 0 : index
    %123 = vector.load %arg15[%c0_183, %c2_184, %c0_185, %c0_186] : memref<1x10x16x16xbf16, #tpu.memory_space<vmem>>, vector<1x8x8x16xbf16>
    %124 = vector.shape_cast %123 : vector<1x8x8x16xbf16> to vector<64x16xbf16>
    %c0_187 = arith.constant 0 : index
    %c2_188 = arith.constant 2 : index
    %c1_189 = arith.constant 1 : index
    %c0_190 = arith.constant 0 : index
    %125 = vector.load %arg15[%c0_187, %c2_188, %c1_189, %c0_190] : memref<1x10x16x16xbf16, #tpu.memory_space<vmem>>, vector<1x8x8x16xbf16>
    %126 = vector.shape_cast %125 : vector<1x8x8x16xbf16> to vector<64x16xbf16>
    %c0_191 = arith.constant 0 : index
    %c2_192 = arith.constant 2 : index
    %c2_193 = arith.constant 2 : index
    %c0_194 = arith.constant 0 : index
    %127 = vector.load %arg15[%c0_191, %c2_192, %c2_193, %c0_194] : memref<1x10x16x16xbf16, #tpu.memory_space<vmem>>, vector<1x8x8x16xbf16>
    %128 = vector.shape_cast %127 : vector<1x8x8x16xbf16> to vector<64x16xbf16>
    %129 = tpu.concatenate %112, %114, %116, %118, %120, %122, %124, %126, %128 in 1 : vector<64x16xbf16>, vector<64x16xbf16>, vector<64x16xbf16>, vector<64x16xbf16>, vector<64x16xbf16>, vector<64x16xbf16>, vector<64x16xbf16>, vector<64x16xbf16>, vector<64x16xbf16> -> vector<64x144xbf16>
    %c0_195 = arith.constant 0 : index
    %c0_196 = arith.constant 0 : index
    %130 = vector.load %arg12[%c0_195, %c0_196] : memref<144x16xbf16, #tpu.memory_space<vmem>>, vector<144x16xbf16>
    %cst_197 = arith.constant dense<0.000000e+00> : vector<64x16xf32>
    %131 = tpu.matmul %129, %130, %cst_197 {dimension_numbers = #tpu.dot_dimension_numbers<[1], [0], [0], [1], [0, 0, 1, 1], [], []>} : vector<64x144xbf16>, vector<144x16xbf16>, vector<64x16xf32> -> vector<64x16xf32>
    %c0_198 = arith.constant 0 : index
    %c0_199 = arith.constant 0 : index
    %132 = vector.load %arg13[%c0_198, %c0_199] : memref<1x16xf32, #tpu.memory_space<vmem>>, vector<1x16xf32>
    %133 = vector.broadcast %132 : vector<1x16xf32> to vector<64x16xf32>
    %134 = arith.addf %131, %133 : vector<64x16xf32>
    %cst_200 = arith.constant 0.000000e+00 : f32
    %135 = vector.broadcast %cst_200 : f32 to vector<64x16xf32>
    %136 = arith.maximumf %134, %135 : vector<64x16xf32>
    %137 = tpu.concatenate %70, %107, %136 in 1 : vector<64x64xf32>, vector<64x16xf32>, vector<64x16xf32> -> vector<64x96xf32>
    %cst_201 = arith.constant 0.000000e+00 : f32
    %138 = vector.broadcast %cst_201 : f32 to vector<64x32xf32>
    %139 = tpu.concatenate %137, %138 in 1 : vector<64x96xf32>, vector<64x32xf32> -> vector<64x128xf32>
    %140 = vector.shape_cast %139 : vector<64x128xf32> to vector<1x8x8x128xf32>
    %c0_202 = arith.constant 0 : index
    %c0_203 = arith.constant 0 : index
    %c0_204 = arith.constant 0 : index
    %c0_205 = arith.constant 0 : index
    %141 = vector.load %arg14[%c0_202, %c0_203, %c0_204, %c0_205] : memref<1x8x8x128xf32, #tpu.memory_space<vmem>>, vector<1x8x8x128xf32>
    tpu.vector_store %arg14[%c0_202, %c0_203, %c0_204, %c0_205], %140 {strides = array<i32>} : memref<1x8x8x128xf32, #tpu.memory_space<vmem>>, vector<1x8x8x128xf32>,
    return
  }
  func.func @transform_0(%arg0: i32) -> (i32, i32, i32, i32) {
    %c0_i32 = arith.constant 0 : i32
    %c0_i32_0 = arith.constant 0 : i32
    %c0_i32_1 = arith.constant 0 : i32
    %c0_i32_2 = arith.constant 0 : i32
    return %arg0, %c0_i32, %c0_i32_0, %c0_i32_1 : i32, i32, i32, i32
  }
  func.func @transform_1(%arg0: i32) -> (i32, i32) {
    %c0_i32 = arith.constant 0 : i32
    %c0_i32_0 = arith.constant 0 : i32
    %c0_i32_1 = arith.constant 0 : i32
    return %c0_i32, %c0_i32_0 : i32, i32
  }
  func.func @transform_2(%arg0: i32) -> (i32, i32) {
    %c0_i32 = arith.constant 0 : i32
    %c0_i32_0 = arith.constant 0 : i32
    %c0_i32_1 = arith.constant 0 : i32
    return %c0_i32, %c0_i32_0 : i32, i32
  }
  func.func @transform_3(%arg0: i32) -> (i32, i32) {
    %c0_i32 = arith.constant 0 : i32
    %c0_i32_0 = arith.constant 0 : i32
    %c0_i32_1 = arith.constant 0 : i32
    return %c0_i32, %c0_i32_0 : i32, i32
  }
  func.func @transform_4(%arg0: i32) -> (i32, i32) {
    %c0_i32 = arith.constant 0 : i32
    %c0_i32_0 = arith.constant 0 : i32
    %c0_i32_1 = arith.constant 0 : i32
    return %c0_i32, %c0_i32_0 : i32, i32
  }
  func.func @transform_5(%arg0: i32) -> (i32, i32) {
    %c0_i32 = arith.constant 0 : i32
    %c0_i32_0 = arith.constant 0 : i32
    %c0_i32_1 = arith.constant 0 : i32
    return %c0_i32, %c0_i32_0 : i32, i32
  }
  func.func @transform_6(%arg0: i32) -> (i32, i32) {
    %c0_i32 = arith.constant 0 : i32
    %c0_i32_0 = arith.constant 0 : i32
    %c0_i32_1 = arith.constant 0 : i32
    return %c0_i32, %c0_i32_0 : i32, i32
  }
  func.func @transform_7(%arg0: i32) -> (i32, i32) {
    %c0_i32 = arith.constant 0 : i32
    %c0_i32_0 = arith.constant 0 : i32
    %c0_i32_1 = arith.constant 0 : i32
    return %c0_i32, %c0_i32_0 : i32, i32
  }
  func.func @transform_8(%arg0: i32) -> (i32, i32) {
    %c0_i32 = arith.constant 0 : i32
    %c0_i32_0 = arith.constant 0 : i32
    %c0_i32_1 = arith.constant 0 : i32
    return %c0_i32, %c0_i32_0 : i32, i32
  }
  func.func @transform_9(%arg0: i32) -> (i32, i32) {
    %c0_i32 = arith.constant 0 : i32
    %c0_i32_0 = arith.constant 0 : i32
    %c0_i32_1 = arith.constant 0 : i32
    return %c0_i32, %c0_i32_0 : i32, i32
  }
  func.func @transform_10(%arg0: i32) -> (i32, i32) {
    %c0_i32 = arith.constant 0 : i32
    %c0_i32_0 = arith.constant 0 : i32
    %c0_i32_1 = arith.constant 0 : i32
    return %c0_i32, %c0_i32_0 : i32, i32
  }
  func.func @transform_11(%arg0: i32) -> (i32, i32) {
    %c0_i32 = arith.constant 0 : i32
    %c0_i32_0 = arith.constant 0 : i32
    %c0_i32_1 = arith.constant 0 : i32
    return %c0_i32, %c0_i32_0 : i32, i32
  }
  func.func @transform_12(%arg0: i32) -> (i32, i32) {
    %c0_i32 = arith.constant 0 : i32
    %c0_i32_0 = arith.constant 0 : i32
    %c0_i32_1 = arith.constant 0 : i32
    return %c0_i32, %c0_i32_0 : i32, i32
  }
  func.func @transform_13(%arg0: i32) -> (i32, i32, i32, i32) {
    %c0_i32 = arith.constant 0 : i32
    %c0_i32_0 = arith.constant 0 : i32
    %c0_i32_1 = arith.constant 0 : i32
    %c0_i32_2 = arith.constant 0 : i32
    return %arg0, %c0_i32, %c0_i32_0, %c0_i32_1 : i32, i32, i32, i32
  }
}

</mosaic_0001>

<llo_original>
// kernel: tpu_custom_call.1
$region0: #{tpu_custom_call.1}
  #allocation0 [shape = 'u32[]', space=smem, size = 0x4, offset = 0x4, fixed_abs, tag = 'smem constant byte address 0x4 - core index']
  #allocation1 [shape = 'u32[144,128]{1,0:T(1,128)}', space=vmem, size = 0x12000, scoped, tag = 'internal scratch']
  #allocation2 [shape = 'bf16[1,10,16,16]{3,2,1,0:T(8,128)(2,1)}', space=vmem, size = 0xa000, scoped, tag = 'scratch operand']
  %s0 = inlined_call_operand.vmem [shape: f32[2,8,8,32], index: 0, kind: input, shape index: {}]
  %s1 = inlined_call_operand.vmem [shape: bf16[32,16], index: 1, kind: input, shape index: {}]
  %s2 = inlined_call_operand.vmem [shape: f32[1,16], index: 2, kind: input, shape index: {}]
  %s3 = inlined_call_operand.vmem [shape: bf16[144,16], index: 3, kind: input, shape index: {}]
  %s4 = inlined_call_operand.vmem [shape: f32[1,16], index: 4, kind: input, shape index: {}]
  %s5 = inlined_call_operand.vmem [shape: bf16[144,16], index: 5, kind: input, shape index: {}]
  %s6 = inlined_call_operand.vmem [shape: f32[1,16], index: 6, kind: input, shape index: {}]
  %s7 = inlined_call_operand.vmem [shape: bf16[64,16], index: 7, kind: input, shape index: {}]
  %s8 = inlined_call_operand.vmem [shape: f32[1,16], index: 8, kind: input, shape index: {}]
  %s9 = inlined_call_operand.vmem [shape: bf16[144,16], index: 9, kind: input, shape index: {}]
  %s10 = inlined_call_operand.vmem [shape: f32[1,16], index: 10, kind: input, shape index: {}]
  %s11 = inlined_call_operand.vmem [shape: bf16[144,16], index: 11, kind: input, shape index: {}]
  %s12 = inlined_call_operand.vmem [shape: f32[1,16], index: 12, kind: input, shape index: {}]
  %s13 = inlined_call_operand.hbm [shape: f32[2,8,8,128], index: 13, kind: output, shape index: {}]
  %s14 = sld [smem:[#allocation0]]
  $region85: #{tpu_custom_call.1} parent=0
    _
  %s16 = ssub.s32 1, %s14
  %s17 = scalar_select 0, %s16, %s14
  $region1: #{tpu_custom_call.1} parent=0
    #allocation3 [shape = 'u8[65536]{0}', space=vmem, size = 0x10000, scoped, tag = 'output window, operand 0']
    #allocation4 [shape = 's32[2]{0}', space=sflag, size = 0x8, scoped, tag = 'scoped memory for tpu_custom_call.1']
    %18 = vsyncpa [#allocation4], 0
    %s19 = scalar_lea.sflag [#allocation4], 1
    %20 = vsyncpa %s19, 0
    loop: start=0, step=1, limit=4
    $region2: #{tpu_custom_call.1} parent=1 // loop_pre_header
      _
    $region3: #{tpu_custom_call.1} parent=1 // loop_header
      %s22 = sphi 0, %s26
      %p23 = scmp.ge.s32.totalorder %s22, 4
      %s32 = sphi 0, %s34
      %s35 = sphi 0, %s32
      %s36 = sphi 0, %s35
      %s52 = sphi 0, %s36
      %s56 = sphi 0, %s56
      %s58 = sphi 0, %s56
      %s59 = sphi 0, %s58
      %s73 = sphi 0, %s59
      %s77 = sphi 0, %s77
      %s79 = sphi 0, %s77
      %s80 = sphi 0, %s79
      %s94 = sphi 0, %s80
      %s98 = sphi 0, %s98
      %s100 = sphi 0, %s98
      %s101 = sphi 0, %s100
      %s115 = sphi 0, %s101
      %s119 = sphi 0, %s119
      %s121 = sphi 0, %s119
      %s122 = sphi 0, %s121
      %s136 = sphi 0, %s122
      %s140 = sphi 0, %s140
      %s142 = sphi 0, %s140
      %s143 = sphi 0, %s142
      %s157 = sphi 0, %s143
      %s161 = sphi 0, %s161
      %s163 = sphi 0, %s161
      %s164 = sphi 0, %s163
      %s178 = sphi 0, %s164
      %s182 = sphi 0, %s182
      %s184 = sphi 0, %s182
      %s185 = sphi 0, %s184
      %s199 = sphi 0, %s185
      %s203 = sphi 0, %s203
      %s205 = sphi 0, %s203
      %s206 = sphi 0, %s205
      %s220 = sphi 0, %s206
      %s224 = sphi 0, %s224
      %s226 = sphi 0, %s224
      %s227 = sphi 0, %s226
      %s241 = sphi 0, %s227
      %s245 = sphi 0, %s245
      %s247 = sphi 0, %s245
      %s248 = sphi 0, %s247
      %s262 = sphi 0, %s248
      %s266 = sphi 0, %s266
      %s268 = sphi 0, %s266
      %s269 = sphi 0, %s268
      %s283 = sphi 0, %s269
      %s287 = sphi 0, %s287
      %s289 = sphi 0, %s287
      %s290 = sphi 0, %s289
      %s304 = sphi 0, %s290
      %s310 = sphi 0, %s312
      %s313 = sphi 0, %s310
      %s314 = sphi 0, %s313
      %s330 = sphi 0, %s314
    $region4: #{tpu_custom_call.1} parent=1 // loop_header_branch
      %25 = sbr.rel (%p23) target = $region8
    $region5: #{tpu_custom_call.1} parent=1 // loop_body
      %s27 = ssub.s32 %s22, 1
      %s28 = ssub.s32 %s22, 2
      %s29 = sadd.s32 %s22, 1
      %s30 = ssub.s32 %s22, %s29
      %p31 = scmp.eq.s32.totalorder %s30, 0
      %s33 = sadd.s32 %s32, 1
      %s34 = scalar_select %p31, %s32, %s33
      %p37 = pneg %p31
      %p38 = scmp.eq.s32.totalorder %s22, 1
      %p39 = por %p37, %p38
      %p40 = scmp.ne.s32.totalorder %s32, %s35
      %p41 = scmp.eq.s32.totalorder %s22, 0
      %p42 = por %p40, %p41
      %p43 = scmp.ne.s32.totalorder %s32, %s35
      %p44 = scmp.eq.s32.totalorder %s27, 1
      %p45 = por %p43, %p44
      %p46 = scmp.ne.s32.totalorder %s35, %s36
      %p47 = scmp.eq.s32.totalorder %s27, 0
      %p48 = por %p46, %p47
      %p49 = scmp.ne.s32.totalorder %s35, %s36
      %p50 = scmp.eq.s32.totalorder %s28, 1
      %p51 = por %p49, %p50
      %p53 = scmp.ne.s32.totalorder %s36, %s52
      %p54 = scmp.eq.s32.totalorder %s28, 0
      %p55 = por %p53, %p54
      %s57 = sadd.s32 %s56, 1
      %p60 = scmp.eq.s32.totalorder %s22, 1
      %p61 = scmp.ne.s32.totalorder %s56, %s58
      %p62 = scmp.eq.s32.totalorder %s22, 0
      %p63 = por %p61, %p62
      %p64 = scmp.ne.s32.totalorder %s56, %s58
      %p65 = scmp.eq.s32.totalorder %s27, 1
      %p66 = por %p64, %p65
      %p67 = scmp.ne.s32.totalorder %s58, %s59
      %p68 = scmp.eq.s32.totalorder %s27, 0
      %p69 = por %p67, %p68
      %p70 = scmp.ne.s32.totalorder %s58, %s59
      %p71 = scmp.eq.s32.totalorder %s28, 1
      %p72 = por %p70, %p71
      %p74 = scmp.ne.s32.totalorder %s59, %s73
      %p75 = scmp.eq.s32.totalorder %s28, 0
      %p76 = por %p74, %p75
      %s78 = sadd.s32 %s77, 1
      %p81 = scmp.eq.s32.totalorder %s22, 1
      %p82 = scmp.ne.s32.totalorder %s77, %s79
      %p83 = scmp.eq.s32.totalorder %s22, 0
      %p84 = por %p82, %p83
      %p85 = scmp.ne.s32.totalorder %s77, %s79
      %p86 = scmp.eq.s32.totalorder %s27, 1
      %p87 = por %p85, %p86
      %p88 = scmp.ne.s32.totalorder %s79, %s80
      %p89 = scmp.eq.s32.totalorder %s27, 0
      %p90 = por %p88, %p89
      %p91 = scmp.ne.s32.totalorder %s79, %s80
      %p92 = scmp.eq.s32.totalorder %s28, 1
      %p93 = por %p91, %p92
      %p95 = scmp.ne.s32.totalorder %s80, %s94
      %p96 = scmp.eq.s32.totalorder %s28, 0
      %p97 = por %p95, %p96
      %s99 = sadd.s32 %s98, 1
      %p102 = scmp.eq.s32.totalorder %s22, 1
      %p103 = scmp.ne.s32.totalorder %s98, %s100
      %p104 = scmp.eq.s32.totalorder %s22, 0
      %p105 = por %p103, %p104
      %p106 = scmp.ne.s32.totalorder %s98, %s100
      %p107 = scmp.eq.s32.totalorder %s27, 1
      %p108 = por %p106, %p107
      %p109 = scmp.ne.s32.totalorder %s100, %s101
      %p110 = scmp.eq.s32.totalorder %s27, 0
      %p111 = por %p109, %p110
      %p112 = scmp.ne.s32.totalorder %s100, %s101
      %p113 = scmp.eq.s32.totalorder %s28, 1
      %p114 = por %p112, %p113
      %p116 = scmp.ne.s32.totalorder %s101, %s115
      %p117 = scmp.eq.s32.totalorder %s28, 0
      %p118 = por %p116, %p117
      %s120 = sadd.s32 %s119, 1
      %p123 = scmp.eq.s32.totalorder %s22, 1
      %p124 = scmp.ne.s32.totalorder %s119, %s121
      %p125 = scmp.eq.s32.totalorder %s22, 0
      %p126 = por %p124, %p125
      %p127 = scmp.ne.s32.totalorder %s119, %s121
      %p128 = scmp.eq.s32.totalorder %s27, 1
      %p129 = por %p127, %p128
      %p130 = scmp.ne.s32.totalorder %s121, %s122
      %p131 = scmp.eq.s32.totalorder %s27, 0
      %p132 = por %p130, %p131
      %p133 = scmp.ne.s32.totalorder %s121, %s122
      %p134 = scmp.eq.s32.totalorder %s28, 1
      %p135 = por %p133, %p134
      %p137 = scmp.ne.s32.totalorder %s122, %s136
      %p138 = scmp.eq.s32.totalorder %s28, 0
      %p139 = por %p137, %p138
      %s141 = sadd.s32 %s140, 1
      %p144 = scmp.eq.s32.totalorder %s22, 1
      %p145 = scmp.ne.s32.totalorder %s140, %s142
      %p146 = scmp.eq.s32.totalorder %s22, 0
      %p147 = por %p145, %p146
      %p148 = scmp.ne.s32.totalorder %s140, %s142
      %p149 = scmp.eq.s32.totalorder %s27, 1
      %p150 = por %p148, %p149
      %p151 = scmp.ne.s32.totalorder %s142, %s143
      %p152 = scmp.eq.s32.totalorder %s27, 0
      %p153 = por %p151, %p152
      %p154 = scmp.ne.s32.totalorder %s142, %s143
      %p155 = scmp.eq.s32.totalorder %s28, 1
      %p156 = por %p154, %p155
      %p158 = scmp.ne.s32.totalorder %s143, %s157
      %p159 = scmp.eq.s32.totalorder %s28, 0
      %p160 = por %p158, %p159
      %s162 = sadd.s32 %s161, 1
      %p165 = scmp.eq.s32.totalorder %s22, 1
      %p166 = scmp.ne.s32.totalorder %s161, %s163
      %p167 = scmp.eq.s32.totalorder %s22, 0
      %p168 = por %p166, %p167
      %p169 = scmp.ne.s32.totalorder %s161, %s163
      %p170 = scmp.eq.s32.totalorder %s27, 1
      %p171 = por %p169, %p170
      %p172 = scmp.ne.s32.totalorder %s163, %s164
      %p173 = scmp.eq.s32.totalorder %s27, 0
      %p174 = por %p172, %p173
      %p175 = scmp.ne.s32.totalorder %s163, %s164
      %p176 = scmp.eq.s32.totalorder %s28, 1
      %p177 = por %p175, %p176
      %p179 = scmp.ne.s32.totalorder %s164, %s178
      %p180 = scmp.eq.s32.totalorder %s28, 0
      %p181 = por %p179, %p180
      %s183 = sadd.s32 %s182, 1
      %p186 = scmp.eq.s32.totalorder %s22, 1
      %p187 = scmp.ne.s32.totalorder %s182, %s184
      %p188 = scmp.eq.s32.totalorder %s22, 0
      %p189 = por %p187, %p188
      %p190 = scmp.ne.s32.totalorder %s182, %s184
      %p191 = scmp.eq.s32.totalorder %s27, 1
      %p192 = por %p190, %p191
      %p193 = scmp.ne.s32.totalorder %s184, %s185
      %p194 = scmp.eq.s32.totalorder %s27, 0
      %p195 = por %p193, %p194
      %p196 = scmp.ne.s32.totalorder %s184, %s185
      %p197 = scmp.eq.s32.totalorder %s28, 1
      %p198 = por %p196, %p197
      %p200 = scmp.ne.s32.totalorder %s185, %s199
      %p201 = scmp.eq.s32.totalorder %s28, 0
      %p202 = por %p200, %p201
      %s204 = sadd.s32 %s203, 1
      %p207 = scmp.eq.s32.totalorder %s22, 1
      %p208 = scmp.ne.s32.totalorder %s203, %s205
      %p209 = scmp.eq.s32.totalorder %s22, 0
      %p210 = por %p208, %p209
      %p211 = scmp.ne.s32.totalorder %s203, %s205
      %p212 = scmp.eq.s32.totalorder %s27, 1
      %p213 = por %p211, %p212
      %p214 = scmp.ne.s32.totalorder %s205, %s206
      %p215 = scmp.eq.s32.totalorder %s27, 0
      %p216 = por %p214, %p215
      %p217 = scmp.ne.s32.totalorder %s205, %s206
      %p218 = scmp.eq.s32.totalorder %s28, 1
      %p219 = por %p217, %p218
      %p221 = scmp.ne.s32.totalorder %s206, %s220
      %p222 = scmp.eq.s32.totalorder %s28, 0
      %p223 = por %p221, %p222
      %s225 = sadd.s32 %s224, 1
      %p228 = scmp.eq.s32.totalorder %s22, 1
      %p229 = scmp.ne.s32.totalorder %s224, %s226
      %p230 = scmp.eq.s32.totalorder %s22, 0
      %p231 = por %p229, %p230
      %p232 = scmp.ne.s32.totalorder %s224, %s226
      %p233 = scmp.eq.s32.totalorder %s27, 1
      %p234 = por %p232, %p233
      %p235 = scmp.ne.s32.totalorder %s226, %s227
      %p236 = scmp.eq.s32.totalorder %s27, 0
      %p237 = por %p235, %p236
      %p238 = scmp.ne.s32.totalorder %s226, %s227
      %p239 = scmp.eq.s32.totalorder %s28, 1
      %p240 = por %p238, %p239
      %p242 = scmp.ne.s32.totalorder %s227, %s241
      %p243 = scmp.eq.s32.totalorder %s28, 0
      %p244 = por %p242, %p243
      %s246 = sadd.s32 %s245, 1
      %p249 = scmp.eq.s32.totalorder %s22, 1
      %p250 = scmp.ne.s32.totalorder %s245, %s247
      %p251 = scmp.eq.s32.totalorder %s22, 0
      %p252 = por %p250, %p251
      %p253 = scmp.ne.s32.totalorder %s245, %s247
      %p254 = scmp.eq.s32.totalorder %s27, 1
      %p255 = por %p253, %p254
      %p256 = scmp.ne.s32.totalorder %s247, %s248
      %p257 = scmp.eq.s32.totalorder %s27, 0
      %p258 = por %p256, %p257
      %p259 = scmp.ne.s32.totalorder %s247, %s248
      %p260 = scmp.eq.s32.totalorder %s28, 1
      %p261 = por %p259, %p260
      %p263 = scmp.ne.s32.totalorder %s248, %s262
      %p264 = scmp.eq.s32.totalorder %s28, 0
      %p265 = por %p263, %p264
      %s267 = sadd.s32 %s266, 1
      %p270 = scmp.eq.s32.totalorder %s22, 1
      %p271 = scmp.ne.s32.totalorder %s266, %s268
      %p272 = scmp.eq.s32.totalorder %s22, 0
      %p273 = por %p271, %p272
      %p274 = scmp.ne.s32.totalorder %s266, %s268
      %p275 = scmp.eq.s32.totalorder %s27, 1
      %p276 = por %p274, %p275
      %p277 = scmp.ne.s32.totalorder %s268, %s269
      %p278 = scmp.eq.s32.totalorder %s27, 0
      %p279 = por %p277, %p278
      %p280 = scmp.ne.s32.totalorder %s268, %s269
      %p281 = scmp.eq.s32.totalorder %s28, 1
      %p282 = por %p280, %p281
      %p284 = scmp.ne.s32.totalorder %s269, %s283
      %p285 = scmp.eq.s32.totalorder %s28, 0
      %p286 = por %p284, %p285
      %s288 = sadd.s32 %s287, 1
      %p291 = scmp.eq.s32.totalorder %s22, 1
      %p292 = scmp.ne.s32.totalorder %s287, %s289
      %p293 = scmp.eq.s32.totalorder %s22, 0
      %p294 = por %p292, %p293
      %p295 = scmp.ne.s32.totalorder %s287, %s289
      %p296 = scmp.eq.s32.totalorder %s27, 1
      %p297 = por %p295, %p296
      %p298 = scmp.ne.s32.totalorder %s289, %s290
      %p299 = scmp.eq.s32.totalorder %s27, 0
      %p300 = por %p298, %p299
      %p301 = scmp.ne.s32.totalorder %s289, %s290
      %p302 = scmp.eq.s32.totalorder %s28, 1
      %p303 = por %p301, %p302
      %p305 = scmp.ne.s32.totalorder %s290, %s304
      %p306 = scmp.eq.s32.totalorder %s28, 0
      %p307 = por %p305, %p306
      %s308 = ssub.s32 %s22, %s29
      %p309 = scmp.eq.s32.totalorder %s308, 0
      %s311 = sadd.s32 %s310, 1
      %s312 = scalar_select %p309, %s310, %s311
      %p315 = pneg %p309
      %p316 = scmp.eq.s32.totalorder %s22, 1
      %p317 = por %p315, %p316
      %p318 = scmp.ne.s32.totalorder %s310, %s313
      %p319 = scmp.eq.s32.totalorder %s22, 0
      %p320 = por %p318, %p319
      %p321 = scmp.ne.s32.totalorder %s310, %s313
      %p322 = scmp.eq.s32.totalorder %s27, 1
      %p323 = por %p321, %p322
      %p324 = scmp.ne.s32.totalorder %s313, %s314
      %p325 = scmp.eq.s32.totalorder %s27, 0
      %p326 = por %p324, %p325
      %p327 = scmp.ne.s32.totalorder %s313, %s314
      %p328 = scmp.eq.s32.totalorder %s28, 1
      %p329 = por %p327, %p328
      %p331 = scmp.ne.s32.totalorder %s314, %s330
      %p332 = scmp.eq.s32.totalorder %s28, 0
      %p333 = por %p331, %p332
      %p334 = scmp.le.s32.totalorder 1, %s22
      %p335 = scmp.lt.s32.totalorder %s22, 3
      %p336 = pnand %p334, %p335
      %p337 = pneg %p336
      // Predicated region
      $region9: #{tpu_custom_call.1} parent=5 // pred_check
        _
      $region10: #{tpu_custom_call.1} parent=5 // pred_check_branch
        %339 = sbr.rel (%p336) target = $region12
      $region11: #{tpu_custom_call.1} parent=5 // pred_region
        %s340 = ssub.s32 %s22, 1
        // Predicated region
        $region13: #{tpu_custom_call.1} parent=11 // pred_check
          %p341 = pneg %p69
        $region14: #{tpu_custom_call.1} parent=11 // pred_check_branch
          %343 = sbr.rel (%p341) target = $region16
        $region15: #{tpu_custom_call.1} parent=11 // pred_region
          _
        $region16: #{tpu_custom_call.1} parent=11 // pred_fallthru
          _
        // Predicated region
        $region17: #{tpu_custom_call.1} parent=11 // pred_check
          %p344 = pneg %p90
        $region18: #{tpu_custom_call.1} parent=11 // pred_check_branch
          %346 = sbr.rel (%p344) target = $region20
        $region19: #{tpu_custom_call.1} parent=11 // pred_region
          _
        $region20: #{tpu_custom_call.1} parent=11 // pred_fallthru
          _
        // Predicated region
        $region21: #{tpu_custom_call.1} parent=11 // pred_check
          %p347 = pneg %p111
        $region22: #{tpu_custom_call.1} parent=11 // pred_check_branch
          %349 = sbr.rel (%p347) target = $region24
        $region23: #{tpu_custom_call.1} parent=11 // pred_region
          _
        $region24: #{tpu_custom_call.1} parent=11 // pred_fallthru
          _
        // Predicated region
        $region25: #{tpu_custom_call.1} parent=11 // pred_check
          %p350 = pneg %p132
        $region26: #{tpu_custom_call.1} parent=11 // pred_check_branch
          %352 = sbr.rel (%p350) target = $region28
        $region27: #{tpu_custom_call.1} parent=11 // pred_region
          _
        $region28: #{tpu_custom_call.1} parent=11 // pred_fallthru
          _
        // Predicated region
        $region29: #{tpu_custom_call.1} parent=11 // pred_check
          %p353 = pneg %p153
        $region30: #{tpu_custom_call.1} parent=11 // pred_check_branch
          %355 = sbr.rel (%p353) target = $region32
        $region31: #{tpu_custom_call.1} parent=11 // pred_region
          _
        $region32: #{tpu_custom_call.1} parent=11 // pred_fallthru
          _
        // Predicated region
        $region33: #{tpu_custom_call.1} parent=11 // pred_check
          %p356 = pneg %p174
        $region34: #{tpu_custom_call.1} parent=11 // pred_check_branch
          %358 = sbr.rel (%p356) target = $region36
        $region35: #{tpu_custom_call.1} parent=11 // pred_region
          _
        $region36: #{tpu_custom_call.1} parent=11 // pred_fallthru
          _
        // Predicated region
        $region37: #{tpu_custom_call.1} parent=11 // pred_check
          %p359 = pneg %p195
        $region38: #{tpu_custom_call.1} parent=11 // pred_check_branch
          %361 = sbr.rel (%p359) target = $region40
        $region39: #{tpu_custom_call.1} parent=11 // pred_region
          _
        $region40: #{tpu_custom_call.1} parent=11 // pred_fallthru
          _
        // Predicated region
        $region41: #{tpu_custom_call.1} parent=11 // pred_check
          %p362 = pneg %p216
        $region42: #{tpu_custom_call.1} parent=11 // pred_check_branch
          %364 = sbr.rel (%p362) target = $region44
        $region43: #{tpu_custom_call.1} parent=11 // pred_region
          _
        $region44: #{tpu_custom_call.1} parent=11 // pred_fallthru
          _
        // Predicated region
        $region45: #{tpu_custom_call.1} parent=11 // pred_check
          %p365 = pneg %p237
        $region46: #{tpu_custom_call.1} parent=11 // pred_check_branch
          %367 = sbr.rel (%p365) target = $region48
        $region47: #{tpu_custom_call.1} parent=11 // pred_region
          _
        $region48: #{tpu_custom_call.1} parent=11 // pred_fallthru
          _
        // Predicated region
        $region49: #{tpu_custom_call.1} parent=11 // pred_check
          %p368 = pneg %p258
        $region50: #{tpu_custom_call.1} parent=11 // pred_check_branch
          %370 = sbr.rel (%p368) target = $region52
        $region51: #{tpu_custom_call.1} parent=11 // pred_region
          _
        $region52: #{tpu_custom_call.1} parent=11 // pred_fallthru
          _
        // Predicated region
        $region53: #{tpu_custom_call.1} parent=11 // pred_check
          %p371 = pneg %p279
        $region54: #{tpu_custom_call.1} parent=11 // pred_check_branch
          %373 = sbr.rel (%p371) target = $region56
        $region55: #{tpu_custom_call.1} parent=11 // pred_region
          _
        $region56: #{tpu_custom_call.1} parent=11 // pred_fallthru
          _
        // Predicated region
        $region57: #{tpu_custom_call.1} parent=11 // pred_check
          %p374 = pneg %p300
        $region58: #{tpu_custom_call.1} parent=11 // pred_check_branch
          %376 = sbr.rel (%p374) target = $region60
        $region59: #{tpu_custom_call.1} parent=11 // pred_region
          _
        $region60: #{tpu_custom_call.1} parent=11 // pred_fallthru
          _
      $region12: #{tpu_custom_call.1} parent=5 // pred_fallthru
        _
      %p377 = scmp.lt.s32.totalorder %s22, 2
      // Predicated region
      $region61: #{tpu_custom_call.1} parent=5 // pred_check
        %p378 = pneg %p377
      $region62: #{tpu_custom_call.1} parent=5 // pred_check_branch
        %380 = sbr.rel (%p378) target = $region64
      $region63: #{tpu_custom_call.1} parent=5 // pred_region
        // Predicated region
        $region65: #{tpu_custom_call.1} parent=63 // pred_check
          %p381 = pneg %p42
        $region66: #{tpu_custom_call.1} parent=63 // pred_check_branch
          %383 = sbr.rel (%p381) target = $region68
        $region67: #{tpu_custom_call.1} parent=63 // pred_region
          %p384 = scmp.lt.s32.totalorder %s22, 1
          %s385 = scalar_select %p384, %s22, 1
          %s386 = smul.addr %s385, 8
          %s387 = smul.addr %s386, 8
          %s388 = scalar_lea.vmem %s0, %s387
        $region68: #{tpu_custom_call.1} parent=63 // pred_fallthru
          _
      $region64: #{tpu_custom_call.1} parent=5 // pred_fallthru
        _
      %p389 = scmp.le.s32.totalorder 1, %s22
      %p390 = scmp.lt.s32.totalorder %s22, 3
      %p391 = pnand %p389, %p390
      %p392 = pneg %p391
      // Predicated region
      $region69: #{tpu_custom_call.1} parent=5 // pred_check
        _
      $region70: #{tpu_custom_call.1} parent=5 // pred_check_branch
        %394 = sbr.rel (%p391) target = $region72
      $region71: #{tpu_custom_call.1} parent=5 // pred_region
        %s395 = ssub.s32 %s22, 1
        %p396 = scmp.lt.s32.totalorder %s27, 1
        %s397 = scalar_select %p396, %s27, 1
        %s398 = smul.addr %s397, 8
        %s399 = smul.addr %s398, 8
        %s400 = scalar_lea.vmem %s0, %s399
        %p401 = pneg %p48
        %p402 = pneg %p45
        %p403 = pneg %p69
        %p404 = pneg %p66
        %p405 = pneg %p90
        %p406 = pneg %p87
        %p407 = pneg %p111
        %p408 = pneg %p108
        %p409 = pneg %p132
        %p410 = pneg %p129
        %p411 = pneg %p153
        %p412 = pneg %p150
        %p413 = pneg %p174
        %p414 = pneg %p171
        %p415 = pneg %p195
        %p416 = pneg %p192
        %p417 = pneg %p216
        %p418 = pneg %p213
        %p419 = pneg %p237
        %p420 = pneg %p234
        %p421 = pneg %p258
        %p422 = pneg %p255
        %p423 = pneg %p279
        %p424 = pneg %p276
        %p425 = pneg %p300
        %p426 = pneg %p297
        %p427 = pneg %p326
        %p428 = pneg %p323
        %s429 = sand.u32 %s313, 1
        %s430 = scalar_lea.sflag [#allocation4], %s429
        %s431 = sand.u32 %s313, 1
        %s432 = smul.addr %s431, 64
        %s433 = scalar_lea.vmem [#allocation3], %s432
        %p434 = scmp.lt.s32.totalorder %s27, 1
        %s435 = scalar_select %p434, %s27, 1
        %s436 = smul.addr %s435, 8
        %s437 = smul.addr %s436, 8
        %s438 = scalar_lea.vmem %s0, %s437
        %vm440 = vcmask 125952
        %441 = vst.msk [vmem:[#allocation2] sm:$0xf] %vm440, 0
        %442 = vst.msk [vmem:[#allocation2 + $0x4] sm:$0xf] %vm440, 0
        %443 = vst.msk [vmem:[#allocation2 + $0x8] sm:$0xf] %vm440, 0
        %444 = vst.msk [vmem:[#allocation2 + $0xc] sm:$0xf] %vm440, 0
        %445 = vst.msk [vmem:[#allocation2 + $0x10] sm:$0xf] %vm440, 0
        %446 = vst.msk [vmem:[#allocation2 + $0x14] sm:$0xf] %vm440, 0
        %447 = vst.msk [vmem:[#allocation2 + $0x18] sm:$0xf] %vm440, 0
        %448 = vst.msk [vmem:[#allocation2 + $0x1c] sm:$0xf] %vm440, 0
        %449 = vst.msk [vmem:[#allocation2 + $0x20] sm:$0xf] %vm440, 0
        %450 = vst.msk [vmem:[#allocation2 + $0x24] sm:$0xf] %vm440, 0
        %451 = vst.msk [vmem:[#allocation2 + $0x28] sm:$0xf] %vm440, 0
        %452 = vst.msk [vmem:[#allocation2 + $0x2c] sm:$0xf] %vm440, 0
        %453 = vst.msk [vmem:[#allocation2 + $0x30] sm:$0xf] %vm440, 0
        %454 = vst.msk [vmem:[#allocation2 + $0x34] sm:$0xf] %vm440, 0
        %455 = vst.msk [vmem:[#allocation2 + $0x38] sm:$0xf] %vm440, 0
        %456 = vst.msk [vmem:[#allocation2 + $0x3c] sm:$0xf] %vm440, 0
        %457 = vst.msk [vmem:[#allocation2 + $0x40] sm:$0xf] %vm440, 0
        %458 = vst.msk [vmem:[#allocation2 + $0x44] sm:$0xf] %vm440, 0
        %459 = vst.msk [vmem:[#allocation2 + $0x48] sm:$0xf] %vm440, 0
        %460 = vst.msk [vmem:[#allocation2 + $0x4c] sm:$0xf] %vm440, 0
        %v461 = vld [vmem:[%s438] sm:$0xff]
        %v462 = vld [vmem:[%s438 + $0x8] sm:$0xff]
        %v463 = vld [vmem:[%s438 + $0x10] sm:$0xff]
        %v464 = vld [vmem:[%s438 + $0x18] sm:$0xff]
        %v465 = vld [vmem:[%s438 + $0x20] sm:$0xff]
        %v466 = vld [vmem:[%s438 + $0x28] sm:$0xff]
        %v467 = vld [vmem:[%s438 + $0x30] sm:$0xff]
        %v468 = vld [vmem:[%s438 + $0x38] sm:$0xff]
        %v469 = vpack.c.bf16 %v462, %v461
        %v470 = vpack.c.bf16 %v464, %v463
        %v471 = vpack.c.bf16 %v466, %v465
        %v472 = vpack.c.bf16 %v468, %v467
        %v473 = vld [vmem:[%s1] sm:$0xf]
        %v474 = vld [vmem:[%s1 + $0x4] sm:$0xf]
        %v475 = vld [vmem:[%s1 + $0x8] sm:$0xf]
        %v476 = vld [vmem:[%s1 + $0xc] sm:$0xf]
        %v477 = vld [vmem:[%s2] sm:$0x1]
        %v479 = vlaneseq
        %v480 = vshrl.u32 %v479, 7
        %v481 = vsub.s32 0, %v480
        %v482 = vrot.slane %v477, %v481
        %v488 = vunpack.c.l.b16 %v473
        %v489 = vunpack.c.l.b16 %v474
        %v490 = vunpack.c.l.b16 %v475
        %v491 = vunpack.c.l.b16 %v476
        %v492 = vpack.c.b16 %v489, %v488
        %v493 = vpack.c.b16 %v491, %v490
        %vm496 = vcmask 261120
        %v498 = vsel %vm496, %v469, 0
        %v501 = vsel %vm496, %v470, 0
        %v504 = vsel %vm496, %v471, 0
        %v507 = vsel %vm496, %v472, 0
        %509 = vmatprep.subr.bf16.mxu0 0
        %510 = vmatpush1.bf16.msra.mxu0 0
        %511 = vmatprep.subr.bf16.mxu0 0
        %512 = vmatpush1.bf16.msra.mxu0 0
        %513 = vmatprep.subr.bf16.mxu0 0
        %514 = vmatpush1.bf16.msra.mxu0 0
        %515 = vmatprep.subr.bf16.mxu0 0
        %516 = vmatpush1.bf16.msra.mxu0 0
        %517 = vmatprep.subr.bf16.mxu0 0
        %518 = vmatpush1.bf16.msra.mxu0 0
        %519 = vmatprep.subr.bf16.mxu0 0
        %520 = vmatpush1.bf16.msra.mxu0 0
        %521 = vmatprep.subr.bf16.mxu0 0
        %522 = vmatpush1.bf16.msra.mxu0 %v493
        %523 = vmatprep.subr.bf16.mxu0 0
        %524 = vmatpush1.bf16.msra.mxu0 %v492
        %525 = vmatprep.subr.bf16.mxu0 0
        %526 = vmatpush2.bf16.msra.mxu0 0
        %527 = vmatprep.subr.bf16.mxu0 0
        %528 = vmatpush2.bf16.msra.mxu0 0
        %529 = vmatprep.subr.bf16.mxu0 0
        %530 = vmatpush2.bf16.msra.mxu0 0
        %531 = vmatprep.subr.bf16.mxu0 0
        %532 = vmatpush2.bf16.msra.mxu0 0
        %533 = vmatprep.subr.bf16.mxu0 0
        %534 = vmatpush2.bf16.msra.mxu0 0
        %535 = vmatprep.subr.bf16.mxu0 0
        %536 = vmatpush2.bf16.msra.mxu0 0
        %537 = vmatprep.subr.bf16.mxu0 0
        %538 = vmatpush2.bf16.msra.mxu0 0
        %539 = vmatprep.subr.bf16.mxu0 0
        %540 = vmatpush2.bf16.msra.mxu0 0
        %541 = vmatprep.mubr.bf16.mxu0 0
        %542 = vmatmul.mubr.bf16.gmra.mxu0 %v498
        %v543 = vpop.f32.mrf.mxu0
        %v544 = vadd.f32 %v482, %v543
        %v545 = vpop.f32.mrf.mxu0
        %v546 = vpop.f32.mrf.mxu0
        %v547 = vadd.f32 %v482, %v546
        %v548 = vpop.f32.mrf.mxu0
        %549 = vmatprep.mubr.bf16.mxu0 0
        %550 = vmatmul.mubr.bf16.gmra.mxu0 %v501
        %v551 = vpop.f32.mrf.mxu0
        %v552 = vadd.f32 %v482, %v551
        %v553 = vpop.f32.mrf.mxu0
        %v554 = vpop.f32.mrf.mxu0
        %v555 = vadd.f32 %v482, %v554
        %v556 = vpop.f32.mrf.mxu0
        %557 = vmatprep.mubr.bf16.mxu0 0
        %558 = vmatmul.mubr.bf16.gmra.mxu0 %v504
        %v559 = vpop.f32.mrf.mxu0
        %v560 = vadd.f32 %v482, %v559
        %v561 = vpop.f32.mrf.mxu0
        %v562 = vpop.f32.mrf.mxu0
        %v563 = vadd.f32 %v482, %v562
        %v564 = vpop.f32.mrf.mxu0
        %565 = vmatprep.mubr.bf16.mxu0 0
        %566 = vmatmul.mubr.bf16.gmra.mxu0 %v507
        %v567 = vpop.f32.mrf.mxu0
        %v568 = vadd.f32 %v482, %v567
        %v569 = vpop.f32.mrf.mxu0
        %v570 = vpop.f32.mrf.mxu0
        %v571 = vadd.f32 %v482, %v570
        %v572 = vpop.f32.mrf.mxu0
        %573 = vdwg.mxu0
        %v574 = vmax.f32 %v544, 0.0
        %v575 = vmax.f32 %v547, 0.0
        %v576 = vmax.f32 %v552, 0.0
        %v577 = vmax.f32 %v555, 0.0
        %v578 = vmax.f32 %v560, 0.0
        %v579 = vmax.f32 %v563, 0.0
        %v580 = vmax.f32 %v568, 0.0
        %v581 = vmax.f32 %v571, 0.0
        %v582 = vpack.c.bf16 %v574, %v574
        %v583 = vpack.c.bf16 %v575, %v575
        %v584 = vpack.c.bf16 %v576, %v576
        %v585 = vpack.c.bf16 %v577, %v577
        %v586 = vpack.c.bf16 %v578, %v578
        %v587 = vpack.c.bf16 %v579, %v579
        %v588 = vpack.c.bf16 %v580, %v580
        %v589 = vpack.c.bf16 %v581, %v581
        %v598 = vunpack.c.l.b16 %v582
        %v599 = vunpack.c.l.b16 %v583
        %v600 = vunpack.c.l.b16 %v584
        %v601 = vunpack.c.l.b16 %v585
        %v602 = vunpack.c.l.b16 %v586
        %v603 = vunpack.c.l.b16 %v587
        %v604 = vunpack.c.l.b16 %v588
        %v605 = vunpack.c.l.b16 %v589
        %v606 = vpack.c.b16 %v598, %v598
        %v607 = vpack.c.b16 %v599, %v599
        %v608 = vpack.c.b16 %v600, %v600
        %v609 = vpack.c.b16 %v601, %v601
        %v610 = vpack.c.b16 %v602, %v602
        %v611 = vpack.c.b16 %v603, %v603
        %v612 = vpack.c.b16 %v604, %v604
        %v613 = vpack.c.b16 %v605, %v605
        %v615 = vshrl.u32 %v606, 16
        %v617 = vrot.slane %v615, 7
        %v618 = vshll.u32 %v606, 16
        %v620 = vor.u32 %v617, %v618
        %v621 = vrot.slane %v617, 4
        %v623 = vshrl.u32 %v607, 16
        %v625 = vrot.slane %v623, 7
        %v626 = vshll.u32 %v607, 16
        %v628 = vor.u32 %v625, %v626
        %v629 = vrot.slane %v625, 4
        %v631 = vshrl.u32 %v608, 16
        %v633 = vrot.slane %v631, 7
        %v634 = vshll.u32 %v608, 16
        %v636 = vor.u32 %v633, %v634
        %v637 = vrot.slane %v633, 4
        %v639 = vshrl.u32 %v609, 16
        %v641 = vrot.slane %v639, 7
        %v642 = vshll.u32 %v609, 16
        %v644 = vor.u32 %v641, %v642
        %v645 = vrot.slane %v641, 4
        %v647 = vshrl.u32 %v610, 16
        %v649 = vrot.slane %v647, 7
        %v650 = vshll.u32 %v610, 16
        %v652 = vor.u32 %v649, %v650
        %v653 = vrot.slane %v649, 4
        %v655 = vshrl.u32 %v611, 16
        %v657 = vrot.slane %v655, 7
        %v658 = vshll.u32 %v611, 16
        %v660 = vor.u32 %v657, %v658
        %v661 = vrot.slane %v657, 4
        %v663 = vshrl.u32 %v612, 16
        %v665 = vrot.slane %v663, 7
        %v666 = vshll.u32 %v612, 16
        %v668 = vor.u32 %v665, %v666
        %v669 = vrot.slane %v665, 4
        %v671 = vshrl.u32 %v613, 16
        %v673 = vrot.slane %v671, 7
        %v674 = vshll.u32 %v613, 16
        %v676 = vor.u32 %v673, %v674
        %v677 = vrot.slane %v673, 4
        %s694 = scalar_lea.vmem [#allocation2], 8
        %vm695 = vcmask 125952
        %vm696 = vsmask.f32 7938
        %vm697 = vmand %vm695, %vm696
        %v698 = vld [vmem:[%s694] sm:$0xf]
        %v699 = vsel %vm697, %v620, %v698
        %700 = vst [vmem:[%s694] sm:$0xf] %v699
        %vm701 = vcmask 122880
        %vm702 = vsmask.f32 256
        %vm703 = vmand %vm701, %vm702
        %v704 = vld [vmem:[%s694 + $0x4] sm:$0x1]
        %v705 = vsel %vm703, %v621, %v704
        %706 = vst [vmem:[%s694 + $0x4] sm:$0x1] %v705
        %v707 = vld [vmem:[%s694 + $0x8] sm:$0xf]
        %v708 = vsel %vm697, %v628, %v707
        %709 = vst [vmem:[%s694 + $0x8] sm:$0xf] %v708
        %v710 = vld [vmem:[%s694 + $0xc] sm:$0x1]
        %v711 = vsel %vm703, %v629, %v710
        %712 = vst [vmem:[%s694 + $0xc] sm:$0x1] %v711
        %v713 = vld [vmem:[%s694 + $0x10] sm:$0xf]
        %v714 = vsel %vm697, %v636, %v713
        %715 = vst [vmem:[%s694 + $0x10] sm:$0xf] %v714
        %v716 = vld [vmem:[%s694 + $0x14] sm:$0x1]
        %v717 = vsel %vm703, %v637, %v716
        %718 = vst [vmem:[%s694 + $0x14] sm:$0x1] %v717
        %v719 = vld [vmem:[%s694 + $0x18] sm:$0xf]
        %v720 = vsel %vm697, %v644, %v719
        %721 = vst [vmem:[%s694 + $0x18] sm:$0xf] %v720
        %v722 = vld [vmem:[%s694 + $0x1c] sm:$0x1]
        %v723 = vsel %vm703, %v645, %v722
        %724 = vst [vmem:[%s694 + $0x1c] sm:$0x1] %v723
        %v725 = vld [vmem:[%s694 + $0x20] sm:$0xf]
        %v726 = vsel %vm697, %v652, %v725
        %727 = vst [vmem:[%s694 + $0x20] sm:$0xf] %v726
        %v728 = vld [vmem:[%s694 + $0x24] sm:$0x1]
        %v729 = vsel %vm703, %v653, %v728
        %730 = vst [vmem:[%s694 + $0x24] sm:$0x1] %v729
        %v731 = vld [vmem:[%s694 + $0x28] sm:$0xf]
        %v732 = vsel %vm697, %v660, %v731
        %733 = vst [vmem:[%s694 + $0x28] sm:$0xf] %v732
        %v734 = vld [vmem:[%s694 + $0x2c] sm:$0x1]
        %v735 = vsel %vm703, %v661, %v734
        %736 = vst [vmem:[%s694 + $0x2c] sm:$0x1] %v735
        %v737 = vld [vmem:[%s694 + $0x30] sm:$0xf]
        %v738 = vsel %vm697, %v668, %v737
        %739 = vst [vmem:[%s694 + $0x30] sm:$0xf] %v738
        %v740 = vld [vmem:[%s694 + $0x34] sm:$0x1]
        %v741 = vsel %vm703, %v669, %v740
        %742 = vst [vmem:[%s694 + $0x34] sm:$0x1] %v741
        %v743 = vld [vmem:[%s694 + $0x38] sm:$0xf]
        %v744 = vsel %vm697, %v676, %v743
        %745 = vst [vmem:[%s694 + $0x38] sm:$0xf] %v744
        %v746 = vld [vmem:[%s694 + $0x3c] sm:$0x1]
        %v747 = vsel %vm703, %v677, %v746
        %748 = vst [vmem:[%s694 + $0x3c] sm:$0x1] %v747
        %v749 = vld [vmem:[#allocation2] sm:$0xf]
        %v750 = vld [vmem:[#allocation2 + $0x8] sm:$0xf]
        %v751 = vld [vmem:[#allocation2 + $0x10] sm:$0xf]
        %v752 = vld [vmem:[#allocation2 + $0x18] sm:$0xf]
        %v753 = vld [vmem:[#allocation2 + $0x20] sm:$0xf]
        %v754 = vld [vmem:[#allocation2 + $0x28] sm:$0xf]
        %v755 = vld [vmem:[#allocation2 + $0x30] sm:$0xf]
        %v756 = vld [vmem:[#allocation2 + $0x38] sm:$0xf]
        %v757 = vld [vmem:[#allocation2 + $0x4] sm:$0x1]
        %v758 = vld [vmem:[#allocation2 + $0xc] sm:$0x1]
        %v759 = vld [vmem:[#allocation2 + $0x14] sm:$0x1]
        %v760 = vld [vmem:[#allocation2 + $0x1c] sm:$0x1]
        %v761 = vld [vmem:[#allocation2 + $0x24] sm:$0x1]
        %v762 = vld [vmem:[#allocation2 + $0x2c] sm:$0x1]
        %v763 = vld [vmem:[#allocation2 + $0x34] sm:$0x1]
        %v764 = vld [vmem:[#allocation2 + $0x3c] sm:$0x1]
        %vm765 = vsmask.f32 3328
        %vm766 = vsmask.f32 7440
        %vm767 = vmor %vm765, %vm766
        %v769 = vshrl.u32 %v749, 16
        %v771 = vrot.slane %v769, 4
        %v772 = vshll.u32 %v749, 16
        %v774 = vrot.slane %v772, 5
        %v775 = vor.u32 %v771, %v774
        %v776 = vrot.slane %v775, 4
        %v778 = vshll.u32 %v757, 16
        %v780 = vrot.slane %v778, 5
        %v781 = vsel %vm767, %v776, %v780
        %v783 = vshrl.u32 %v750, 16
        %v785 = vrot.slane %v783, 4
        %v786 = vshll.u32 %v750, 16
        %v788 = vrot.slane %v786, 5
        %v789 = vor.u32 %v785, %v788
        %v790 = vrot.slane %v789, 4
        %v792 = vshll.u32 %v758, 16
        %v794 = vrot.slane %v792, 5
        %v795 = vsel %vm767, %v790, %v794
        %v797 = vshrl.u32 %v751, 16
        %v799 = vrot.slane %v797, 4
        %v800 = vshll.u32 %v751, 16
        %v802 = vrot.slane %v800, 5
        %v803 = vor.u32 %v799, %v802
        %v804 = vrot.slane %v803, 4
        %v806 = vshll.u32 %v759, 16
        %v808 = vrot.slane %v806, 5
        %v809 = vsel %vm767, %v804, %v808
        %v811 = vshrl.u32 %v752, 16
        %v813 = vrot.slane %v811, 4
        %v814 = vshll.u32 %v752, 16
        %v816 = vrot.slane %v814, 5
        %v817 = vor.u32 %v813, %v816
        %v818 = vrot.slane %v817, 4
        %v820 = vshll.u32 %v760, 16
        %v822 = vrot.slane %v820, 5
        %v823 = vsel %vm767, %v818, %v822
        %v825 = vshrl.u32 %v753, 16
        %v827 = vrot.slane %v825, 4
        %v828 = vshll.u32 %v753, 16
        %v830 = vrot.slane %v828, 5
        %v831 = vor.u32 %v827, %v830
        %v832 = vrot.slane %v831, 4
        %v834 = vshll.u32 %v761, 16
        %v836 = vrot.slane %v834, 5
        %v837 = vsel %vm767, %v832, %v836
        %v839 = vshrl.u32 %v754, 16
        %v841 = vrot.slane %v839, 4
        %v842 = vshll.u32 %v754, 16
        %v844 = vrot.slane %v842, 5
        %v845 = vor.u32 %v841, %v844
        %v846 = vrot.slane %v845, 4
        %v848 = vshll.u32 %v762, 16
        %v850 = vrot.slane %v848, 5
        %v851 = vsel %vm767, %v846, %v850
        %v853 = vshrl.u32 %v755, 16
        %v855 = vrot.slane %v853, 4
        %v856 = vshll.u32 %v755, 16
        %v858 = vrot.slane %v856, 5
        %v859 = vor.u32 %v855, %v858
        %v860 = vrot.slane %v859, 4
        %v862 = vshll.u32 %v763, 16
        %v864 = vrot.slane %v862, 5
        %v865 = vsel %vm767, %v860, %v864
        %v867 = vshrl.u32 %v756, 16
        %v869 = vrot.slane %v867, 4
        %v870 = vshll.u32 %v756, 16
        %v872 = vrot.slane %v870, 5
        %v873 = vor.u32 %v869, %v872
        %v874 = vrot.slane %v873, 4
        %v876 = vshll.u32 %v764, 16
        %v878 = vrot.slane %v876, 5
        %v879 = vsel %vm767, %v874, %v878
        %v880 = vld [vmem:[#allocation2] sm:$0xe]
        %v881 = vld [vmem:[#allocation2 + $0x8] sm:$0xe]
        %v882 = vld [vmem:[#allocation2 + $0x10] sm:$0xe]
        %v883 = vld [vmem:[#allocation2 + $0x18] sm:$0xe]
        %v884 = vld [vmem:[#allocation2 + $0x20] sm:$0xe]
        %v885 = vld [vmem:[#allocation2 + $0x28] sm:$0xe]
        %v886 = vld [vmem:[#allocation2 + $0x30] sm:$0xe]
        %v887 = vld [vmem:[#allocation2 + $0x38] sm:$0xe]
        %vm904 = vcmask 1042432
        %vm905 = vcmask 1046532
        %vm906 = vmor %vm904, %vm905
        %v907 = vrot.slane %v880, 5
        %v908 = vrot.slane %v907, 4
        %v909 = vrot.slane %v757, 5
        %v910 = vsel %vm906, %v908, %v909
        %v911 = vrot.slane %v881, 5
        %v912 = vrot.slane %v911, 4
        %v913 = vrot.slane %v758, 5
        %v914 = vsel %vm906, %v912, %v913
        %v915 = vrot.slane %v882, 5
        %v916 = vrot.slane %v915, 4
        %v917 = vrot.slane %v759, 5
        %v918 = vsel %vm906, %v916, %v917
        %v919 = vrot.slane %v883, 5
        %v920 = vrot.slane %v919, 4
        %v921 = vrot.slane %v760, 5
        %v922 = vsel %vm906, %v920, %v921
        %v923 = vrot.slane %v884, 5
        %v924 = vrot.slane %v923, 4
        %v925 = vrot.slane %v761, 5
        %v926 = vsel %vm906, %v924, %v925
        %v927 = vrot.slane %v885, 5
        %v928 = vrot.slane %v927, 4
        %v929 = vrot.slane %v762, 5
        %v930 = vsel %vm906, %v928, %v929
        %v931 = vrot.slane %v886, 5
        %v932 = vrot.slane %v931, 4
        %v933 = vrot.slane %v763, 5
        %v934 = vsel %vm906, %v932, %v933
        %v935 = vrot.slane %v887, 5
        %v936 = vrot.slane %v935, 4
        %v937 = vrot.slane %v764, 5
        %v938 = vsel %vm906, %v936, %v937
        %v939 = vld [vmem:[%s694] sm:$0xf]
        %v940 = vld [vmem:[%s694 + $0x8] sm:$0xf]
        %v941 = vld [vmem:[%s694 + $0x10] sm:$0xf]
        %v942 = vld [vmem:[%s694 + $0x18] sm:$0xf]
        %v943 = vld [vmem:[%s694 + $0x20] sm:$0xf]
        %v944 = vld [vmem:[%s694 + $0x28] sm:$0xf]
        %v945 = vld [vmem:[%s694 + $0x30] sm:$0xf]
        %v946 = vld [vmem:[%s694 + $0x38] sm:$0xf]
        %v947 = vld [vmem:[%s694 + $0x4] sm:$0x1]
        %v948 = vld [vmem:[%s694 + $0xc] sm:$0x1]
        %v949 = vld [vmem:[%s694 + $0x14] sm:$0x1]
        %v950 = vld [vmem:[%s694 + $0x1c] sm:$0x1]
        %v951 = vld [vmem:[%s694 + $0x24] sm:$0x1]
        %v952 = vld [vmem:[%s694 + $0x2c] sm:$0x1]
        %v953 = vld [vmem:[%s694 + $0x34] sm:$0x1]
        %v954 = vld [vmem:[%s694 + $0x3c] sm:$0x1]
        %v956 = vshrl.u32 %v939, 16
        %v958 = vrot.slane %v956, 4
        %v959 = vshll.u32 %v939, 16
        %v961 = vrot.slane %v959, 5
        %v962 = vor.u32 %v958, %v961
        %v963 = vrot.slane %v962, 4
        %v965 = vshll.u32 %v947, 16
        %v967 = vrot.slane %v965, 5
        %v968 = vsel %vm767, %v963, %v967
        %v970 = vshrl.u32 %v940, 16
        %v972 = vrot.slane %v970, 4
        %v973 = vshll.u32 %v940, 16
        %v975 = vrot.slane %v973, 5
        %v976 = vor.u32 %v972, %v975
        %v977 = vrot.slane %v976, 4
        %v979 = vshll.u32 %v948, 16
        %v981 = vrot.slane %v979, 5
        %v982 = vsel %vm767, %v977, %v981
        %v984 = vshrl.u32 %v941, 16
        %v986 = vrot.slane %v984, 4
        %v987 = vshll.u32 %v941, 16
        %v989 = vrot.slane %v987, 5
        %v990 = vor.u32 %v986, %v989
        %v991 = vrot.slane %v990, 4
        %v993 = vshll.u32 %v949, 16
        %v995 = vrot.slane %v993, 5
        %v996 = vsel %vm767, %v991, %v995
        %v998 = vshrl.u32 %v942, 16
        %v1000 = vrot.slane %v998, 4
        %v1001 = vshll.u32 %v942, 16
        %v1003 = vrot.slane %v1001, 5
        %v1004 = vor.u32 %v1000, %v1003
        %v1005 = vrot.slane %v1004, 4
        %v1007 = vshll.u32 %v950, 16
        %v1009 = vrot.slane %v1007, 5
        %v1010 = vsel %vm767, %v1005, %v1009
        %v1012 = vshrl.u32 %v943, 16
        %v1014 = vrot.slane %v1012, 4
        %v1015 = vshll.u32 %v943, 16
        %v1017 = vrot.slane %v1015, 5
        %v1018 = vor.u32 %v1014, %v1017
        %v1019 = vrot.slane %v1018, 4
        %v1021 = vshll.u32 %v951, 16
        %v1023 = vrot.slane %v1021, 5
        %v1024 = vsel %vm767, %v1019, %v1023
        %v1026 = vshrl.u32 %v944, 16
        %v1028 = vrot.slane %v1026, 4
        %v1029 = vshll.u32 %v944, 16
        %v1031 = vrot.slane %v1029, 5
        %v1032 = vor.u32 %v1028, %v1031
        %v1033 = vrot.slane %v1032, 4
        %v1035 = vshll.u32 %v952, 16
        %v1037 = vrot.slane %v1035, 5
        %v1038 = vsel %vm767, %v1033, %v1037
        %v1040 = vshrl.u32 %v945, 16
        %v1042 = vrot.slane %v1040, 4
        %v1043 = vshll.u32 %v945, 16
        %v1045 = vrot.slane %v1043, 5
        %v1046 = vor.u32 %v1042, %v1045
        %v1047 = vrot.slane %v1046, 4
        %v1049 = vshll.u32 %v953, 16
        %v1051 = vrot.slane %v1049, 5
        %v1052 = vsel %vm767, %v1047, %v1051
        %v1054 = vshrl.u32 %v946, 16
        %v1056 = vrot.slane %v1054, 4
        %v1057 = vshll.u32 %v946, 16
        %v1059 = vrot.slane %v1057, 5
        %v1060 = vor.u32 %v1056, %v1059
        %v1061 = vrot.slane %v1060, 4
        %v1063 = vshll.u32 %v954, 16
        %v1065 = vrot.slane %v1063, 5
        %v1066 = vsel %vm767, %v1061, %v1065
        %v1067 = vld [vmem:[%s694] sm:$0xe]
        %v1068 = vld [vmem:[%s694 + $0x8] sm:$0xe]
        %v1069 = vld [vmem:[%s694 + $0x10] sm:$0xe]
        %v1070 = vld [vmem:[%s694 + $0x18] sm:$0xe]
        %v1071 = vld [vmem:[%s694 + $0x20] sm:$0xe]
        %v1072 = vld [vmem:[%s694 + $0x28] sm:$0xe]
        %v1073 = vld [vmem:[%s694 + $0x30] sm:$0xe]
        %v1074 = vld [vmem:[%s694 + $0x38] sm:$0xe]
        %v1091 = vrot.slane %v1067, 5
        %v1092 = vrot.slane %v1091, 4
        %v1093 = vrot.slane %v947, 5
        %v1094 = vsel %vm906, %v1092, %v1093
        %v1095 = vrot.slane %v1068, 5
        %v1096 = vrot.slane %v1095, 4
        %v1097 = vrot.slane %v948, 5
        %v1098 = vsel %vm906, %v1096, %v1097
        %v1099 = vrot.slane %v1069, 5
        %v1100 = vrot.slane %v1099, 4
        %v1101 = vrot.slane %v949, 5
        %v1102 = vsel %vm906, %v1100, %v1101
        %v1103 = vrot.slane %v1070, 5
        %v1104 = vrot.slane %v1103, 4
        %v1105 = vrot.slane %v950, 5
        %v1106 = vsel %vm906, %v1104, %v1105
        %v1107 = vrot.slane %v1071, 5
        %v1108 = vrot.slane %v1107, 4
        %v1109 = vrot.slane %v951, 5
        %v1110 = vsel %vm906, %v1108, %v1109
        %v1111 = vrot.slane %v1072, 5
        %v1112 = vrot.slane %v1111, 4
        %v1113 = vrot.slane %v952, 5
        %v1114 = vsel %vm906, %v1112, %v1113
        %v1115 = vrot.slane %v1073, 5
        %v1116 = vrot.slane %v1115, 4
        %v1117 = vrot.slane %v953, 5
        %v1118 = vsel %vm906, %v1116, %v1117
        %v1119 = vrot.slane %v1074, 5
        %v1120 = vrot.slane %v1119, 4
        %v1121 = vrot.slane %v954, 5
        %v1122 = vsel %vm906, %v1120, %v1121
        %s1123 = scalar_lea.vmem [#allocation2], 16
        %v1124 = vld [vmem:[%s1123] sm:$0xf]
        %v1125 = vld [vmem:[%s1123 + $0x8] sm:$0xf]
        %v1126 = vld [vmem:[%s1123 + $0x10] sm:$0xf]
        %v1127 = vld [vmem:[%s1123 + $0x18] sm:$0xf]
        %v1128 = vld [vmem:[%s1123 + $0x20] sm:$0xf]
        %v1129 = vld [vmem:[%s1123 + $0x28] sm:$0xf]
        %v1130 = vld [vmem:[%s1123 + $0x30] sm:$0xf]
        %v1131 = vld [vmem:[%s1123 + $0x38] sm:$0xf]
        %v1132 = vld [vmem:[%s1123 + $0x4] sm:$0x1]
        %v1133 = vld [vmem:[%s1123 + $0xc] sm:$0x1]
        %v1134 = vld [vmem:[%s1123 + $0x14] sm:$0x1]
        %v1135 = vld [vmem:[%s1123 + $0x1c] sm:$0x1]
        %v1136 = vld [vmem:[%s1123 + $0x24] sm:$0x1]
        %v1137 = vld [vmem:[%s1123 + $0x2c] sm:$0x1]
        %v1138 = vld [vmem:[%s1123 + $0x34] sm:$0x1]
        %v1139 = vld [vmem:[%s1123 + $0x3c] sm:$0x1]
        %v1141 = vshrl.u32 %v1124, 16
        %v1143 = vrot.slane %v1141, 4
        %v1144 = vshll.u32 %v1124, 16
        %v1146 = vrot.slane %v1144, 5
        %v1147 = vor.u32 %v1143, %v1146
        %v1148 = vrot.slane %v1147, 4
        %v1150 = vshll.u32 %v1132, 16
        %v1152 = vrot.slane %v1150, 5
        %v1153 = vsel %vm767, %v1148, %v1152
        %v1155 = vshrl.u32 %v1125, 16
        %v1157 = vrot.slane %v1155, 4
        %v1158 = vshll.u32 %v1125, 16
        %v1160 = vrot.slane %v1158, 5
        %v1161 = vor.u32 %v1157, %v1160
        %v1162 = vrot.slane %v1161, 4
        %v1164 = vshll.u32 %v1133, 16
        %v1166 = vrot.slane %v1164, 5
        %v1167 = vsel %vm767, %v1162, %v1166
        %v1169 = vshrl.u32 %v1126, 16
        %v1171 = vrot.slane %v1169, 4
        %v1172 = vshll.u32 %v1126, 16
        %v1174 = vrot.slane %v1172, 5
        %v1175 = vor.u32 %v1171, %v1174
        %v1176 = vrot.slane %v1175, 4
        %v1178 = vshll.u32 %v1134, 16
        %v1180 = vrot.slane %v1178, 5
        %v1181 = vsel %vm767, %v1176, %v1180
        %v1183 = vshrl.u32 %v1127, 16
        %v1185 = vrot.slane %v1183, 4
        %v1186 = vshll.u32 %v1127, 16
        %v1188 = vrot.slane %v1186, 5
        %v1189 = vor.u32 %v1185, %v1188
        %v1190 = vrot.slane %v1189, 4
        %v1192 = vshll.u32 %v1135, 16
        %v1194 = vrot.slane %v1192, 5
        %v1195 = vsel %vm767, %v1190, %v1194
        %v1197 = vshrl.u32 %v1128, 16
        %v1199 = vrot.slane %v1197, 4
        %v1200 = vshll.u32 %v1128, 16
        %v1202 = vrot.slane %v1200, 5
        %v1203 = vor.u32 %v1199, %v1202
        %v1204 = vrot.slane %v1203, 4
        %v1206 = vshll.u32 %v1136, 16
        %v1208 = vrot.slane %v1206, 5
        %v1209 = vsel %vm767, %v1204, %v1208
        %v1211 = vshrl.u32 %v1129, 16
        %v1213 = vrot.slane %v1211, 4
        %v1214 = vshll.u32 %v1129, 16
        %v1216 = vrot.slane %v1214, 5
        %v1217 = vor.u32 %v1213, %v1216
        %v1218 = vrot.slane %v1217, 4
        %v1220 = vshll.u32 %v1137, 16
        %v1222 = vrot.slane %v1220, 5
        %v1223 = vsel %vm767, %v1218, %v1222
        %v1225 = vshrl.u32 %v1130, 16
        %v1227 = vrot.slane %v1225, 4
        %v1228 = vshll.u32 %v1130, 16
        %v1230 = vrot.slane %v1228, 5
        %v1231 = vor.u32 %v1227, %v1230
        %v1232 = vrot.slane %v1231, 4
        %v1234 = vshll.u32 %v1138, 16
        %v1236 = vrot.slane %v1234, 5
        %v1237 = vsel %vm767, %v1232, %v1236
        %v1239 = vshrl.u32 %v1131, 16
        %v1241 = vrot.slane %v1239, 4
        %v1242 = vshll.u32 %v1131, 16
        %v1244 = vrot.slane %v1242, 5
        %v1245 = vor.u32 %v1241, %v1244
        %v1246 = vrot.slane %v1245, 4
        %v1248 = vshll.u32 %v1139, 16
        %v1250 = vrot.slane %v1248, 5
        %v1251 = vsel %vm767, %v1246, %v1250
        %v1252 = vld [vmem:[%s1123] sm:$0xe]
        %v1253 = vld [vmem:[%s1123 + $0x8] sm:$0xe]
        %v1254 = vld [vmem:[%s1123 + $0x10] sm:$0xe]
        %v1255 = vld [vmem:[%s1123 + $0x18] sm:$0xe]
        %v1256 = vld [vmem:[%s1123 + $0x20] sm:$0xe]
        %v1257 = vld [vmem:[%s1123 + $0x28] sm:$0xe]
        %v1258 = vld [vmem:[%s1123 + $0x30] sm:$0xe]
        %v1259 = vld [vmem:[%s1123 + $0x38] sm:$0xe]
        %v1276 = vrot.slane %v1252, 5
        %v1277 = vrot.slane %v1276, 4
        %v1278 = vrot.slane %v1132, 5
        %v1279 = vsel %vm906, %v1277, %v1278
        %v1280 = vrot.slane %v1253, 5
        %v1281 = vrot.slane %v1280, 4
        %v1282 = vrot.slane %v1133, 5
        %v1283 = vsel %vm906, %v1281, %v1282
        %v1284 = vrot.slane %v1254, 5
        %v1285 = vrot.slane %v1284, 4
        %v1286 = vrot.slane %v1134, 5
        %v1287 = vsel %vm906, %v1285, %v1286
        %v1288 = vrot.slane %v1255, 5
        %v1289 = vrot.slane %v1288, 4
        %v1290 = vrot.slane %v1135, 5
        %v1291 = vsel %vm906, %v1289, %v1290
        %v1292 = vrot.slane %v1256, 5
        %v1293 = vrot.slane %v1292, 4
        %v1294 = vrot.slane %v1136, 5
        %v1295 = vsel %vm906, %v1293, %v1294
        %v1296 = vrot.slane %v1257, 5
        %v1297 = vrot.slane %v1296, 4
        %v1298 = vrot.slane %v1137, 5
        %v1299 = vsel %vm906, %v1297, %v1298
        %v1300 = vrot.slane %v1258, 5
        %v1301 = vrot.slane %v1300, 4
        %v1302 = vrot.slane %v1138, 5
        %v1303 = vsel %vm906, %v1301, %v1302
        %v1304 = vrot.slane %v1259, 5
        %v1305 = vrot.slane %v1304, 4
        %v1306 = vrot.slane %v1139, 5
        %v1307 = vsel %vm906, %v1305, %v1306
        %v1316 = vunpack.c.l.b16 %v749
        %v1317 = vunpack.c.l.b16 %v750
        %v1318 = vunpack.c.l.b16 %v751
        %v1319 = vunpack.c.l.b16 %v752
        %v1320 = vunpack.c.l.b16 %v753
        %v1321 = vunpack.c.l.b16 %v754
        %v1322 = vunpack.c.l.b16 %v755
        %v1323 = vunpack.c.l.b16 %v756
        %v1324 = vpack.c.b16 %v1317, %v1316
        %v1325 = vpack.c.b16 %v1319, %v1318
        %v1326 = vpack.c.b16 %v1321, %v1320
        %v1327 = vpack.c.b16 %v1323, %v1322
        %v1328 = vunpack.c.l.b16 %v781
        %v1329 = vunpack.c.l.b16 %v795
        %v1330 = vunpack.c.l.b16 %v809
        %v1331 = vunpack.c.l.b16 %v823
        %v1332 = vunpack.c.l.b16 %v837
        %v1333 = vunpack.c.l.b16 %v851
        %v1334 = vunpack.c.l.b16 %v865
        %v1335 = vunpack.c.l.b16 %v879
        %v1336 = vpack.c.b16 %v1329, %v1328
        %v1337 = vpack.c.b16 %v1331, %v1330
        %v1338 = vpack.c.b16 %v1333, %v1332
        %v1339 = vpack.c.b16 %v1335, %v1334
        %1340 = vrot.lane.b32.xlu0 %v1336, 16
        %v1341 = vpop.permute.xlu0 %1340
        %1342 = vrot.lane.b32.xlu0 %v1337, 16
        %v1343 = vpop.permute.xlu0 %1342
        %1344 = vrot.lane.b32.xlu0 %v1338, 16
        %v1345 = vpop.permute.xlu0 %1344
        %1346 = vrot.lane.b32.xlu0 %v1339, 16
        %v1347 = vpop.permute.xlu0 %1346
        %v1348 = vunpack.c.l.b16 %v910
        %v1349 = vunpack.c.l.b16 %v914
        %v1350 = vunpack.c.l.b16 %v918
        %v1351 = vunpack.c.l.b16 %v922
        %v1352 = vunpack.c.l.b16 %v926
        %v1353 = vunpack.c.l.b16 %v930
        %v1354 = vunpack.c.l.b16 %v934
        %v1355 = vunpack.c.l.b16 %v938
        %v1356 = vpack.c.b16 %v1349, %v1348
        %v1357 = vpack.c.b16 %v1351, %v1350
        %v1358 = vpack.c.b16 %v1353, %v1352
        %v1359 = vpack.c.b16 %v1355, %v1354
        %1360 = vrot.lane.b32.xlu0 %v1356, 32
        %v1361 = vpop.permute.xlu0 %1360
        %1362 = vrot.lane.b32.xlu0 %v1357, 32
        %v1363 = vpop.permute.xlu0 %1362
        %1364 = vrot.lane.b32.xlu0 %v1358, 32
        %v1365 = vpop.permute.xlu0 %1364
        %1366 = vrot.lane.b32.xlu0 %v1359, 32
        %v1367 = vpop.permute.xlu0 %1366
        %v1376 = vunpack.c.l.b16 %v939
        %v1377 = vunpack.c.l.b16 %v940
        %v1378 = vunpack.c.l.b16 %v941
        %v1379 = vunpack.c.l.b16 %v942
        %v1380 = vunpack.c.l.b16 %v943
        %v1381 = vunpack.c.l.b16 %v944
        %v1382 = vunpack.c.l.b16 %v945
        %v1383 = vunpack.c.l.b16 %v946
        %v1384 = vpack.c.b16 %v1377, %v1376
        %v1385 = vpack.c.b16 %v1379, %v1378
        %v1386 = vpack.c.b16 %v1381, %v1380
        %v1387 = vpack.c.b16 %v1383, %v1382
        %1388 = vrot.lane.b32.xlu0 %v1384, 48
        %v1389 = vpop.permute.xlu0 %1388
        %1390 = vrot.lane.b32.xlu0 %v1385, 48
        %v1391 = vpop.permute.xlu0 %1390
        %1392 = vrot.lane.b32.xlu0 %v1386, 48
        %v1393 = vpop.permute.xlu0 %1392
        %1394 = vrot.lane.b32.xlu0 %v1387, 48
        %v1395 = vpop.permute.xlu0 %1394
        %v1396 = vunpack.c.l.b16 %v968
        %v1397 = vunpack.c.l.b16 %v982
        %v1398 = vunpack.c.l.b16 %v996
        %v1399 = vunpack.c.l.b16 %v1010
        %v1400 = vunpack.c.l.b16 %v1024
        %v1401 = vunpack.c.l.b16 %v1038
        %v1402 = vunpack.c.l.b16 %v1052
        %v1403 = vunpack.c.l.b16 %v1066
        %v1404 = vpack.c.b16 %v1397, %v1396
        %v1405 = vpack.c.b16 %v1399, %v1398
        %v1406 = vpack.c.b16 %v1401, %v1400
        %v1407 = vpack.c.b16 %v1403, %v1402
        %1408 = vrot.lane.b32.xlu0 %v1404, 64
        %v1409 = vpop.permute.xlu0 %1408
        %1410 = vrot.lane.b32.xlu0 %v1405, 64
        %v1411 = vpop.permute.xlu0 %1410
        %1412 = vrot.lane.b32.xlu0 %v1406, 64
        %v1413 = vpop.permute.xlu0 %1412
        %1414 = vrot.lane.b32.xlu0 %v1407, 64
        %v1415 = vpop.permute.xlu0 %1414
        %v1416 = vunpack.c.l.b16 %v1094
        %v1417 = vunpack.c.l.b16 %v1098
        %v1418 = vunpack.c.l.b16 %v1102
        %v1419 = vunpack.c.l.b16 %v1106
        %v1420 = vunpack.c.l.b16 %v1110
        %v1421 = vunpack.c.l.b16 %v1114
        %v1422 = vunpack.c.l.b16 %v1118
        %v1423 = vunpack.c.l.b16 %v1122
        %v1424 = vpack.c.b16 %v1417, %v1416
        %v1425 = vpack.c.b16 %v1419, %v1418
        %v1426 = vpack.c.b16 %v1421, %v1420
        %v1427 = vpack.c.b16 %v1423, %v1422
        %1428 = vrot.lane.b32.xlu0 %v1424, 80
        %v1429 = vpop.permute.xlu0 %1428
        %1430 = vrot.lane.b32.xlu0 %v1425, 80
        %v1431 = vpop.permute.xlu0 %1430
        %1432 = vrot.lane.b32.xlu0 %v1426, 80
        %v1433 = vpop.permute.xlu0 %1432
        %1434 = vrot.lane.b32.xlu0 %v1427, 80
        %v1435 = vpop.permute.xlu0 %1434
        %v1444 = vunpack.c.l.b16 %v1124
        %v1445 = vunpack.c.l.b16 %v1125
        %v1446 = vunpack.c.l.b16 %v1126
        %v1447 = vunpack.c.l.b16 %v1127
        %v1448 = vunpack.c.l.b16 %v1128
        %v1449 = vunpack.c.l.b16 %v1129
        %v1450 = vunpack.c.l.b16 %v1130
        %v1451 = vunpack.c.l.b16 %v1131
        %v1452 = vpack.c.b16 %v1445, %v1444
        %v1453 = vpack.c.b16 %v1447, %v1446
        %v1454 = vpack.c.b16 %v1449, %v1448
        %v1455 = vpack.c.b16 %v1451, %v1450
        %1456 = vrot.lane.b32.xlu0 %v1452, 96
        %v1457 = vpop.permute.xlu0 %1456
        %1458 = vrot.lane.b32.xlu0 %v1453, 96
        %v1459 = vpop.permute.xlu0 %1458
        %1460 = vrot.lane.b32.xlu0 %v1454, 96
        %v1461 = vpop.permute.xlu0 %1460
        %1462 = vrot.lane.b32.xlu0 %v1455, 96
        %v1463 = vpop.permute.xlu0 %1462
        %v1464 = vunpack.c.l.b16 %v1153
        %v1465 = vunpack.c.l.b16 %v1167
        %v1466 = vunpack.c.l.b16 %v1181
        %v1467 = vunpack.c.l.b16 %v1195
        %v1468 = vunpack.c.l.b16 %v1209
        %v1469 = vunpack.c.l.b16 %v1223
        %v1470 = vunpack.c.l.b16 %v1237
        %v1471 = vunpack.c.l.b16 %v1251
        %v1472 = vpack.c.b16 %v1465, %v1464
        %v1473 = vpack.c.b16 %v1467, %v1466
        %v1474 = vpack.c.b16 %v1469, %v1468
        %v1475 = vpack.c.b16 %v1471, %v1470
        %1476 = vrot.lane.b32.xlu0 %v1472, 112
        %v1477 = vpop.permute.xlu0 %1476
        %1478 = vrot.lane.b32.xlu0 %v1473, 112
        %v1479 = vpop.permute.xlu0 %1478
        %1480 = vrot.lane.b32.xlu0 %v1474, 112
        %v1481 = vpop.permute.xlu0 %1480
        %1482 = vrot.lane.b32.xlu0 %v1475, 112
        %v1483 = vpop.permute.xlu0 %1482
        %v1484 = vunpack.c.l.b16 %v1279
        %v1485 = vunpack.c.l.b16 %v1283
        %v1486 = vunpack.c.l.b16 %v1287
        %v1487 = vunpack.c.l.b16 %v1291
        %v1488 = vunpack.c.l.b16 %v1295
        %v1489 = vunpack.c.l.b16 %v1299
        %v1490 = vunpack.c.l.b16 %v1303
        %v1491 = vunpack.c.l.b16 %v1307
        %v1492 = vpack.c.b16 %v1485, %v1484
        %v1493 = vpack.c.b16 %v1487, %v1486
        %v1494 = vpack.c.b16 %v1489, %v1488
        %v1495 = vpack.c.b16 %v1491, %v1490
        %vm1496 = vcmask 130048
        %v1499 = vsel %vm1496, %v1324, %v1341
        %v1502 = vsel %vm1496, %v1325, %v1343
        %v1505 = vsel %vm1496, %v1326, %v1345
        %v1508 = vsel %vm1496, %v1327, %v1347
        %v1510 = vsel %vm496, %v1499, %v1361
        %v1512 = vsel %vm496, %v1502, %v1363
        %v1514 = vsel %vm496, %v1505, %v1365
        %v1516 = vsel %vm496, %v1508, %v1367
        %vm1517 = vcmask 392192
        %v1519 = vsel %vm1517, %v1510, %v1389
        %v1521 = vsel %vm1517, %v1512, %v1391
        %v1523 = vsel %vm1517, %v1514, %v1393
        %v1525 = vsel %vm1517, %v1516, %v1395
        %vm1526 = vcmask 523264
        %v1528 = vsel %vm1526, %v1519, %v1409
        %v1530 = vsel %vm1526, %v1521, %v1411
        %v1532 = vsel %vm1526, %v1523, %v1413
        %v1534 = vsel %vm1526, %v1525, %v1415
        %vm1535 = vcmask 654336
        %v1537 = vsel %vm1535, %v1528, %v1429
        %v1539 = vsel %vm1535, %v1530, %v1431
        %v1541 = vsel %vm1535, %v1532, %v1433
        %v1543 = vsel %vm1535, %v1534, %v1435
        %vm1544 = vcmask 785408
        %v1546 = vsel %vm1544, %v1537, %v1457
        %v1548 = vsel %vm1544, %v1539, %v1459
        %v1550 = vsel %vm1544, %v1541, %v1461
        %v1552 = vsel %vm1544, %v1543, %v1463
        %vm1553 = vcmask 916480
        %v1555 = vsel %vm1553, %v1546, %v1477
        %v1558 = vsel %vm1553, %v1548, %v1479
        %v1561 = vsel %vm1553, %v1550, %v1481
        %v1564 = vsel %vm1553, %v1552, %v1483
        %v1566 = vld [vmem:[%s3] sm:$0xf]
        %v1567 = vld [vmem:[%s3 + $0x4] sm:$0xf]
        %v1568 = vld [vmem:[%s3 + $0x8] sm:$0xf]
        %v1569 = vld [vmem:[%s3 + $0xc] sm:$0xf]
        %v1570 = vld [vmem:[%s3 + $0x10] sm:$0xf]
        %v1571 = vld [vmem:[%s3 + $0x14] sm:$0xf]
        %v1572 = vld [vmem:[%s3 + $0x18] sm:$0xf]
        %v1573 = vld [vmem:[%s3 + $0x1c] sm:$0xf]
        %v1574 = vld [vmem:[%s3 + $0x20] sm:$0xf]
        %v1575 = vld [vmem:[%s3 + $0x24] sm:$0xf]
        %v1576 = vld [vmem:[%s3 + $0x28] sm:$0xf]
        %v1577 = vld [vmem:[%s3 + $0x2c] sm:$0xf]
        %v1578 = vld [vmem:[%s3 + $0x30] sm:$0xf]
        %v1579 = vld [vmem:[%s3 + $0x34] sm:$0xf]
        %v1580 = vld [vmem:[%s3 + $0x38] sm:$0xf]
        %v1581 = vld [vmem:[%s3 + $0x3c] sm:$0xf]
        %v1582 = vld [vmem:[%s3 + $0x40] sm:$0xf]
        %v1583 = vld [vmem:[%s3 + $0x44] sm:$0xf]
        %v1584 = vld [vmem:[%s4] sm:$0x1]
        %v1586 = vlaneseq
        %v1587 = vshrl.u32 %v1586, 7
        %v1588 = vsub.s32 0, %v1587
        %v1589 = vrot.slane %v1584, %v1588
        %v1609 = vunpack.c.l.b16 %v1566
        %v1610 = vunpack.c.l.b16 %v1567
        %v1611 = vunpack.c.l.b16 %v1568
        %v1612 = vunpack.c.l.b16 %v1569
        %v1613 = vunpack.c.l.b16 %v1570
        %v1614 = vunpack.c.l.b16 %v1571
        %v1615 = vunpack.c.l.b16 %v1572
        %v1616 = vunpack.c.l.b16 %v1573
        %v1617 = vunpack.c.l.b16 %v1574
        %v1618 = vunpack.c.l.b16 %v1575
        %v1619 = vunpack.c.l.b16 %v1576
        %v1620 = vunpack.c.l.b16 %v1577
        %v1621 = vunpack.c.l.b16 %v1578
        %v1622 = vunpack.c.l.b16 %v1579
        %v1623 = vunpack.c.l.b16 %v1580
        %v1624 = vunpack.c.l.b16 %v1581
        %v1625 = vunpack.c.l.b16 %v1582
        %v1626 = vunpack.c.l.b16 %v1583
        %v1627 = vpack.c.b16 %v1610, %v1609
        %v1628 = vpack.c.b16 %v1612, %v1611
        %v1629 = vpack.c.b16 %v1614, %v1613
        %v1630 = vpack.c.b16 %v1616, %v1615
        %v1631 = vpack.c.b16 %v1618, %v1617
        %v1632 = vpack.c.b16 %v1620, %v1619
        %v1633 = vpack.c.b16 %v1622, %v1621
        %v1634 = vpack.c.b16 %v1624, %v1623
        %v1635 = vpack.c.b16 %v1626, %v1625
        %v1646 = vsel %vm1496, %v1492, 0
        %v1649 = vsel %vm1496, %v1493, 0
        %v1652 = vsel %vm1496, %v1494, 0
        %v1655 = vsel %vm1496, %v1495, 0
        %1657 = vmatprep.subr.bf16.mxu0 0
        %1658 = vmatpush1.bf16.msra.mxu0 %v1634
        %1659 = vmatprep.subr.bf16.mxu0 0
        %1660 = vmatpush1.bf16.msra.mxu0 %v1633
        %1661 = vmatprep.subr.bf16.mxu0 0
        %1662 = vmatpush1.bf16.msra.mxu0 %v1632
        %1663 = vmatprep.subr.bf16.mxu0 0
        %1664 = vmatpush1.bf16.msra.mxu0 %v1631
        %1665 = vmatprep.subr.bf16.mxu0 0
        %1666 = vmatpush1.bf16.msra.mxu0 %v1630
        %1667 = vmatprep.subr.bf16.mxu0 0
        %1668 = vmatpush1.bf16.msra.mxu0 %v1629
        %1669 = vmatprep.subr.bf16.mxu0 0
        %1670 = vmatpush1.bf16.msra.mxu0 %v1628
        %1671 = vmatprep.subr.bf16.mxu0 0
        %1672 = vmatpush1.bf16.msra.mxu0 %v1627
        %1673 = vmatprep.subr.bf16.mxu0 0
        %1674 = vmatpush2.bf16.msra.mxu0 0
        %1675 = vmatprep.subr.bf16.mxu0 0
        %1676 = vmatpush2.bf16.msra.mxu0 0
        %1677 = vmatprep.subr.bf16.mxu0 0
        %1678 = vmatpush2.bf16.msra.mxu0 0
        %1679 = vmatprep.subr.bf16.mxu0 0
        %1680 = vmatpush2.bf16.msra.mxu0 0
        %1681 = vmatprep.subr.bf16.mxu0 0
        %1682 = vmatpush2.bf16.msra.mxu0 0
        %1683 = vmatprep.subr.bf16.mxu0 0
        %1684 = vmatpush2.bf16.msra.mxu0 0
        %1685 = vmatprep.subr.bf16.mxu0 0
        %1686 = vmatpush2.bf16.msra.mxu0 0
        %1687 = vmatprep.subr.bf16.mxu0 0
        %1688 = vmatpush2.bf16.msra.mxu0 %v1635
        %1689 = vmatprep.mubr.bf16.mxu0 %v1646
        %1690 = vmatmul.mubr.bf16.gmra.mxu0 %v1555
        %v1691 = vpop.f32.mrf.mxu0
        %v1692 = vadd.f32 %v1589, %v1691
        %v1693 = vpop.f32.mrf.mxu0
        %v1694 = vpop.f32.mrf.mxu0
        %v1695 = vadd.f32 %v1589, %v1694
        %v1696 = vpop.f32.mrf.mxu0
        %1697 = vmatprep.mubr.bf16.mxu0 %v1649
        %1698 = vmatmul.mubr.bf16.gmra.mxu0 %v1558
        %v1699 = vpop.f32.mrf.mxu0
        %v1700 = vadd.f32 %v1589, %v1699
        %v1701 = vpop.f32.mrf.mxu0
        %v1702 = vpop.f32.mrf.mxu0
        %v1703 = vadd.f32 %v1589, %v1702
        %v1704 = vpop.f32.mrf.mxu0
        %1705 = vmatprep.mubr.bf16.mxu0 %v1652
        %1706 = vmatmul.mubr.bf16.gmra.mxu0 %v1561
        %v1707 = vpop.f32.mrf.mxu0
        %v1708 = vadd.f32 %v1589, %v1707
        %v1709 = vpop.f32.mrf.mxu0
        %v1710 = vpop.f32.mrf.mxu0
        %v1711 = vadd.f32 %v1589, %v1710
        %v1712 = vpop.f32.mrf.mxu0
        %1713 = vmatprep.mubr.bf16.mxu0 %v1655
        %1714 = vmatmul.mubr.bf16.gmra.mxu0 %v1564
        %v1715 = vpop.f32.mrf.mxu0
        %v1716 = vadd.f32 %v1589, %v1715
        %v1717 = vpop.f32.mrf.mxu0
        %v1718 = vpop.f32.mrf.mxu0
        %v1719 = vadd.f32 %v1589, %v1718
        %v1720 = vpop.f32.mrf.mxu0
        %1721 = vdwg.mxu0
        %v1722 = vmax.f32 %v1692, 0.0
        %v1723 = vmax.f32 %v1695, 0.0
        %v1724 = vmax.f32 %v1700, 0.0
        %v1725 = vmax.f32 %v1703, 0.0
        %v1726 = vmax.f32 %v1708, 0.0
        %v1727 = vmax.f32 %v1711, 0.0
        %v1728 = vmax.f32 %v1716, 0.0
        %v1729 = vmax.f32 %v1719, 0.0
        %v1730 = vpack.c.bf16 %v1722, %v1722
        %v1731 = vpack.c.bf16 %v1723, %v1723
        %v1732 = vpack.c.bf16 %v1724, %v1724
        %v1733 = vpack.c.bf16 %v1725, %v1725
        %v1734 = vpack.c.bf16 %v1726, %v1726
        %v1735 = vpack.c.bf16 %v1727, %v1727
        %v1736 = vpack.c.bf16 %v1728, %v1728
        %v1737 = vpack.c.bf16 %v1729, %v1729
        %v1746 = vunpack.c.l.b16 %v1730
        %v1747 = vunpack.c.l.b16 %v1731
        %v1748 = vunpack.c.l.b16 %v1732
        %v1749 = vunpack.c.l.b16 %v1733
        %v1750 = vunpack.c.l.b16 %v1734
        %v1751 = vunpack.c.l.b16 %v1735
        %v1752 = vunpack.c.l.b16 %v1736
        %v1753 = vunpack.c.l.b16 %v1737
        %v1754 = vpack.c.b16 %v1746, %v1746
        %v1755 = vpack.c.b16 %v1747, %v1747
        %v1756 = vpack.c.b16 %v1748, %v1748
        %v1757 = vpack.c.b16 %v1749, %v1749
        %v1758 = vpack.c.b16 %v1750, %v1750
        %v1759 = vpack.c.b16 %v1751, %v1751
        %v1760 = vpack.c.b16 %v1752, %v1752
        %v1761 = vpack.c.b16 %v1753, %v1753
        %v1763 = vshrl.u32 %v1754, 16
        %v1765 = vrot.slane %v1763, 7
        %v1766 = vshll.u32 %v1754, 16
        %v1768 = vor.u32 %v1765, %v1766
        %v1769 = vrot.slane %v1765, 4
        %v1771 = vshrl.u32 %v1755, 16
        %v1773 = vrot.slane %v1771, 7
        %v1774 = vshll.u32 %v1755, 16
        %v1776 = vor.u32 %v1773, %v1774
        %v1777 = vrot.slane %v1773, 4
        %v1779 = vshrl.u32 %v1756, 16
        %v1781 = vrot.slane %v1779, 7
        %v1782 = vshll.u32 %v1756, 16
        %v1784 = vor.u32 %v1781, %v1782
        %v1785 = vrot.slane %v1781, 4
        %v1787 = vshrl.u32 %v1757, 16
        %v1789 = vrot.slane %v1787, 7
        %v1790 = vshll.u32 %v1757, 16
        %v1792 = vor.u32 %v1789, %v1790
        %v1793 = vrot.slane %v1789, 4
        %v1795 = vshrl.u32 %v1758, 16
        %v1797 = vrot.slane %v1795, 7
        %v1798 = vshll.u32 %v1758, 16
        %v1800 = vor.u32 %v1797, %v1798
        %v1801 = vrot.slane %v1797, 4
        %v1803 = vshrl.u32 %v1759, 16
        %v1805 = vrot.slane %v1803, 7
        %v1806 = vshll.u32 %v1759, 16
        %v1808 = vor.u32 %v1805, %v1806
        %v1809 = vrot.slane %v1805, 4
        %v1811 = vshrl.u32 %v1760, 16
        %v1813 = vrot.slane %v1811, 7
        %v1814 = vshll.u32 %v1760, 16
        %v1816 = vor.u32 %v1813, %v1814
        %v1817 = vrot.slane %v1813, 4
        %v1819 = vshrl.u32 %v1761, 16
        %v1821 = vrot.slane %v1819, 7
        %v1822 = vshll.u32 %v1761, 16
        %v1824 = vor.u32 %v1821, %v1822
        %v1825 = vrot.slane %v1821, 4
        %v1842 = vsel %vm697, %v1768, %v939
        %1843 = vst [vmem:[%s694] sm:$0xf] %v1842
        %v1844 = vld [vmem:[%s694 + $0x4] sm:$0x1]
        %v1845 = vsel %vm703, %v1769, %v1844
        %1846 = vst [vmem:[%s694 + $0x4] sm:$0x1] %v1845
        %v1847 = vld [vmem:[%s694 + $0x8] sm:$0xf]
        %v1848 = vsel %vm697, %v1776, %v1847
        %1849 = vst [vmem:[%s694 + $0x8] sm:$0xf] %v1848
        %v1850 = vld [vmem:[%s694 + $0xc] sm:$0x1]
        %v1851 = vsel %vm703, %v1777, %v1850
        %1852 = vst [vmem:[%s694 + $0xc] sm:$0x1] %v1851
        %v1853 = vld [vmem:[%s694 + $0x10] sm:$0xf]
        %v1854 = vsel %vm697, %v1784, %v1853
        %1855 = vst [vmem:[%s694 + $0x10] sm:$0xf] %v1854
        %v1856 = vld [vmem:[%s694 + $0x14] sm:$0x1]
        %v1857 = vsel %vm703, %v1785, %v1856
        %1858 = vst [vmem:[%s694 + $0x14] sm:$0x1] %v1857
        %v1859 = vld [vmem:[%s694 + $0x18] sm:$0xf]
        %v1860 = vsel %vm697, %v1792, %v1859
        %1861 = vst [vmem:[%s694 + $0x18] sm:$0xf] %v1860
        %v1862 = vld [vmem:[%s694 + $0x1c] sm:$0x1]
        %v1863 = vsel %vm703, %v1793, %v1862
        %1864 = vst [vmem:[%s694 + $0x1c] sm:$0x1] %v1863
        %v1865 = vld [vmem:[%s694 + $0x20] sm:$0xf]
        %v1866 = vsel %vm697, %v1800, %v1865
        %1867 = vst [vmem:[%s694 + $0x20] sm:$0xf] %v1866
        %v1868 = vld [vmem:[%s694 + $0x24] sm:$0x1]
        %v1869 = vsel %vm703, %v1801, %v1868
        %1870 = vst [vmem:[%s694 + $0x24] sm:$0x1] %v1869
        %v1871 = vld [vmem:[%s694 + $0x28] sm:$0xf]
        %v1872 = vsel %vm697, %v1808, %v1871
        %1873 = vst [vmem:[%s694 + $0x28] sm:$0xf] %v1872
        %v1874 = vld [vmem:[%s694 + $0x2c] sm:$0x1]
        %v1875 = vsel %vm703, %v1809, %v1874
        %1876 = vst [vmem:[%s694 + $0x2c] sm:$0x1] %v1875
        %v1877 = vld [vmem:[%s694 + $0x30] sm:$0xf]
        %v1878 = vsel %vm697, %v1816, %v1877
        %1879 = vst [vmem:[%s694 + $0x30] sm:$0xf] %v1878
        %v1880 = vld [vmem:[%s694 + $0x34] sm:$0x1]
        %v1881 = vsel %vm703, %v1817, %v1880
        %1882 = vst [vmem:[%s694 + $0x34] sm:$0x1] %v1881
        %v1883 = vld [vmem:[%s694 + $0x38] sm:$0xf]
        %v1884 = vsel %vm697, %v1824, %v1883
        %1885 = vst [vmem:[%s694 + $0x38] sm:$0xf] %v1884
        %v1886 = vld [vmem:[%s694 + $0x3c] sm:$0x1]
        %v1887 = vsel %vm703, %v1825, %v1886
        %1888 = vst [vmem:[%s694 + $0x3c] sm:$0x1] %v1887
        %v1889 = vld [vmem:[#allocation2] sm:$0xf]
        %v1890 = vld [vmem:[#allocation2 + $0x8] sm:$0xf]
        %v1891 = vld [vmem:[#allocation2 + $0x10] sm:$0xf]
        %v1892 = vld [vmem:[#allocation2 + $0x18] sm:$0xf]
        %v1893 = vld [vmem:[#allocation2 + $0x20] sm:$0xf]
        %v1894 = vld [vmem:[#allocation2 + $0x28] sm:$0xf]
        %v1895 = vld [vmem:[#allocation2 + $0x30] sm:$0xf]
        %v1896 = vld [vmem:[#allocation2 + $0x38] sm:$0xf]
        %v1897 = vld [vmem:[#allocation2 + $0x4] sm:$0x1]
        %v1898 = vld [vmem:[#allocation2 + $0xc] sm:$0x1]
        %v1899 = vld [vmem:[#allocation2 + $0x14] sm:$0x1]
        %v1900 = vld [vmem:[#allocation2 + $0x1c] sm:$0x1]
        %v1901 = vld [vmem:[#allocation2 + $0x24] sm:$0x1]
        %v1902 = vld [vmem:[#allocation2 + $0x2c] sm:$0x1]
        %v1903 = vld [vmem:[#allocation2 + $0x34] sm:$0x1]
        %v1904 = vld [vmem:[#allocation2 + $0x3c] sm:$0x1]
        %v1906 = vshrl.u32 %v1889, 16
        %v1908 = vrot.slane %v1906, 4
        %v1909 = vshll.u32 %v1889, 16
        %v1911 = vrot.slane %v1909, 5
        %v1912 = vor.u32 %v1908, %v1911
        %v1913 = vrot.slane %v1912, 4
        %v1915 = vshll.u32 %v1897, 16
        %v1917 = vrot.slane %v1915, 5
        %v1918 = vsel %vm767, %v1913, %v1917
        %v1920 = vshrl.u32 %v1890, 16
        %v1922 = vrot.slane %v1920, 4
        %v1923 = vshll.u32 %v1890, 16
        %v1925 = vrot.slane %v1923, 5
        %v1926 = vor.u32 %v1922, %v1925
        %v1927 = vrot.slane %v1926, 4
        %v1929 = vshll.u32 %v1898, 16
        %v1931 = vrot.slane %v1929, 5
        %v1932 = vsel %vm767, %v1927, %v1931
        %v1934 = vshrl.u32 %v1891, 16
        %v1936 = vrot.slane %v1934, 4
        %v1937 = vshll.u32 %v1891, 16
        %v1939 = vrot.slane %v1937, 5
        %v1940 = vor.u32 %v1936, %v1939
        %v1941 = vrot.slane %v1940, 4
        %v1943 = vshll.u32 %v1899, 16
        %v1945 = vrot.slane %v1943, 5
        %v1946 = vsel %vm767, %v1941, %v1945
        %v1948 = vshrl.u32 %v1892, 16
        %v1950 = vrot.slane %v1948, 4
        %v1951 = vshll.u32 %v1892, 16
        %v1953 = vrot.slane %v1951, 5
        %v1954 = vor.u32 %v1950, %v1953
        %v1955 = vrot.slane %v1954, 4
        %v1957 = vshll.u32 %v1900, 16
        %v1959 = vrot.slane %v1957, 5
        %v1960 = vsel %vm767, %v1955, %v1959
        %v1962 = vshrl.u32 %v1893, 16
        %v1964 = vrot.slane %v1962, 4
        %v1965 = vshll.u32 %v1893, 16
        %v1967 = vrot.slane %v1965, 5
        %v1968 = vor.u32 %v1964, %v1967
        %v1969 = vrot.slane %v1968, 4
        %v1971 = vshll.u32 %v1901, 16
        %v1973 = vrot.slane %v1971, 5
        %v1974 = vsel %vm767, %v1969, %v1973
        %v1976 = vshrl.u32 %v1894, 16
        %v1978 = vrot.slane %v1976, 4
        %v1979 = vshll.u32 %v1894, 16
        %v1981 = vrot.slane %v1979, 5
        %v1982 = vor.u32 %v1978, %v1981
        %v1983 = vrot.slane %v1982, 4
        %v1985 = vshll.u32 %v1902, 16
        %v1987 = vrot.slane %v1985, 5
        %v1988 = vsel %vm767, %v1983, %v1987
        %v1990 = vshrl.u32 %v1895, 16
        %v1992 = vrot.slane %v1990, 4
        %v1993 = vshll.u32 %v1895, 16
        %v1995 = vrot.slane %v1993, 5
        %v1996 = vor.u32 %v1992, %v1995
        %v1997 = vrot.slane %v1996, 4
        %v1999 = vshll.u32 %v1903, 16
        %v2001 = vrot.slane %v1999, 5
        %v2002 = vsel %vm767, %v1997, %v2001
        %v2004 = vshrl.u32 %v1896, 16
        %v2006 = vrot.slane %v2004, 4
        %v2007 = vshll.u32 %v1896, 16
        %v2009 = vrot.slane %v2007, 5
        %v2010 = vor.u32 %v2006, %v2009
        %v2011 = vrot.slane %v2010, 4
        %v2013 = vshll.u32 %v1904, 16
        %v2015 = vrot.slane %v2013, 5
        %v2016 = vsel %vm767, %v2011, %v2015
        %v2017 = vld [vmem:[#allocation2] sm:$0xe]
        %v2018 = vld [vmem:[#allocation2 + $0x8] sm:$0xe]
        %v2019 = vld [vmem:[#allocation2 + $0x10] sm:$0xe]
        %v2020 = vld [vmem:[#allocation2 + $0x18] sm:$0xe]
        %v2021 = vld [vmem:[#allocation2 + $0x20] sm:$0xe]
        %v2022 = vld [vmem:[#allocation2 + $0x28] sm:$0xe]
        %v2023 = vld [vmem:[#allocation2 + $0x30] sm:$0xe]
        %v2024 = vld [vmem:[#allocation2 + $0x38] sm:$0xe]
        %v2041 = vrot.slane %v2017, 5
        %v2042 = vrot.slane %v2041, 4
        %v2043 = vrot.slane %v1897, 5
        %v2044 = vsel %vm906, %v2042, %v2043
        %v2045 = vrot.slane %v2018, 5
        %v2046 = vrot.slane %v2045, 4
        %v2047 = vrot.slane %v1898, 5
        %v2048 = vsel %vm906, %v2046, %v2047
        %v2049 = vrot.slane %v2019, 5
        %v2050 = vrot.slane %v2049, 4
        %v2051 = vrot.slane %v1899, 5
        %v2052 = vsel %vm906, %v2050, %v2051
        %v2053 = vrot.slane %v2020, 5
        %v2054 = vrot.slane %v2053, 4
        %v2055 = vrot.slane %v1900, 5
        %v2056 = vsel %vm906, %v2054, %v2055
        %v2057 = vrot.slane %v2021, 5
        %v2058 = vrot.slane %v2057, 4
        %v2059 = vrot.slane %v1901, 5
        %v2060 = vsel %vm906, %v2058, %v2059
        %v2061 = vrot.slane %v2022, 5
        %v2062 = vrot.slane %v2061, 4
        %v2063 = vrot.slane %v1902, 5
        %v2064 = vsel %vm906, %v2062, %v2063
        %v2065 = vrot.slane %v2023, 5
        %v2066 = vrot.slane %v2065, 4
        %v2067 = vrot.slane %v1903, 5
        %v2068 = vsel %vm906, %v2066, %v2067
        %v2069 = vrot.slane %v2024, 5
        %v2070 = vrot.slane %v2069, 4
        %v2071 = vrot.slane %v1904, 5
        %v2072 = vsel %vm906, %v2070, %v2071
        %v2073 = vld [vmem:[%s694] sm:$0xf]
        %v2074 = vld [vmem:[%s694 + $0x8] sm:$0xf]
        %v2075 = vld [vmem:[%s694 + $0x10] sm:$0xf]
        %v2076 = vld [vmem:[%s694 + $0x18] sm:$0xf]
        %v2077 = vld [vmem:[%s694 + $0x20] sm:$0xf]
        %v2078 = vld [vmem:[%s694 + $0x28] sm:$0xf]
        %v2079 = vld [vmem:[%s694 + $0x30] sm:$0xf]
        %v2080 = vld [vmem:[%s694 + $0x38] sm:$0xf]
        %v2081 = vld [vmem:[%s694 + $0x4] sm:$0x1]
        %v2082 = vld [vmem:[%s694 + $0xc] sm:$0x1]
        %v2083 = vld [vmem:[%s694 + $0x14] sm:$0x1]
        %v2084 = vld [vmem:[%s694 + $0x1c] sm:$0x1]
        %v2085 = vld [vmem:[%s694 + $0x24] sm:$0x1]
        %v2086 = vld [vmem:[%s694 + $0x2c] sm:$0x1]
        %v2087 = vld [vmem:[%s694 + $0x34] sm:$0x1]
        %v2088 = vld [vmem:[%s694 + $0x3c] sm:$0x1]
        %v2090 = vshrl.u32 %v2073, 16
        %v2092 = vrot.slane %v2090, 4
        %v2093 = vshll.u32 %v2073, 16
        %v2095 = vrot.slane %v2093, 5
        %v2096 = vor.u32 %v2092, %v2095
        %v2097 = vrot.slane %v2096, 4
        %v2099 = vshll.u32 %v2081, 16
        %v2101 = vrot.slane %v2099, 5
        %v2102 = vsel %vm767, %v2097, %v2101
        %v2104 = vshrl.u32 %v2074, 16
        %v2106 = vrot.slane %v2104, 4
        %v2107 = vshll.u32 %v2074, 16
        %v2109 = vrot.slane %v2107, 5
        %v2110 = vor.u32 %v2106, %v2109
        %v2111 = vrot.slane %v2110, 4
        %v2113 = vshll.u32 %v2082, 16
        %v2115 = vrot.slane %v2113, 5
        %v2116 = vsel %vm767, %v2111, %v2115
        %v2118 = vshrl.u32 %v2075, 16
        %v2120 = vrot.slane %v2118, 4
        %v2121 = vshll.u32 %v2075, 16
        %v2123 = vrot.slane %v2121, 5
        %v2124 = vor.u32 %v2120, %v2123
        %v2125 = vrot.slane %v2124, 4
        %v2127 = vshll.u32 %v2083, 16
        %v2129 = vrot.slane %v2127, 5
        %v2130 = vsel %vm767, %v2125, %v2129
        %v2132 = vshrl.u32 %v2076, 16
        %v2134 = vrot.slane %v2132, 4
        %v2135 = vshll.u32 %v2076, 16
        %v2137 = vrot.slane %v2135, 5
        %v2138 = vor.u32 %v2134, %v2137
        %v2139 = vrot.slane %v2138, 4
        %v2141 = vshll.u32 %v2084, 16
        %v2143 = vrot.slane %v2141, 5
        %v2144 = vsel %vm767, %v2139, %v2143
        %v2146 = vshrl.u32 %v2077, 16
        %v2148 = vrot.slane %v2146, 4
        %v2149 = vshll.u32 %v2077, 16
        %v2151 = vrot.slane %v2149, 5
        %v2152 = vor.u32 %v2148, %v2151
        %v2153 = vrot.slane %v2152, 4
        %v2155 = vshll.u32 %v2085, 16
        %v2157 = vrot.slane %v2155, 5
        %v2158 = vsel %vm767, %v2153, %v2157
        %v2160 = vshrl.u32 %v2078, 16
        %v2162 = vrot.slane %v2160, 4
        %v2163 = vshll.u32 %v2078, 16
        %v2165 = vrot.slane %v2163, 5
        %v2166 = vor.u32 %v2162, %v2165
        %v2167 = vrot.slane %v2166, 4
        %v2169 = vshll.u32 %v2086, 16
        %v2171 = vrot.slane %v2169, 5
        %v2172 = vsel %vm767, %v2167, %v2171
        %v2174 = vshrl.u32 %v2079, 16
        %v2176 = vrot.slane %v2174, 4
        %v2177 = vshll.u32 %v2079, 16
        %v2179 = vrot.slane %v2177, 5
        %v2180 = vor.u32 %v2176, %v2179
        %v2181 = vrot.slane %v2180, 4
        %v2183 = vshll.u32 %v2087, 16
        %v2185 = vrot.slane %v2183, 5
        %v2186 = vsel %vm767, %v2181, %v2185
        %v2188 = vshrl.u32 %v2080, 16
        %v2190 = vrot.slane %v2188, 4
        %v2191 = vshll.u32 %v2080, 16
        %v2193 = vrot.slane %v2191, 5
        %v2194 = vor.u32 %v2190, %v2193
        %v2195 = vrot.slane %v2194, 4
        %v2197 = vshll.u32 %v2088, 16
        %v2199 = vrot.slane %v2197, 5
        %v2200 = vsel %vm767, %v2195, %v2199
        %v2201 = vld [vmem:[%s694] sm:$0xe]
        %v2202 = vld [vmem:[%s694 + $0x8] sm:$0xe]
        %v2203 = vld [vmem:[%s694 + $0x10] sm:$0xe]
        %v2204 = vld [vmem:[%s694 + $0x18] sm:$0xe]
        %v2205 = vld [vmem:[%s694 + $0x20] sm:$0xe]
        %v2206 = vld [vmem:[%s694 + $0x28] sm:$0xe]
        %v2207 = vld [vmem:[%s694 + $0x30] sm:$0xe]
        %v2208 = vld [vmem:[%s694 + $0x38] sm:$0xe]
        %v2225 = vrot.slane %v2201, 5
        %v2226 = vrot.slane %v2225, 4
        %v2227 = vrot.slane %v2081, 5
        %v2228 = vsel %vm906, %v2226, %v2227
        %v2229 = vrot.slane %v2202, 5
        %v2230 = vrot.slane %v2229, 4
        %v2231 = vrot.slane %v2082, 5
        %v2232 = vsel %vm906, %v2230, %v2231
        %v2233 = vrot.slane %v2203, 5
        %v2234 = vrot.slane %v2233, 4
        %v2235 = vrot.slane %v2083, 5
        %v2236 = vsel %vm906, %v2234, %v2235
        %v2237 = vrot.slane %v2204, 5
        %v2238 = vrot.slane %v2237, 4
        %v2239 = vrot.slane %v2084, 5
        %v2240 = vsel %vm906, %v2238, %v2239
        %v2241 = vrot.slane %v2205, 5
        %v2242 = vrot.slane %v2241, 4
        %v2243 = vrot.slane %v2085, 5
        %v2244 = vsel %vm906, %v2242, %v2243
        %v2245 = vrot.slane %v2206, 5
        %v2246 = vrot.slane %v2245, 4
        %v2247 = vrot.slane %v2086, 5
        %v2248 = vsel %vm906, %v2246, %v2247
        %v2249 = vrot.slane %v2207, 5
        %v2250 = vrot.slane %v2249, 4
        %v2251 = vrot.slane %v2087, 5
        %v2252 = vsel %vm906, %v2250, %v2251
        %v2253 = vrot.slane %v2208, 5
        %v2254 = vrot.slane %v2253, 4
        %v2255 = vrot.slane %v2088, 5
        %v2256 = vsel %vm906, %v2254, %v2255
        %v2257 = vld [vmem:[%s1123] sm:$0xf]
        %v2258 = vld [vmem:[%s1123 + $0x8] sm:$0xf]
        %v2259 = vld [vmem:[%s1123 + $0x10] sm:$0xf]
        %v2260 = vld [vmem:[%s1123 + $0x18] sm:$0xf]
        %v2261 = vld [vmem:[%s1123 + $0x20] sm:$0xf]
        %v2262 = vld [vmem:[%s1123 + $0x28] sm:$0xf]
        %v2263 = vld [vmem:[%s1123 + $0x30] sm:$0xf]
        %v2264 = vld [vmem:[%s1123 + $0x38] sm:$0xf]
        %v2265 = vld [vmem:[%s1123 + $0x4] sm:$0x1]
        %v2266 = vld [vmem:[%s1123 + $0xc] sm:$0x1]
        %v2267 = vld [vmem:[%s1123 + $0x14] sm:$0x1]
        %v2268 = vld [vmem:[%s1123 + $0x1c] sm:$0x1]
        %v2269 = vld [vmem:[%s1123 + $0x24] sm:$0x1]
        %v2270 = vld [vmem:[%s1123 + $0x2c] sm:$0x1]
        %v2271 = vld [vmem:[%s1123 + $0x34] sm:$0x1]
        %v2272 = vld [vmem:[%s1123 + $0x3c] sm:$0x1]
        %v2274 = vshrl.u32 %v2257, 16
        %v2276 = vrot.slane %v2274, 4
        %v2277 = vshll.u32 %v2257, 16
        %v2279 = vrot.slane %v2277, 5
        %v2280 = vor.u32 %v2276, %v2279
        %v2281 = vrot.slane %v2280, 4
        %v2283 = vshll.u32 %v2265, 16
        %v2285 = vrot.slane %v2283, 5
        %v2286 = vsel %vm767, %v2281, %v2285
        %v2288 = vshrl.u32 %v2258, 16
        %v2290 = vrot.slane %v2288, 4
        %v2291 = vshll.u32 %v2258, 16
        %v2293 = vrot.slane %v2291, 5
        %v2294 = vor.u32 %v2290, %v2293
        %v2295 = vrot.slane %v2294, 4
        %v2297 = vshll.u32 %v2266, 16
        %v2299 = vrot.slane %v2297, 5
        %v2300 = vsel %vm767, %v2295, %v2299
        %v2302 = vshrl.u32 %v2259, 16
        %v2304 = vrot.slane %v2302, 4
        %v2305 = vshll.u32 %v2259, 16
        %v2307 = vrot.slane %v2305, 5
        %v2308 = vor.u32 %v2304, %v2307
        %v2309 = vrot.slane %v2308, 4
        %v2311 = vshll.u32 %v2267, 16
        %v2313 = vrot.slane %v2311, 5
        %v2314 = vsel %vm767, %v2309, %v2313
        %v2316 = vshrl.u32 %v2260, 16
        %v2318 = vrot.slane %v2316, 4
        %v2319 = vshll.u32 %v2260, 16
        %v2321 = vrot.slane %v2319, 5
        %v2322 = vor.u32 %v2318, %v2321
        %v2323 = vrot.slane %v2322, 4
        %v2325 = vshll.u32 %v2268, 16
        %v2327 = vrot.slane %v2325, 5
        %v2328 = vsel %vm767, %v2323, %v2327
        %v2330 = vshrl.u32 %v2261, 16
        %v2332 = vrot.slane %v2330, 4
        %v2333 = vshll.u32 %v2261, 16
        %v2335 = vrot.slane %v2333, 5
        %v2336 = vor.u32 %v2332, %v2335
        %v2337 = vrot.slane %v2336, 4
        %v2339 = vshll.u32 %v2269, 16
        %v2341 = vrot.slane %v2339, 5
        %v2342 = vsel %vm767, %v2337, %v2341
        %v2344 = vshrl.u32 %v2262, 16
        %v2346 = vrot.slane %v2344, 4
        %v2347 = vshll.u32 %v2262, 16
        %v2349 = vrot.slane %v2347, 5
        %v2350 = vor.u32 %v2346, %v2349
        %v2351 = vrot.slane %v2350, 4
        %v2353 = vshll.u32 %v2270, 16
        %v2355 = vrot.slane %v2353, 5
        %v2356 = vsel %vm767, %v2351, %v2355
        %v2358 = vshrl.u32 %v2263, 16
        %v2360 = vrot.slane %v2358, 4
        %v2361 = vshll.u32 %v2263, 16
        %v2363 = vrot.slane %v2361, 5
        %v2364 = vor.u32 %v2360, %v2363
        %v2365 = vrot.slane %v2364, 4
        %v2367 = vshll.u32 %v2271, 16
        %v2369 = vrot.slane %v2367, 5
        %v2370 = vsel %vm767, %v2365, %v2369
        %v2372 = vshrl.u32 %v2264, 16
        %v2374 = vrot.slane %v2372, 4
        %v2375 = vshll.u32 %v2264, 16
        %v2377 = vrot.slane %v2375, 5
        %v2378 = vor.u32 %v2374, %v2377
        %v2379 = vrot.slane %v2378, 4
        %v2381 = vshll.u32 %v2272, 16
        %v2383 = vrot.slane %v2381, 5
        %v2384 = vsel %vm767, %v2379, %v2383
        %v2385 = vld [vmem:[%s1123] sm:$0xe]
        %v2386 = vld [vmem:[%s1123 + $0x8] sm:$0xe]
        %v2387 = vld [vmem:[%s1123 + $0x10] sm:$0xe]
        %v2388 = vld [vmem:[%s1123 + $0x18] sm:$0xe]
        %v2389 = vld [vmem:[%s1123 + $0x20] sm:$0xe]
        %v2390 = vld [vmem:[%s1123 + $0x28] sm:$0xe]
        %v2391 = vld [vmem:[%s1123 + $0x30] sm:$0xe]
        %v2392 = vld [vmem:[%s1123 + $0x38] sm:$0xe]
        %v2409 = vrot.slane %v2385, 5
        %v2410 = vrot.slane %v2409, 4
        %v2411 = vrot.slane %v2265, 5
        %v2412 = vsel %vm906, %v2410, %v2411
        %v2413 = vrot.slane %v2386, 5
        %v2414 = vrot.slane %v2413, 4
        %v2415 = vrot.slane %v2266, 5
        %v2416 = vsel %vm906, %v2414, %v2415
        %v2417 = vrot.slane %v2387, 5
        %v2418 = vrot.slane %v2417, 4
        %v2419 = vrot.slane %v2267, 5
        %v2420 = vsel %vm906, %v2418, %v2419
        %v2421 = vrot.slane %v2388, 5
        %v2422 = vrot.slane %v2421, 4
        %v2423 = vrot.slane %v2268, 5
        %v2424 = vsel %vm906, %v2422, %v2423
        %v2425 = vrot.slane %v2389, 5
        %v2426 = vrot.slane %v2425, 4
        %v2427 = vrot.slane %v2269, 5
        %v2428 = vsel %vm906, %v2426, %v2427
        %v2429 = vrot.slane %v2390, 5
        %v2430 = vrot.slane %v2429, 4
        %v2431 = vrot.slane %v2270, 5
        %v2432 = vsel %vm906, %v2430, %v2431
        %v2433 = vrot.slane %v2391, 5
        %v2434 = vrot.slane %v2433, 4
        %v2435 = vrot.slane %v2271, 5
        %v2436 = vsel %vm906, %v2434, %v2435
        %v2437 = vrot.slane %v2392, 5
        %v2438 = vrot.slane %v2437, 4
        %v2439 = vrot.slane %v2272, 5
        %v2440 = vsel %vm906, %v2438, %v2439
        %v2449 = vunpack.c.l.b16 %v1889
        %v2450 = vunpack.c.l.b16 %v1890
        %v2451 = vunpack.c.l.b16 %v1891
        %v2452 = vunpack.c.l.b16 %v1892
        %v2453 = vunpack.c.l.b16 %v1893
        %v2454 = vunpack.c.l.b16 %v1894
        %v2455 = vunpack.c.l.b16 %v1895
        %v2456 = vunpack.c.l.b16 %v1896
        %v2457 = vpack.c.b16 %v2450, %v2449
        %v2458 = vpack.c.b16 %v2452, %v2451
        %v2459 = vpack.c.b16 %v2454, %v2453
        %v2460 = vpack.c.b16 %v2456, %v2455
        %v2461 = vunpack.c.l.b16 %v1918
        %v2462 = vunpack.c.l.b16 %v1932
        %v2463 = vunpack.c.l.b16 %v1946
        %v2464 = vunpack.c.l.b16 %v1960
        %v2465 = vunpack.c.l.b16 %v1974
        %v2466 = vunpack.c.l.b16 %v1988
        %v2467 = vunpack.c.l.b16 %v2002
        %v2468 = vunpack.c.l.b16 %v2016
        %v2469 = vpack.c.b16 %v2462, %v2461
        %v2470 = vpack.c.b16 %v2464, %v2463
        %v2471 = vpack.c.b16 %v2466, %v2465
        %v2472 = vpack.c.b16 %v2468, %v2467
        %2473 = vrot.lane.b32.xlu0 %v2469, 16
        %v2474 = vpop.permute.xlu0 %2473
        %2475 = vrot.lane.b32.xlu0 %v2470, 16
        %v2476 = vpop.permute.xlu0 %2475
        %2477 = vrot.lane.b32.xlu0 %v2471, 16
        %v2478 = vpop.permute.xlu0 %2477
        %2479 = vrot.lane.b32.xlu0 %v2472, 16
        %v2480 = vpop.permute.xlu0 %2479
        %v2481 = vunpack.c.l.b16 %v2044
        %v2482 = vunpack.c.l.b16 %v2048
        %v2483 = vunpack.c.l.b16 %v2052
        %v2484 = vunpack.c.l.b16 %v2056
        %v2485 = vunpack.c.l.b16 %v2060
        %v2486 = vunpack.c.l.b16 %v2064
        %v2487 = vunpack.c.l.b16 %v2068
        %v2488 = vunpack.c.l.b16 %v2072
        %v2489 = vpack.c.b16 %v2482, %v2481
        %v2490 = vpack.c.b16 %v2484, %v2483
        %v2491 = vpack.c.b16 %v2486, %v2485
        %v2492 = vpack.c.b16 %v2488, %v2487
        %2493 = vrot.lane.b32.xlu0 %v2489, 32
        %v2494 = vpop.permute.xlu0 %2493
        %2495 = vrot.lane.b32.xlu0 %v2490, 32
        %v2496 = vpop.permute.xlu0 %2495
        %2497 = vrot.lane.b32.xlu0 %v2491, 32
        %v2498 = vpop.permute.xlu0 %2497
        %2499 = vrot.lane.b32.xlu0 %v2492, 32
        %v2500 = vpop.permute.xlu0 %2499
        %v2509 = vunpack.c.l.b16 %v2073
        %v2510 = vunpack.c.l.b16 %v2074
        %v2511 = vunpack.c.l.b16 %v2075
        %v2512 = vunpack.c.l.b16 %v2076
        %v2513 = vunpack.c.l.b16 %v2077
        %v2514 = vunpack.c.l.b16 %v2078
        %v2515 = vunpack.c.l.b16 %v2079
        %v2516 = vunpack.c.l.b16 %v2080
        %v2517 = vpack.c.b16 %v2510, %v2509
        %v2518 = vpack.c.b16 %v2512, %v2511
        %v2519 = vpack.c.b16 %v2514, %v2513
        %v2520 = vpack.c.b16 %v2516, %v2515
        %2521 = vrot.lane.b32.xlu0 %v2517, 48
        %v2522 = vpop.permute.xlu0 %2521
        %2523 = vrot.lane.b32.xlu0 %v2518, 48
        %v2524 = vpop.permute.xlu0 %2523
        %2525 = vrot.lane.b32.xlu0 %v2519, 48
        %v2526 = vpop.permute.xlu0 %2525
        %2527 = vrot.lane.b32.xlu0 %v2520, 48
        %v2528 = vpop.permute.xlu0 %2527
        %v2529 = vunpack.c.l.b16 %v2102
        %v2530 = vunpack.c.l.b16 %v2116
        %v2531 = vunpack.c.l.b16 %v2130
        %v2532 = vunpack.c.l.b16 %v2144
        %v2533 = vunpack.c.l.b16 %v2158
        %v2534 = vunpack.c.l.b16 %v2172
        %v2535 = vunpack.c.l.b16 %v2186
        %v2536 = vunpack.c.l.b16 %v2200
        %v2537 = vpack.c.b16 %v2530, %v2529
        %v2538 = vpack.c.b16 %v2532, %v2531
        %v2539 = vpack.c.b16 %v2534, %v2533
        %v2540 = vpack.c.b16 %v2536, %v2535
        %2541 = vrot.lane.b32.xlu0 %v2537, 64
        %v2542 = vpop.permute.xlu0 %2541
        %2543 = vrot.lane.b32.xlu0 %v2538, 64
        %v2544 = vpop.permute.xlu0 %2543
        %2545 = vrot.lane.b32.xlu0 %v2539, 64
        %v2546 = vpop.permute.xlu0 %2545
        %2547 = vrot.lane.b32.xlu0 %v2540, 64
        %v2548 = vpop.permute.xlu0 %2547
        %v2549 = vunpack.c.l.b16 %v2228
        %v2550 = vunpack.c.l.b16 %v2232
        %v2551 = vunpack.c.l.b16 %v2236
        %v2552 = vunpack.c.l.b16 %v2240
        %v2553 = vunpack.c.l.b16 %v2244
        %v2554 = vunpack.c.l.b16 %v2248
        %v2555 = vunpack.c.l.b16 %v2252
        %v2556 = vunpack.c.l.b16 %v2256
        %v2557 = vpack.c.b16 %v2550, %v2549
        %v2558 = vpack.c.b16 %v2552, %v2551
        %v2559 = vpack.c.b16 %v2554, %v2553
        %v2560 = vpack.c.b16 %v2556, %v2555
        %2561 = vrot.lane.b32.xlu0 %v2557, 80
        %v2562 = vpop.permute.xlu0 %2561
        %2563 = vrot.lane.b32.xlu0 %v2558, 80
        %v2564 = vpop.permute.xlu0 %2563
        %2565 = vrot.lane.b32.xlu0 %v2559, 80
        %v2566 = vpop.permute.xlu0 %2565
        %2567 = vrot.lane.b32.xlu0 %v2560, 80
        %v2568 = vpop.permute.xlu0 %2567
        %v2577 = vunpack.c.l.b16 %v2257
        %v2578 = vunpack.c.l.b16 %v2258
        %v2579 = vunpack.c.l.b16 %v2259
        %v2580 = vunpack.c.l.b16 %v2260
        %v2581 = vunpack.c.l.b16 %v2261
        %v2582 = vunpack.c.l.b16 %v2262
        %v2583 = vunpack.c.l.b16 %v2263
        %v2584 = vunpack.c.l.b16 %v2264
        %v2585 = vpack.c.b16 %v2578, %v2577
        %v2586 = vpack.c.b16 %v2580, %v2579
        %v2587 = vpack.c.b16 %v2582, %v2581
        %v2588 = vpack.c.b16 %v2584, %v2583
        %2589 = vrot.lane.b32.xlu0 %v2585, 96
        %v2590 = vpop.permute.xlu0 %2589
        %2591 = vrot.lane.b32.xlu0 %v2586, 96
        %v2592 = vpop.permute.xlu0 %2591
        %2593 = vrot.lane.b32.xlu0 %v2587, 96
        %v2594 = vpop.permute.xlu0 %2593
        %2595 = vrot.lane.b32.xlu0 %v2588, 96
        %v2596 = vpop.permute.xlu0 %2595
        %v2597 = vunpack.c.l.b16 %v2286
        %v2598 = vunpack.c.l.b16 %v2300
        %v2599 = vunpack.c.l.b16 %v2314
        %v2600 = vunpack.c.l.b16 %v2328
        %v2601 = vunpack.c.l.b16 %v2342
        %v2602 = vunpack.c.l.b16 %v2356
        %v2603 = vunpack.c.l.b16 %v2370
        %v2604 = vunpack.c.l.b16 %v2384
        %v2605 = vpack.c.b16 %v2598, %v2597
        %v2606 = vpack.c.b16 %v2600, %v2599
        %v2607 = vpack.c.b16 %v2602, %v2601
        %v2608 = vpack.c.b16 %v2604, %v2603
        %2609 = vrot.lane.b32.xlu0 %v2605, 112
        %v2610 = vpop.permute.xlu0 %2609
        %2611 = vrot.lane.b32.xlu0 %v2606, 112
        %v2612 = vpop.permute.xlu0 %2611
        %2613 = vrot.lane.b32.xlu0 %v2607, 112
        %v2614 = vpop.permute.xlu0 %2613
        %2615 = vrot.lane.b32.xlu0 %v2608, 112
        %v2616 = vpop.permute.xlu0 %2615
        %v2617 = vunpack.c.l.b16 %v2412
        %v2618 = vunpack.c.l.b16 %v2416
        %v2619 = vunpack.c.l.b16 %v2420
        %v2620 = vunpack.c.l.b16 %v2424
        %v2621 = vunpack.c.l.b16 %v2428
        %v2622 = vunpack.c.l.b16 %v2432
        %v2623 = vunpack.c.l.b16 %v2436
        %v2624 = vunpack.c.l.b16 %v2440
        %v2625 = vpack.c.b16 %v2618, %v2617
        %v2626 = vpack.c.b16 %v2620, %v2619
        %v2627 = vpack.c.b16 %v2622, %v2621
        %v2628 = vpack.c.b16 %v2624, %v2623
        %v2631 = vsel %vm1496, %v2457, %v2474
        %v2634 = vsel %vm1496, %v2458, %v2476
        %v2637 = vsel %vm1496, %v2459, %v2478
        %v2640 = vsel %vm1496, %v2460, %v2480
        %v2642 = vsel %vm496, %v2631, %v2494
        %v2644 = vsel %vm496, %v2634, %v2496
        %v2646 = vsel %vm496, %v2637, %v2498
        %v2648 = vsel %vm496, %v2640, %v2500
        %v2650 = vsel %vm1517, %v2642, %v2522
        %v2652 = vsel %vm1517, %v2644, %v2524
        %v2654 = vsel %vm1517, %v2646, %v2526
        %v2656 = vsel %vm1517, %v2648, %v2528
        %v2658 = vsel %vm1526, %v2650, %v2542
        %v2660 = vsel %vm1526, %v2652, %v2544
        %v2662 = vsel %vm1526, %v2654, %v2546
        %v2664 = vsel %vm1526, %v2656, %v2548
        %v2666 = vsel %vm1535, %v2658, %v2562
        %v2668 = vsel %vm1535, %v2660, %v2564
        %v2670 = vsel %vm1535, %v2662, %v2566
        %v2672 = vsel %vm1535, %v2664, %v2568
        %v2674 = vsel %vm1544, %v2666, %v2590
        %v2676 = vsel %vm1544, %v2668, %v2592
        %v2678 = vsel %vm1544, %v2670, %v2594
        %v2680 = vsel %vm1544, %v2672, %v2596
        %v2682 = vsel %vm1553, %v2674, %v2610
        %v2685 = vsel %vm1553, %v2676, %v2612
        %v2688 = vsel %vm1553, %v2678, %v2614
        %v2691 = vsel %vm1553, %v2680, %v2616
        %v2693 = vld [vmem:[%s5] sm:$0xf]
        %v2694 = vld [vmem:[%s5 + $0x4] sm:$0xf]
        %v2695 = vld [vmem:[%s5 + $0x8] sm:$0xf]
        %v2696 = vld [vmem:[%s5 + $0xc] sm:$0xf]
        %v2697 = vld [vmem:[%s5 + $0x10] sm:$0xf]
        %v2698 = vld [vmem:[%s5 + $0x14] sm:$0xf]
        %v2699 = vld [vmem:[%s5 + $0x18] sm:$0xf]
        %v2700 = vld [vmem:[%s5 + $0x1c] sm:$0xf]
        %v2701 = vld [vmem:[%s5 + $0x20] sm:$0xf]
        %v2702 = vld [vmem:[%s5 + $0x24] sm:$0xf]
        %v2703 = vld [vmem:[%s5 + $0x28] sm:$0xf]
        %v2704 = vld [vmem:[%s5 + $0x2c] sm:$0xf]
        %v2705 = vld [vmem:[%s5 + $0x30] sm:$0xf]
        %v2706 = vld [vmem:[%s5 + $0x34] sm:$0xf]
        %v2707 = vld [vmem:[%s5 + $0x38] sm:$0xf]
        %v2708 = vld [vmem:[%s5 + $0x3c] sm:$0xf]
        %v2709 = vld [vmem:[%s5 + $0x40] sm:$0xf]
        %v2710 = vld [vmem:[%s5 + $0x44] sm:$0xf]
        %v2711 = vld [vmem:[%s6] sm:$0x1]
        %v2713 = vlaneseq
        %v2714 = vshrl.u32 %v2713, 7
        %v2715 = vsub.s32 0, %v2714
        %v2716 = vrot.slane %v2711, %v2715
        %v2736 = vunpack.c.l.b16 %v2693
        %v2737 = vunpack.c.l.b16 %v2694
        %v2738 = vunpack.c.l.b16 %v2695
        %v2739 = vunpack.c.l.b16 %v2696
        %v2740 = vunpack.c.l.b16 %v2697
        %v2741 = vunpack.c.l.b16 %v2698
        %v2742 = vunpack.c.l.b16 %v2699
        %v2743 = vunpack.c.l.b16 %v2700
        %v2744 = vunpack.c.l.b16 %v2701
        %v2745 = vunpack.c.l.b16 %v2702
        %v2746 = vunpack.c.l.b16 %v2703
        %v2747 = vunpack.c.l.b16 %v2704
        %v2748 = vunpack.c.l.b16 %v2705
        %v2749 = vunpack.c.l.b16 %v2706
        %v2750 = vunpack.c.l.b16 %v2707
        %v2751 = vunpack.c.l.b16 %v2708
        %v2752 = vunpack.c.l.b16 %v2709
        %v2753 = vunpack.c.l.b16 %v2710
        %v2754 = vpack.c.b16 %v2737, %v2736
        %v2755 = vpack.c.b16 %v2739, %v2738
        %v2756 = vpack.c.b16 %v2741, %v2740
        %v2757 = vpack.c.b16 %v2743, %v2742
        %v2758 = vpack.c.b16 %v2745, %v2744
        %v2759 = vpack.c.b16 %v2747, %v2746
        %v2760 = vpack.c.b16 %v2749, %v2748
        %v2761 = vpack.c.b16 %v2751, %v2750
        %v2762 = vpack.c.b16 %v2753, %v2752
        %v2773 = vsel %vm1496, %v2625, 0
        %v2776 = vsel %vm1496, %v2626, 0
        %v2779 = vsel %vm1496, %v2627, 0
        %v2782 = vsel %vm1496, %v2628, 0
        %2784 = vmatprep.subr.bf16.mxu0 0
        %2785 = vmatpush1.bf16.msra.mxu0 %v2761
        %2786 = vmatprep.subr.bf16.mxu0 0
        %2787 = vmatpush1.bf16.msra.mxu0 %v2760
        %2788 = vmatprep.subr.bf16.mxu0 0
        %2789 = vmatpush1.bf16.msra.mxu0 %v2759
        %2790 = vmatprep.subr.bf16.mxu0 0
        %2791 = vmatpush1.bf16.msra.mxu0 %v2758
        %2792 = vmatprep.subr.bf16.mxu0 0
        %2793 = vmatpush1.bf16.msra.mxu0 %v2757
        %2794 = vmatprep.subr.bf16.mxu0 0
        %2795 = vmatpush1.bf16.msra.mxu0 %v2756
        %2796 = vmatprep.subr.bf16.mxu0 0
        %2797 = vmatpush1.bf16.msra.mxu0 %v2755
        %2798 = vmatprep.subr.bf16.mxu0 0
        %2799 = vmatpush1.bf16.msra.mxu0 %v2754
        %2800 = vmatprep.subr.bf16.mxu0 0
        %2801 = vmatpush2.bf16.msra.mxu0 0
        %2802 = vmatprep.subr.bf16.mxu0 0
        %2803 = vmatpush2.bf16.msra.mxu0 0
        %2804 = vmatprep.subr.bf16.mxu0 0
        %2805 = vmatpush2.bf16.msra.mxu0 0
        %2806 = vmatprep.subr.bf16.mxu0 0
        %2807 = vmatpush2.bf16.msra.mxu0 0
        %2808 = vmatprep.subr.bf16.mxu0 0
        %2809 = vmatpush2.bf16.msra.mxu0 0
        %2810 = vmatprep.subr.bf16.mxu0 0
        %2811 = vmatpush2.bf16.msra.mxu0 0
        %2812 = vmatprep.subr.bf16.mxu0 0
        %2813 = vmatpush2.bf16.msra.mxu0 0
        %2814 = vmatprep.subr.bf16.mxu0 0
        %2815 = vmatpush2.bf16.msra.mxu0 %v2762
        %2816 = vmatprep.mubr.bf16.mxu0 %v2773
        %2817 = vmatmul.mubr.bf16.gmra.mxu0 %v2682
        %v2818 = vpop.f32.mrf.mxu0
        %v2819 = vadd.f32 %v2716, %v2818
        %v2820 = vpop.f32.mrf.mxu0
        %v2821 = vpop.f32.mrf.mxu0
        %v2822 = vadd.f32 %v2716, %v2821
        %v2823 = vpop.f32.mrf.mxu0
        %2824 = vmatprep.mubr.bf16.mxu0 %v2776
        %2825 = vmatmul.mubr.bf16.gmra.mxu0 %v2685
        %v2826 = vpop.f32.mrf.mxu0
        %v2827 = vadd.f32 %v2716, %v2826
        %v2828 = vpop.f32.mrf.mxu0
        %v2829 = vpop.f32.mrf.mxu0
        %v2830 = vadd.f32 %v2716, %v2829
        %v2831 = vpop.f32.mrf.mxu0
        %2832 = vmatprep.mubr.bf16.mxu0 %v2779
        %2833 = vmatmul.mubr.bf16.gmra.mxu0 %v2688
        %v2834 = vpop.f32.mrf.mxu0
        %v2835 = vadd.f32 %v2716, %v2834
        %v2836 = vpop.f32.mrf.mxu0
        %v2837 = vpop.f32.mrf.mxu0
        %v2838 = vadd.f32 %v2716, %v2837
        %v2839 = vpop.f32.mrf.mxu0
        %2840 = vmatprep.mubr.bf16.mxu0 %v2782
        %2841 = vmatmul.mubr.bf16.gmra.mxu0 %v2691
        %v2842 = vpop.f32.mrf.mxu0
        %v2843 = vadd.f32 %v2716, %v2842
        %v2844 = vpop.f32.mrf.mxu0
        %v2845 = vpop.f32.mrf.mxu0
        %v2846 = vadd.f32 %v2716, %v2845
        %v2847 = vpop.f32.mrf.mxu0
        %2848 = vdwg.mxu0
        %v2849 = vmax.f32 %v2819, 0.0
        %v2850 = vmax.f32 %v2822, 0.0
        %v2851 = vmax.f32 %v2827, 0.0
        %v2852 = vmax.f32 %v2830, 0.0
        %v2853 = vmax.f32 %v2835, 0.0
        %v2854 = vmax.f32 %v2838, 0.0
        %v2855 = vmax.f32 %v2843, 0.0
        %v2856 = vmax.f32 %v2846, 0.0
        %2865 = vrot.lane.b32.xlu0 %v1722, 32
        %v2866 = vpop.permute.xlu0 %2865
        %2867 = vrot.lane.b32.xlu0 %v1723, 32
        %v2868 = vpop.permute.xlu0 %2867
        %2869 = vrot.lane.b32.xlu0 %v1724, 32
        %v2870 = vpop.permute.xlu0 %2869
        %2871 = vrot.lane.b32.xlu0 %v1725, 32
        %v2872 = vpop.permute.xlu0 %2871
        %2873 = vrot.lane.b32.xlu0 %v1726, 32
        %v2874 = vpop.permute.xlu0 %2873
        %2875 = vrot.lane.b32.xlu0 %v1727, 32
        %v2876 = vpop.permute.xlu0 %2875
        %2877 = vrot.lane.b32.xlu0 %v1728, 32
        %v2878 = vpop.permute.xlu0 %2877
        %2879 = vrot.lane.b32.xlu0 %v1729, 32
        %v2880 = vpop.permute.xlu0 %2879
        %2897 = vrot.lane.b32.xlu0 %v2849, 48
        %v2898 = vpop.permute.xlu0 %2897
        %2899 = vrot.lane.b32.xlu0 %v2850, 48
        %v2900 = vpop.permute.xlu0 %2899
        %2901 = vrot.lane.b32.xlu0 %v2851, 48
        %v2902 = vpop.permute.xlu0 %2901
        %2903 = vrot.lane.b32.xlu0 %v2852, 48
        %v2904 = vpop.permute.xlu0 %2903
        %2905 = vrot.lane.b32.xlu0 %v2853, 48
        %v2906 = vpop.permute.xlu0 %2905
        %2907 = vrot.lane.b32.xlu0 %v2854, 48
        %v2908 = vpop.permute.xlu0 %2907
        %2909 = vrot.lane.b32.xlu0 %v2855, 48
        %v2910 = vpop.permute.xlu0 %2909
        %2911 = vrot.lane.b32.xlu0 %v2856, 48
        %v2912 = vpop.permute.xlu0 %2911
        %v2921 = vsel %vm496, %v461, %v2866
        %v2922 = vsel %vm496, %v462, %v2868
        %v2923 = vsel %vm496, %v463, %v2870
        %v2924 = vsel %vm496, %v464, %v2872
        %v2925 = vsel %vm496, %v465, %v2874
        %v2926 = vsel %vm496, %v466, %v2876
        %v2927 = vsel %vm496, %v467, %v2878
        %v2928 = vsel %vm496, %v468, %v2880
        %v2929 = vsel %vm1517, %v2921, %v2898
        %v2930 = vsel %vm1517, %v2922, %v2900
        %v2931 = vsel %vm1517, %v2923, %v2902
        %v2932 = vsel %vm1517, %v2924, %v2904
        %v2933 = vsel %vm1517, %v2925, %v2906
        %v2934 = vsel %vm1517, %v2926, %v2908
        %v2935 = vsel %vm1517, %v2927, %v2910
        %v2936 = vsel %vm1517, %v2928, %v2912
        %v2937 = vpack.c.bf16 %v2930, %v2929
        %v2938 = vpack.c.bf16 %v2932, %v2931
        %v2939 = vpack.c.bf16 %v2934, %v2933
        %v2940 = vpack.c.bf16 %v2936, %v2935
        %v2941 = vld [vmem:[%s7] sm:$0xf]
        %v2942 = vld [vmem:[%s7 + $0x4] sm:$0xf]
        %v2943 = vld [vmem:[%s7 + $0x8] sm:$0xf]
        %v2944 = vld [vmem:[%s7 + $0xc] sm:$0xf]
        %v2945 = vld [vmem:[%s7 + $0x10] sm:$0xf]
        %v2946 = vld [vmem:[%s7 + $0x14] sm:$0xf]
        %v2947 = vld [vmem:[%s7 + $0x18] sm:$0xf]
        %v2948 = vld [vmem:[%s7 + $0x1c] sm:$0xf]
        %v2949 = vld [vmem:[%s8] sm:$0x1]
        %v2951 = vlaneseq
        %v2952 = vshrl.u32 %v2951, 7
        %v2953 = vsub.s32 0, %v2952
        %v2954 = vrot.slane %v2949, %v2953
        %v2964 = vunpack.c.l.b16 %v2941
        %v2965 = vunpack.c.l.b16 %v2942
        %v2966 = vunpack.c.l.b16 %v2943
        %v2967 = vunpack.c.l.b16 %v2944
        %v2968 = vunpack.c.l.b16 %v2945
        %v2969 = vunpack.c.l.b16 %v2946
        %v2970 = vunpack.c.l.b16 %v2947
        %v2971 = vunpack.c.l.b16 %v2948
        %v2972 = vpack.c.b16 %v2965, %v2964
        %v2973 = vpack.c.b16 %v2967, %v2966
        %v2974 = vpack.c.b16 %v2969, %v2968
        %v2975 = vpack.c.b16 %v2971, %v2970
        %v2981 = vsel %vm1526, %v2937, 0
        %v2984 = vsel %vm1526, %v2938, 0
        %v2987 = vsel %vm1526, %v2939, 0
        %v2990 = vsel %vm1526, %v2940, 0
        %2992 = vmatprep.subr.bf16.mxu0 0
        %2993 = vmatpush1.bf16.msra.mxu0 0
        %2994 = vmatprep.subr.bf16.mxu0 0
        %2995 = vmatpush1.bf16.msra.mxu0 0
        %2996 = vmatprep.subr.bf16.mxu0 0
        %2997 = vmatpush1.bf16.msra.mxu0 0
        %2998 = vmatprep.subr.bf16.mxu0 0
        %2999 = vmatpush1.bf16.msra.mxu0 0
        %3000 = vmatprep.subr.bf16.mxu0 0
        %3001 = vmatpush1.bf16.msra.mxu0 %v2975
        %3002 = vmatprep.subr.bf16.mxu0 0
        %3003 = vmatpush1.bf16.msra.mxu0 %v2974
        %3004 = vmatprep.subr.bf16.mxu0 0
        %3005 = vmatpush1.bf16.msra.mxu0 %v2973
        %3006 = vmatprep.subr.bf16.mxu0 0
        %3007 = vmatpush1.bf16.msra.mxu0 %v2972
        %3008 = vmatprep.subr.bf16.mxu0 0
        %3009 = vmatpush2.bf16.msra.mxu0 0
        %3010 = vmatprep.subr.bf16.mxu0 0
        %3011 = vmatpush2.bf16.msra.mxu0 0
        %3012 = vmatprep.subr.bf16.mxu0 0
        %3013 = vmatpush2.bf16.msra.mxu0 0
        %3014 = vmatprep.subr.bf16.mxu0 0
        %3015 = vmatpush2.bf16.msra.mxu0 0
        %3016 = vmatprep.subr.bf16.mxu0 0
        %3017 = vmatpush2.bf16.msra.mxu0 0
        %3018 = vmatprep.subr.bf16.mxu0 0
        %3019 = vmatpush2.bf16.msra.mxu0 0
        %3020 = vmatprep.subr.bf16.mxu0 0
        %3021 = vmatpush2.bf16.msra.mxu0 0
        %3022 = vmatprep.subr.bf16.mxu0 0
        %3023 = vmatpush2.bf16.msra.mxu0 0
        %3024 = vmatprep.mubr.bf16.mxu0 0
        %3025 = vmatmul.mubr.bf16.gmra.mxu0 %v2981
        %v3026 = vpop.f32.mrf.mxu0
        %v3027 = vadd.f32 %v2954, %v3026
        %v3028 = vpop.f32.mrf.mxu0
        %v3029 = vpop.f32.mrf.mxu0
        %v3030 = vadd.f32 %v2954, %v3029
        %v3031 = vpop.f32.mrf.mxu0
        %3032 = vmatprep.mubr.bf16.mxu0 0
        %3033 = vmatmul.mubr.bf16.gmra.mxu0 %v2984
        %v3034 = vpop.f32.mrf.mxu0
        %v3035 = vadd.f32 %v2954, %v3034
        %v3036 = vpop.f32.mrf.mxu0
        %v3037 = vpop.f32.mrf.mxu0
        %v3038 = vadd.f32 %v2954, %v3037
        %v3039 = vpop.f32.mrf.mxu0
        %3040 = vmatprep.mubr.bf16.mxu0 0
        %3041 = vmatmul.mubr.bf16.gmra.mxu0 %v2987
        %v3042 = vpop.f32.mrf.mxu0
        %v3043 = vadd.f32 %v2954, %v3042
        %v3044 = vpop.f32.mrf.mxu0
        %v3045 = vpop.f32.mrf.mxu0
        %v3046 = vadd.f32 %v2954, %v3045
        %v3047 = vpop.f32.mrf.mxu0
        %3048 = vmatprep.mubr.bf16.mxu0 0
        %3049 = vmatmul.mubr.bf16.gmra.mxu0 %v2990
        %v3050 = vpop.f32.mrf.mxu0
        %v3051 = vadd.f32 %v2954, %v3050
        %v3052 = vpop.f32.mrf.mxu0
        %v3053 = vpop.f32.mrf.mxu0
        %v3054 = vadd.f32 %v2954, %v3053
        %v3055 = vpop.f32.mrf.mxu0
        %3056 = vdwg.mxu0
        %v3057 = vmax.f32 %v3027, 0.0
        %v3058 = vmax.f32 %v3030, 0.0
        %v3059 = vmax.f32 %v3035, 0.0
        %v3060 = vmax.f32 %v3038, 0.0
        %v3061 = vmax.f32 %v3043, 0.0
        %v3062 = vmax.f32 %v3046, 0.0
        %v3063 = vmax.f32 %v3051, 0.0
        %v3064 = vmax.f32 %v3054, 0.0
        %v3065 = vpack.c.bf16 %v3057, %v3057
        %v3066 = vpack.c.bf16 %v3058, %v3058
        %v3067 = vpack.c.bf16 %v3059, %v3059
        %v3068 = vpack.c.bf16 %v3060, %v3060
        %v3069 = vpack.c.bf16 %v3061, %v3061
        %v3070 = vpack.c.bf16 %v3062, %v3062
        %v3071 = vpack.c.bf16 %v3063, %v3063
        %v3072 = vpack.c.bf16 %v3064, %v3064
        %v3081 = vunpack.c.l.b16 %v3065
        %v3082 = vunpack.c.l.b16 %v3066
        %v3083 = vunpack.c.l.b16 %v3067
        %v3084 = vunpack.c.l.b16 %v3068
        %v3085 = vunpack.c.l.b16 %v3069
        %v3086 = vunpack.c.l.b16 %v3070
        %v3087 = vunpack.c.l.b16 %v3071
        %v3088 = vunpack.c.l.b16 %v3072
        %v3089 = vpack.c.b16 %v3081, %v3081
        %v3090 = vpack.c.b16 %v3082, %v3082
        %v3091 = vpack.c.b16 %v3083, %v3083
        %v3092 = vpack.c.b16 %v3084, %v3084
        %v3093 = vpack.c.b16 %v3085, %v3085
        %v3094 = vpack.c.b16 %v3086, %v3086
        %v3095 = vpack.c.b16 %v3087, %v3087
        %v3096 = vpack.c.b16 %v3088, %v3088
        %v3098 = vshrl.u32 %v3089, 16
        %v3100 = vrot.slane %v3098, 7
        %v3101 = vshll.u32 %v3089, 16
        %v3103 = vor.u32 %v3100, %v3101
        %v3104 = vrot.slane %v3100, 4
        %v3106 = vshrl.u32 %v3090, 16
        %v3108 = vrot.slane %v3106, 7
        %v3109 = vshll.u32 %v3090, 16
        %v3111 = vor.u32 %v3108, %v3109
        %v3112 = vrot.slane %v3108, 4
        %v3114 = vshrl.u32 %v3091, 16
        %v3116 = vrot.slane %v3114, 7
        %v3117 = vshll.u32 %v3091, 16
        %v3119 = vor.u32 %v3116, %v3117
        %v3120 = vrot.slane %v3116, 4
        %v3122 = vshrl.u32 %v3092, 16
        %v3124 = vrot.slane %v3122, 7
        %v3125 = vshll.u32 %v3092, 16
        %v3127 = vor.u32 %v3124, %v3125
        %v3128 = vrot.slane %v3124, 4
        %v3130 = vshrl.u32 %v3093, 16
        %v3132 = vrot.slane %v3130, 7
        %v3133 = vshll.u32 %v3093, 16
        %v3135 = vor.u32 %v3132, %v3133
        %v3136 = vrot.slane %v3132, 4
        %v3138 = vshrl.u32 %v3094, 16
        %v3140 = vrot.slane %v3138, 7
        %v3141 = vshll.u32 %v3094, 16
        %v3143 = vor.u32 %v3140, %v3141
        %v3144 = vrot.slane %v3140, 4
        %v3146 = vshrl.u32 %v3095, 16
        %v3148 = vrot.slane %v3146, 7
        %v3149 = vshll.u32 %v3095, 16
        %v3151 = vor.u32 %v3148, %v3149
        %v3152 = vrot.slane %v3148, 4
        %v3154 = vshrl.u32 %v3096, 16
        %v3156 = vrot.slane %v3154, 7
        %v3157 = vshll.u32 %v3096, 16
        %v3159 = vor.u32 %v3156, %v3157
        %v3160 = vrot.slane %v3156, 4
        %v3177 = vsel %vm697, %v3103, %v2073
        %3178 = vst [vmem:[%s694] sm:$0xf] %v3177
        %v3179 = vld [vmem:[%s694 + $0x4] sm:$0x1]
        %v3180 = vsel %vm703, %v3104, %v3179
        %3181 = vst [vmem:[%s694 + $0x4] sm:$0x1] %v3180
        %v3182 = vld [vmem:[%s694 + $0x8] sm:$0xf]
        %v3183 = vsel %vm697, %v3111, %v3182
        %3184 = vst [vmem:[%s694 + $0x8] sm:$0xf] %v3183
        %v3185 = vld [vmem:[%s694 + $0xc] sm:$0x1]
        %v3186 = vsel %vm703, %v3112, %v3185
        %3187 = vst [vmem:[%s694 + $0xc] sm:$0x1] %v3186
        %v3188 = vld [vmem:[%s694 + $0x10] sm:$0xf]
        %v3189 = vsel %vm697, %v3119, %v3188
        %3190 = vst [vmem:[%s694 + $0x10] sm:$0xf] %v3189
        %v3191 = vld [vmem:[%s694 + $0x14] sm:$0x1]
        %v3192 = vsel %vm703, %v3120, %v3191
        %3193 = vst [vmem:[%s694 + $0x14] sm:$0x1] %v3192
        %v3194 = vld [vmem:[%s694 + $0x18] sm:$0xf]
        %v3195 = vsel %vm697, %v3127, %v3194
        %3196 = vst [vmem:[%s694 + $0x18] sm:$0xf] %v3195
        %v3197 = vld [vmem:[%s694 + $0x1c] sm:$0x1]
        %v3198 = vsel %vm703, %v3128, %v3197
        %3199 = vst [vmem:[%s694 + $0x1c] sm:$0x1] %v3198
        %v3200 = vld [vmem:[%s694 + $0x20] sm:$0xf]
        %v3201 = vsel %vm697, %v3135, %v3200
        %3202 = vst [vmem:[%s694 + $0x20] sm:$0xf] %v3201
        %v3203 = vld [vmem:[%s694 + $0x24] sm:$0x1]
        %v3204 = vsel %vm703, %v3136, %v3203
        %3205 = vst [vmem:[%s694 + $0x24] sm:$0x1] %v3204
        %v3206 = vld [vmem:[%s694 + $0x28] sm:$0xf]
        %v3207 = vsel %vm697, %v3143, %v3206
        %3208 = vst [vmem:[%s694 + $0x28] sm:$0xf] %v3207
        %v3209 = vld [vmem:[%s694 + $0x2c] sm:$0x1]
        %v3210 = vsel %vm703, %v3144, %v3209
        %3211 = vst [vmem:[%s694 + $0x2c] sm:$0x1] %v3210
        %v3212 = vld [vmem:[%s694 + $0x30] sm:$0xf]
        %v3213 = vsel %vm697, %v3151, %v3212
        %3214 = vst [vmem:[%s694 + $0x30] sm:$0xf] %v3213
        %v3215 = vld [vmem:[%s694 + $0x34] sm:$0x1]
        %v3216 = vsel %vm703, %v3152, %v3215
        %3217 = vst [vmem:[%s694 + $0x34] sm:$0x1] %v3216
        %v3218 = vld [vmem:[%s694 + $0x38] sm:$0xf]
        %v3219 = vsel %vm697, %v3159, %v3218
        %3220 = vst [vmem:[%s694 + $0x38] sm:$0xf] %v3219
        %v3221 = vld [vmem:[%s694 + $0x3c] sm:$0x1]
        %v3222 = vsel %vm703, %v3160, %v3221
        %3223 = vst [vmem:[%s694 + $0x3c] sm:$0x1] %v3222
        %v3224 = vld [vmem:[#allocation2] sm:$0xf]
        %v3225 = vld [vmem:[#allocation2 + $0x8] sm:$0xf]
        %v3226 = vld [vmem:[#allocation2 + $0x10] sm:$0xf]
        %v3227 = vld [vmem:[#allocation2 + $0x18] sm:$0xf]
        %v3228 = vld [vmem:[#allocation2 + $0x20] sm:$0xf]
        %v3229 = vld [vmem:[#allocation2 + $0x28] sm:$0xf]
        %v3230 = vld [vmem:[#allocation2 + $0x30] sm:$0xf]
        %v3231 = vld [vmem:[#allocation2 + $0x38] sm:$0xf]
        %v3232 = vld [vmem:[#allocation2 + $0x4] sm:$0x1]
        %v3233 = vld [vmem:[#allocation2 + $0xc] sm:$0x1]
        %v3234 = vld [vmem:[#allocation2 + $0x14] sm:$0x1]
        %v3235 = vld [vmem:[#allocation2 + $0x1c] sm:$0x1]
        %v3236 = vld [vmem:[#allocation2 + $0x24] sm:$0x1]
        %v3237 = vld [vmem:[#allocation2 + $0x2c] sm:$0x1]
        %v3238 = vld [vmem:[#allocation2 + $0x34] sm:$0x1]
        %v3239 = vld [vmem:[#allocation2 + $0x3c] sm:$0x1]
        %v3241 = vshrl.u32 %v3224, 16
        %v3243 = vrot.slane %v3241, 4
        %v3244 = vshll.u32 %v3224, 16
        %v3246 = vrot.slane %v3244, 5
        %v3247 = vor.u32 %v3243, %v3246
        %v3248 = vrot.slane %v3247, 4
        %v3250 = vshll.u32 %v3232, 16
        %v3252 = vrot.slane %v3250, 5
        %v3253 = vsel %vm767, %v3248, %v3252
        %v3255 = vshrl.u32 %v3225, 16
        %v3257 = vrot.slane %v3255, 4
        %v3258 = vshll.u32 %v3225, 16
        %v3260 = vrot.slane %v3258, 5
        %v3261 = vor.u32 %v3257, %v3260
        %v3262 = vrot.slane %v3261, 4
        %v3264 = vshll.u32 %v3233, 16
        %v3266 = vrot.slane %v3264, 5
        %v3267 = vsel %vm767, %v3262, %v3266
        %v3269 = vshrl.u32 %v3226, 16
        %v3271 = vrot.slane %v3269, 4
        %v3272 = vshll.u32 %v3226, 16
        %v3274 = vrot.slane %v3272, 5
        %v3275 = vor.u32 %v3271, %v3274
        %v3276 = vrot.slane %v3275, 4
        %v3278 = vshll.u32 %v3234, 16
        %v3280 = vrot.slane %v3278, 5
        %v3281 = vsel %vm767, %v3276, %v3280
        %v3283 = vshrl.u32 %v3227, 16
        %v3285 = vrot.slane %v3283, 4
        %v3286 = vshll.u32 %v3227, 16
        %v3288 = vrot.slane %v3286, 5
        %v3289 = vor.u32 %v3285, %v3288
        %v3290 = vrot.slane %v3289, 4
        %v3292 = vshll.u32 %v3235, 16
        %v3294 = vrot.slane %v3292, 5
        %v3295 = vsel %vm767, %v3290, %v3294
        %v3297 = vshrl.u32 %v3228, 16
        %v3299 = vrot.slane %v3297, 4
        %v3300 = vshll.u32 %v3228, 16
        %v3302 = vrot.slane %v3300, 5
        %v3303 = vor.u32 %v3299, %v3302
        %v3304 = vrot.slane %v3303, 4
        %v3306 = vshll.u32 %v3236, 16
        %v3308 = vrot.slane %v3306, 5
        %v3309 = vsel %vm767, %v3304, %v3308
        %v3311 = vshrl.u32 %v3229, 16
        %v3313 = vrot.slane %v3311, 4
        %v3314 = vshll.u32 %v3229, 16
        %v3316 = vrot.slane %v3314, 5
        %v3317 = vor.u32 %v3313, %v3316
        %v3318 = vrot.slane %v3317, 4
        %v3320 = vshll.u32 %v3237, 16
        %v3322 = vrot.slane %v3320, 5
        %v3323 = vsel %vm767, %v3318, %v3322
        %v3325 = vshrl.u32 %v3230, 16
        %v3327 = vrot.slane %v3325, 4
        %v3328 = vshll.u32 %v3230, 16
        %v3330 = vrot.slane %v3328, 5
        %v3331 = vor.u32 %v3327, %v3330
        %v3332 = vrot.slane %v3331, 4
        %v3334 = vshll.u32 %v3238, 16
        %v3336 = vrot.slane %v3334, 5
        %v3337 = vsel %vm767, %v3332, %v3336
        %v3339 = vshrl.u32 %v3231, 16
        %v3341 = vrot.slane %v3339, 4
        %v3342 = vshll.u32 %v3231, 16
        %v3344 = vrot.slane %v3342, 5
        %v3345 = vor.u32 %v3341, %v3344
        %v3346 = vrot.slane %v3345, 4
        %v3348 = vshll.u32 %v3239, 16
        %v3350 = vrot.slane %v3348, 5
        %v3351 = vsel %vm767, %v3346, %v3350
        %v3352 = vld [vmem:[#allocation2] sm:$0xe]
        %v3353 = vld [vmem:[#allocation2 + $0x8] sm:$0xe]
        %v3354 = vld [vmem:[#allocation2 + $0x10] sm:$0xe]
        %v3355 = vld [vmem:[#allocation2 + $0x18] sm:$0xe]
        %v3356 = vld [vmem:[#allocation2 + $0x20] sm:$0xe]
        %v3357 = vld [vmem:[#allocation2 + $0x28] sm:$0xe]
        %v3358 = vld [vmem:[#allocation2 + $0x30] sm:$0xe]
        %v3359 = vld [vmem:[#allocation2 + $0x38] sm:$0xe]
        %v3376 = vrot.slane %v3352, 5
        %v3377 = vrot.slane %v3376, 4
        %v3378 = vrot.slane %v3232, 5
        %v3379 = vsel %vm906, %v3377, %v3378
        %v3380 = vrot.slane %v3353, 5
        %v3381 = vrot.slane %v3380, 4
        %v3382 = vrot.slane %v3233, 5
        %v3383 = vsel %vm906, %v3381, %v3382
        %v3384 = vrot.slane %v3354, 5
        %v3385 = vrot.slane %v3384, 4
        %v3386 = vrot.slane %v3234, 5
        %v3387 = vsel %vm906, %v3385, %v3386
        %v3388 = vrot.slane %v3355, 5
        %v3389 = vrot.slane %v3388, 4
        %v3390 = vrot.slane %v3235, 5
        %v3391 = vsel %vm906, %v3389, %v3390
        %v3392 = vrot.slane %v3356, 5
        %v3393 = vrot.slane %v3392, 4
        %v3394 = vrot.slane %v3236, 5
        %v3395 = vsel %vm906, %v3393, %v3394
        %v3396 = vrot.slane %v3357, 5
        %v3397 = vrot.slane %v3396, 4
        %v3398 = vrot.slane %v3237, 5
        %v3399 = vsel %vm906, %v3397, %v3398
        %v3400 = vrot.slane %v3358, 5
        %v3401 = vrot.slane %v3400, 4
        %v3402 = vrot.slane %v3238, 5
        %v3403 = vsel %vm906, %v3401, %v3402
        %v3404 = vrot.slane %v3359, 5
        %v3405 = vrot.slane %v3404, 4
        %v3406 = vrot.slane %v3239, 5
        %v3407 = vsel %vm906, %v3405, %v3406
        %v3408 = vld [vmem:[%s694] sm:$0xf]
        %v3409 = vld [vmem:[%s694 + $0x8] sm:$0xf]
        %v3410 = vld [vmem:[%s694 + $0x10] sm:$0xf]
        %v3411 = vld [vmem:[%s694 + $0x18] sm:$0xf]
        %v3412 = vld [vmem:[%s694 + $0x20] sm:$0xf]
        %v3413 = vld [vmem:[%s694 + $0x28] sm:$0xf]
        %v3414 = vld [vmem:[%s694 + $0x30] sm:$0xf]
        %v3415 = vld [vmem:[%s694 + $0x38] sm:$0xf]
        %v3416 = vld [vmem:[%s694 + $0x4] sm:$0x1]
        %v3417 = vld [vmem:[%s694 + $0xc] sm:$0x1]
        %v3418 = vld [vmem:[%s694 + $0x14] sm:$0x1]
        %v3419 = vld [vmem:[%s694 + $0x1c] sm:$0x1]
        %v3420 = vld [vmem:[%s694 + $0x24] sm:$0x1]
        %v3421 = vld [vmem:[%s694 + $0x2c] sm:$0x1]
        %v3422 = vld [vmem:[%s694 + $0x34] sm:$0x1]
        %v3423 = vld [vmem:[%s694 + $0x3c] sm:$0x1]
        %v3425 = vshrl.u32 %v3408, 16
        %v3427 = vrot.slane %v3425, 4
        %v3428 = vshll.u32 %v3408, 16
        %v3430 = vrot.slane %v3428, 5
        %v3431 = vor.u32 %v3427, %v3430
        %v3432 = vrot.slane %v3431, 4
        %v3434 = vshll.u32 %v3416, 16
        %v3436 = vrot.slane %v3434, 5
        %v3437 = vsel %vm767, %v3432, %v3436
        %v3439 = vshrl.u32 %v3409, 16
        %v3441 = vrot.slane %v3439, 4
        %v3442 = vshll.u32 %v3409, 16
        %v3444 = vrot.slane %v3442, 5
        %v3445 = vor.u32 %v3441, %v3444
        %v3446 = vrot.slane %v3445, 4
        %v3448 = vshll.u32 %v3417, 16
        %v3450 = vrot.slane %v3448, 5
        %v3451 = vsel %vm767, %v3446, %v3450
        %v3453 = vshrl.u32 %v3410, 16
        %v3455 = vrot.slane %v3453, 4
        %v3456 = vshll.u32 %v3410, 16
        %v3458 = vrot.slane %v3456, 5
        %v3459 = vor.u32 %v3455, %v3458
        %v3460 = vrot.slane %v3459, 4
        %v3462 = vshll.u32 %v3418, 16
        %v3464 = vrot.slane %v3462, 5
        %v3465 = vsel %vm767, %v3460, %v3464
        %v3467 = vshrl.u32 %v3411, 16
        %v3469 = vrot.slane %v3467, 4
        %v3470 = vshll.u32 %v3411, 16
        %v3472 = vrot.slane %v3470, 5
        %v3473 = vor.u32 %v3469, %v3472
        %v3474 = vrot.slane %v3473, 4
        %v3476 = vshll.u32 %v3419, 16
        %v3478 = vrot.slane %v3476, 5
        %v3479 = vsel %vm767, %v3474, %v3478
        %v3481 = vshrl.u32 %v3412, 16
        %v3483 = vrot.slane %v3481, 4
        %v3484 = vshll.u32 %v3412, 16
        %v3486 = vrot.slane %v3484, 5
        %v3487 = vor.u32 %v3483, %v3486
        %v3488 = vrot.slane %v3487, 4
        %v3490 = vshll.u32 %v3420, 16
        %v3492 = vrot.slane %v3490, 5
        %v3493 = vsel %vm767, %v3488, %v3492
        %v3495 = vshrl.u32 %v3413, 16
        %v3497 = vrot.slane %v3495, 4
        %v3498 = vshll.u32 %v3413, 16
        %v3500 = vrot.slane %v3498, 5
        %v3501 = vor.u32 %v3497, %v3500
        %v3502 = vrot.slane %v3501, 4
        %v3504 = vshll.u32 %v3421, 16
        %v3506 = vrot.slane %v3504, 5
        %v3507 = vsel %vm767, %v3502, %v3506
        %v3509 = vshrl.u32 %v3414, 16
        %v3511 = vrot.slane %v3509, 4
        %v3512 = vshll.u32 %v3414, 16
        %v3514 = vrot.slane %v3512, 5
        %v3515 = vor.u32 %v3511, %v3514
        %v3516 = vrot.slane %v3515, 4
        %v3518 = vshll.u32 %v3422, 16
        %v3520 = vrot.slane %v3518, 5
        %v3521 = vsel %vm767, %v3516, %v3520
        %v3523 = vshrl.u32 %v3415, 16
        %v3525 = vrot.slane %v3523, 4
        %v3526 = vshll.u32 %v3415, 16
        %v3528 = vrot.slane %v3526, 5
        %v3529 = vor.u32 %v3525, %v3528
        %v3530 = vrot.slane %v3529, 4
        %v3532 = vshll.u32 %v3423, 16
        %v3534 = vrot.slane %v3532, 5
        %v3535 = vsel %vm767, %v3530, %v3534
        %v3536 = vld [vmem:[%s694] sm:$0xe]
        %v3537 = vld [vmem:[%s694 + $0x8] sm:$0xe]
        %v3538 = vld [vmem:[%s694 + $0x10] sm:$0xe]
        %v3539 = vld [vmem:[%s694 + $0x18] sm:$0xe]
        %v3540 = vld [vmem:[%s694 + $0x20] sm:$0xe]
        %v3541 = vld [vmem:[%s694 + $0x28] sm:$0xe]
        %v3542 = vld [vmem:[%s694 + $0x30] sm:$0xe]
        %v3543 = vld [vmem:[%s694 + $0x38] sm:$0xe]
        %v3560 = vrot.slane %v3536, 5
        %v3561 = vrot.slane %v3560, 4
        %v3562 = vrot.slane %v3416, 5
        %v3563 = vsel %vm906, %v3561, %v3562
        %v3564 = vrot.slane %v3537, 5
        %v3565 = vrot.slane %v3564, 4
        %v3566 = vrot.slane %v3417, 5
        %v3567 = vsel %vm906, %v3565, %v3566
        %v3568 = vrot.slane %v3538, 5
        %v3569 = vrot.slane %v3568, 4
        %v3570 = vrot.slane %v3418, 5
        %v3571 = vsel %vm906, %v3569, %v3570
        %v3572 = vrot.slane %v3539, 5
        %v3573 = vrot.slane %v3572, 4
        %v3574 = vrot.slane %v3419, 5
        %v3575 = vsel %vm906, %v3573, %v3574
        %v3576 = vrot.slane %v3540, 5
        %v3577 = vrot.slane %v3576, 4
        %v3578 = vrot.slane %v3420, 5
        %v3579 = vsel %vm906, %v3577, %v3578
        %v3580 = vrot.slane %v3541, 5
        %v3581 = vrot.slane %v3580, 4
        %v3582 = vrot.slane %v3421, 5
        %v3583 = vsel %vm906, %v3581, %v3582
        %v3584 = vrot.slane %v3542, 5
        %v3585 = vrot.slane %v3584, 4
        %v3586 = vrot.slane %v3422, 5
        %v3587 = vsel %vm906, %v3585, %v3586
        %v3588 = vrot.slane %v3543, 5
        %v3589 = vrot.slane %v3588, 4
        %v3590 = vrot.slane %v3423, 5
        %v3591 = vsel %vm906, %v3589, %v3590
        %v3592 = vld [vmem:[%s1123] sm:$0xf]
        %v3593 = vld [vmem:[%s1123 + $0x8] sm:$0xf]
        %v3594 = vld [vmem:[%s1123 + $0x10] sm:$0xf]
        %v3595 = vld [vmem:[%s1123 + $0x18] sm:$0xf]
        %v3596 = vld [vmem:[%s1123 + $0x20] sm:$0xf]
        %v3597 = vld [vmem:[%s1123 + $0x28] sm:$0xf]
        %v3598 = vld [vmem:[%s1123 + $0x30] sm:$0xf]
        %v3599 = vld [vmem:[%s1123 + $0x38] sm:$0xf]
        %v3600 = vld [vmem:[%s1123 + $0x4] sm:$0x1]
        %v3601 = vld [vmem:[%s1123 + $0xc] sm:$0x1]
        %v3602 = vld [vmem:[%s1123 + $0x14] sm:$0x1]
        %v3603 = vld [vmem:[%s1123 + $0x1c] sm:$0x1]
        %v3604 = vld [vmem:[%s1123 + $0x24] sm:$0x1]
        %v3605 = vld [vmem:[%s1123 + $0x2c] sm:$0x1]
        %v3606 = vld [vmem:[%s1123 + $0x34] sm:$0x1]
        %v3607 = vld [vmem:[%s1123 + $0x3c] sm:$0x1]
        %v3609 = vshrl.u32 %v3592, 16
        %v3611 = vrot.slane %v3609, 4
        %v3612 = vshll.u32 %v3592, 16
        %v3614 = vrot.slane %v3612, 5
        %v3615 = vor.u32 %v3611, %v3614
        %v3616 = vrot.slane %v3615, 4
        %v3618 = vshll.u32 %v3600, 16
        %v3620 = vrot.slane %v3618, 5
        %v3621 = vsel %vm767, %v3616, %v3620
        %v3623 = vshrl.u32 %v3593, 16
        %v3625 = vrot.slane %v3623, 4
        %v3626 = vshll.u32 %v3593, 16
        %v3628 = vrot.slane %v3626, 5
        %v3629 = vor.u32 %v3625, %v3628
        %v3630 = vrot.slane %v3629, 4
        %v3632 = vshll.u32 %v3601, 16
        %v3634 = vrot.slane %v3632, 5
        %v3635 = vsel %vm767, %v3630, %v3634
        %v3637 = vshrl.u32 %v3594, 16
        %v3639 = vrot.slane %v3637, 4
        %v3640 = vshll.u32 %v3594, 16
        %v3642 = vrot.slane %v3640, 5
        %v3643 = vor.u32 %v3639, %v3642
        %v3644 = vrot.slane %v3643, 4
        %v3646 = vshll.u32 %v3602, 16
        %v3648 = vrot.slane %v3646, 5
        %v3649 = vsel %vm767, %v3644, %v3648
        %v3651 = vshrl.u32 %v3595, 16
        %v3653 = vrot.slane %v3651, 4
        %v3654 = vshll.u32 %v3595, 16
        %v3656 = vrot.slane %v3654, 5
        %v3657 = vor.u32 %v3653, %v3656
        %v3658 = vrot.slane %v3657, 4
        %v3660 = vshll.u32 %v3603, 16
        %v3662 = vrot.slane %v3660, 5
        %v3663 = vsel %vm767, %v3658, %v3662
        %v3665 = vshrl.u32 %v3596, 16
        %v3667 = vrot.slane %v3665, 4
        %v3668 = vshll.u32 %v3596, 16
        %v3670 = vrot.slane %v3668, 5
        %v3671 = vor.u32 %v3667, %v3670
        %v3672 = vrot.slane %v3671, 4
        %v3674 = vshll.u32 %v3604, 16
        %v3676 = vrot.slane %v3674, 5
        %v3677 = vsel %vm767, %v3672, %v3676
        %v3679 = vshrl.u32 %v3597, 16
        %v3681 = vrot.slane %v3679, 4
        %v3682 = vshll.u32 %v3597, 16
        %v3684 = vrot.slane %v3682, 5
        %v3685 = vor.u32 %v3681, %v3684
        %v3686 = vrot.slane %v3685, 4
        %v3688 = vshll.u32 %v3605, 16
        %v3690 = vrot.slane %v3688, 5
        %v3691 = vsel %vm767, %v3686, %v3690
        %v3693 = vshrl.u32 %v3598, 16
        %v3695 = vrot.slane %v3693, 4
        %v3696 = vshll.u32 %v3598, 16
        %v3698 = vrot.slane %v3696, 5
        %v3699 = vor.u32 %v3695, %v3698
        %v3700 = vrot.slane %v3699, 4
        %v3702 = vshll.u32 %v3606, 16
        %v3704 = vrot.slane %v3702, 5
        %v3705 = vsel %vm767, %v3700, %v3704
        %v3707 = vshrl.u32 %v3599, 16
        %v3709 = vrot.slane %v3707, 4
        %v3710 = vshll.u32 %v3599, 16
        %v3712 = vrot.slane %v3710, 5
        %v3713 = vor.u32 %v3709, %v3712
        %v3714 = vrot.slane %v3713, 4
        %v3716 = vshll.u32 %v3607, 16
        %v3718 = vrot.slane %v3716, 5
        %v3719 = vsel %vm767, %v3714, %v3718
        %v3720 = vld [vmem:[%s1123] sm:$0xe]
        %v3721 = vld [vmem:[%s1123 + $0x8] sm:$0xe]
        %v3722 = vld [vmem:[%s1123 + $0x10] sm:$0xe]
        %v3723 = vld [vmem:[%s1123 + $0x18] sm:$0xe]
        %v3724 = vld [vmem:[%s1123 + $0x20] sm:$0xe]
        %v3725 = vld [vmem:[%s1123 + $0x28] sm:$0xe]
        %v3726 = vld [vmem:[%s1123 + $0x30] sm:$0xe]
        %v3727 = vld [vmem:[%s1123 + $0x38] sm:$0xe]
        %v3744 = vrot.slane %v3720, 5
        %v3745 = vrot.slane %v3744, 4
        %v3746 = vrot.slane %v3600, 5
        %v3747 = vsel %vm906, %v3745, %v3746
        %v3748 = vrot.slane %v3721, 5
        %v3749 = vrot.slane %v3748, 4
        %v3750 = vrot.slane %v3601, 5
        %v3751 = vsel %vm906, %v3749, %v3750
        %v3752 = vrot.slane %v3722, 5
        %v3753 = vrot.slane %v3752, 4
        %v3754 = vrot.slane %v3602, 5
        %v3755 = vsel %vm906, %v3753, %v3754
        %v3756 = vrot.slane %v3723, 5
        %v3757 = vrot.slane %v3756, 4
        %v3758 = vrot.slane %v3603, 5
        %v3759 = vsel %vm906, %v3757, %v3758
        %v3760 = vrot.slane %v3724, 5
        %v3761 = vrot.slane %v3760, 4
        %v3762 = vrot.slane %v3604, 5
        %v3763 = vsel %vm906, %v3761, %v3762
        %v3764 = vrot.slane %v3725, 5
        %v3765 = vrot.slane %v3764, 4
        %v3766 = vrot.slane %v3605, 5
        %v3767 = vsel %vm906, %v3765, %v3766
        %v3768 = vrot.slane %v3726, 5
        %v3769 = vrot.slane %v3768, 4
        %v3770 = vrot.slane %v3606, 5
        %v3771 = vsel %vm906, %v3769, %v3770
        %v3772 = vrot.slane %v3727, 5
        %v3773 = vrot.slane %v3772, 4
        %v3774 = vrot.slane %v3607, 5
        %v3775 = vsel %vm906, %v3773, %v3774
        %v3784 = vunpack.c.l.b16 %v3224
        %v3785 = vunpack.c.l.b16 %v3225
        %v3786 = vunpack.c.l.b16 %v3226
        %v3787 = vunpack.c.l.b16 %v3227
        %v3788 = vunpack.c.l.b16 %v3228
        %v3789 = vunpack.c.l.b16 %v3229
        %v3790 = vunpack.c.l.b16 %v3230
        %v3791 = vunpack.c.l.b16 %v3231
        %v3792 = vpack.c.b16 %v3785, %v3784
        %v3793 = vpack.c.b16 %v3787, %v3786
        %v3794 = vpack.c.b16 %v3789, %v3788
        %v3795 = vpack.c.b16 %v3791, %v3790
        %v3796 = vunpack.c.l.b16 %v3253
        %v3797 = vunpack.c.l.b16 %v3267
        %v3798 = vunpack.c.l.b16 %v3281
        %v3799 = vunpack.c.l.b16 %v3295
        %v3800 = vunpack.c.l.b16 %v3309
        %v3801 = vunpack.c.l.b16 %v3323
        %v3802 = vunpack.c.l.b16 %v3337
        %v3803 = vunpack.c.l.b16 %v3351
        %v3804 = vpack.c.b16 %v3797, %v3796
        %v3805 = vpack.c.b16 %v3799, %v3798
        %v3806 = vpack.c.b16 %v3801, %v3800
        %v3807 = vpack.c.b16 %v3803, %v3802
        %3808 = vrot.lane.b32.xlu0 %v3804, 16
        %v3809 = vpop.permute.xlu0 %3808
        %3810 = vrot.lane.b32.xlu0 %v3805, 16
        %v3811 = vpop.permute.xlu0 %3810
        %3812 = vrot.lane.b32.xlu0 %v3806, 16
        %v3813 = vpop.permute.xlu0 %3812
        %3814 = vrot.lane.b32.xlu0 %v3807, 16
        %v3815 = vpop.permute.xlu0 %3814
        %v3816 = vunpack.c.l.b16 %v3379
        %v3817 = vunpack.c.l.b16 %v3383
        %v3818 = vunpack.c.l.b16 %v3387
        %v3819 = vunpack.c.l.b16 %v3391
        %v3820 = vunpack.c.l.b16 %v3395
        %v3821 = vunpack.c.l.b16 %v3399
        %v3822 = vunpack.c.l.b16 %v3403
        %v3823 = vunpack.c.l.b16 %v3407
        %v3824 = vpack.c.b16 %v3817, %v3816
        %v3825 = vpack.c.b16 %v3819, %v3818
        %v3826 = vpack.c.b16 %v3821, %v3820
        %v3827 = vpack.c.b16 %v3823, %v3822
        %3828 = vrot.lane.b32.xlu0 %v3824, 32
        %v3829 = vpop.permute.xlu0 %3828
        %3830 = vrot.lane.b32.xlu0 %v3825, 32
        %v3831 = vpop.permute.xlu0 %3830
        %3832 = vrot.lane.b32.xlu0 %v3826, 32
        %v3833 = vpop.permute.xlu0 %3832
        %3834 = vrot.lane.b32.xlu0 %v3827, 32
        %v3835 = vpop.permute.xlu0 %3834
        %v3844 = vunpack.c.l.b16 %v3408
        %v3845 = vunpack.c.l.b16 %v3409
        %v3846 = vunpack.c.l.b16 %v3410
        %v3847 = vunpack.c.l.b16 %v3411
        %v3848 = vunpack.c.l.b16 %v3412
        %v3849 = vunpack.c.l.b16 %v3413
        %v3850 = vunpack.c.l.b16 %v3414
        %v3851 = vunpack.c.l.b16 %v3415
        %v3852 = vpack.c.b16 %v3845, %v3844
        %v3853 = vpack.c.b16 %v3847, %v3846
        %v3854 = vpack.c.b16 %v3849, %v3848
        %v3855 = vpack.c.b16 %v3851, %v3850
        %3856 = vrot.lane.b32.xlu0 %v3852, 48
        %v3857 = vpop.permute.xlu0 %3856
        %3858 = vrot.lane.b32.xlu0 %v3853, 48
        %v3859 = vpop.permute.xlu0 %3858
        %3860 = vrot.lane.b32.xlu0 %v3854, 48
        %v3861 = vpop.permute.xlu0 %3860
        %3862 = vrot.lane.b32.xlu0 %v3855, 48
        %v3863 = vpop.permute.xlu0 %3862
        %v3864 = vunpack.c.l.b16 %v3437
        %v3865 = vunpack.c.l.b16 %v3451
        %v3866 = vunpack.c.l.b16 %v3465
        %v3867 = vunpack.c.l.b16 %v3479
        %v3868 = vunpack.c.l.b16 %v3493
        %v3869 = vunpack.c.l.b16 %v3507
        %v3870 = vunpack.c.l.b16 %v3521
        %v3871 = vunpack.c.l.b16 %v3535
        %v3872 = vpack.c.b16 %v3865, %v3864
        %v3873 = vpack.c.b16 %v3867, %v3866
        %v3874 = vpack.c.b16 %v3869, %v3868
        %v3875 = vpack.c.b16 %v3871, %v3870
        %3876 = vrot.lane.b32.xlu0 %v3872, 64
        %v3877 = vpop.permute.xlu0 %3876
        %3878 = vrot.lane.b32.xlu0 %v3873, 64
        %v3879 = vpop.permute.xlu0 %3878
        %3880 = vrot.lane.b32.xlu0 %v3874, 64
        %v3881 = vpop.permute.xlu0 %3880
        %3882 = vrot.lane.b32.xlu0 %v3875, 64
        %v3883 = vpop.permute.xlu0 %3882
        %v3884 = vunpack.c.l.b16 %v3563
        %v3885 = vunpack.c.l.b16 %v3567
        %v3886 = vunpack.c.l.b16 %v3571
        %v3887 = vunpack.c.l.b16 %v3575
        %v3888 = vunpack.c.l.b16 %v3579
        %v3889 = vunpack.c.l.b16 %v3583
        %v3890 = vunpack.c.l.b16 %v3587
        %v3891 = vunpack.c.l.b16 %v3591
        %v3892 = vpack.c.b16 %v3885, %v3884
        %v3893 = vpack.c.b16 %v3887, %v3886
        %v3894 = vpack.c.b16 %v3889, %v3888
        %v3895 = vpack.c.b16 %v3891, %v3890
        %3896 = vrot.lane.b32.xlu0 %v3892, 80
        %v3897 = vpop.permute.xlu0 %3896
        %3898 = vrot.lane.b32.xlu0 %v3893, 80
        %v3899 = vpop.permute.xlu0 %3898
        %3900 = vrot.lane.b32.xlu0 %v3894, 80
        %v3901 = vpop.permute.xlu0 %3900
        %3902 = vrot.lane.b32.xlu0 %v3895, 80
        %v3903 = vpop.permute.xlu0 %3902
        %v3912 = vunpack.c.l.b16 %v3592
        %v3913 = vunpack.c.l.b16 %v3593
        %v3914 = vunpack.c.l.b16 %v3594
        %v3915 = vunpack.c.l.b16 %v3595
        %v3916 = vunpack.c.l.b16 %v3596
        %v3917 = vunpack.c.l.b16 %v3597
        %v3918 = vunpack.c.l.b16 %v3598
        %v3919 = vunpack.c.l.b16 %v3599
        %v3920 = vpack.c.b16 %v3913, %v3912
        %v3921 = vpack.c.b16 %v3915, %v3914
        %v3922 = vpack.c.b16 %v3917, %v3916
        %v3923 = vpack.c.b16 %v3919, %v3918
        %3924 = vrot.lane.b32.xlu0 %v3920, 96
        %v3925 = vpop.permute.xlu0 %3924
        %3926 = vrot.lane.b32.xlu0 %v3921, 96
        %v3927 = vpop.permute.xlu0 %3926
        %3928 = vrot.lane.b32.xlu0 %v3922, 96
        %v3929 = vpop.permute.xlu0 %3928
        %3930 = vrot.lane.b32.xlu0 %v3923, 96
        %v3931 = vpop.permute.xlu0 %3930
        %v3932 = vunpack.c.l.b16 %v3621
        %v3933 = vunpack.c.l.b16 %v3635
        %v3934 = vunpack.c.l.b16 %v3649
        %v3935 = vunpack.c.l.b16 %v3663
        %v3936 = vunpack.c.l.b16 %v3677
        %v3937 = vunpack.c.l.b16 %v3691
        %v3938 = vunpack.c.l.b16 %v3705
        %v3939 = vunpack.c.l.b16 %v3719
        %v3940 = vpack.c.b16 %v3933, %v3932
        %v3941 = vpack.c.b16 %v3935, %v3934
        %v3942 = vpack.c.b16 %v3937, %v3936
        %v3943 = vpack.c.b16 %v3939, %v3938
        %3944 = vrot.lane.b32.xlu0 %v3940, 112
        %v3945 = vpop.permute.xlu0 %3944
        %3946 = vrot.lane.b32.xlu0 %v3941, 112
        %v3947 = vpop.permute.xlu0 %3946
        %3948 = vrot.lane.b32.xlu0 %v3942, 112
        %v3949 = vpop.permute.xlu0 %3948
        %3950 = vrot.lane.b32.xlu0 %v3943, 112
        %v3951 = vpop.permute.xlu0 %3950
        %v3952 = vunpack.c.l.b16 %v3747
        %v3953 = vunpack.c.l.b16 %v3751
        %v3954 = vunpack.c.l.b16 %v3755
        %v3955 = vunpack.c.l.b16 %v3759
        %v3956 = vunpack.c.l.b16 %v3763
        %v3957 = vunpack.c.l.b16 %v3767
        %v3958 = vunpack.c.l.b16 %v3771
        %v3959 = vunpack.c.l.b16 %v3775
        %v3960 = vpack.c.b16 %v3953, %v3952
        %v3961 = vpack.c.b16 %v3955, %v3954
        %v3962 = vpack.c.b16 %v3957, %v3956
        %v3963 = vpack.c.b16 %v3959, %v3958
        %v3966 = vsel %vm1496, %v3792, %v3809
        %v3969 = vsel %vm1496, %v3793, %v3811
        %v3972 = vsel %vm1496, %v3794, %v3813
        %v3975 = vsel %vm1496, %v3795, %v3815
        %v3977 = vsel %vm496, %v3966, %v3829
        %v3979 = vsel %vm496, %v3969, %v3831
        %v3981 = vsel %vm496, %v3972, %v3833
        %v3983 = vsel %vm496, %v3975, %v3835
        %v3985 = vsel %vm1517, %v3977, %v3857
        %v3987 = vsel %vm1517, %v3979, %v3859
        %v3989 = vsel %vm1517, %v3981, %v3861
        %v3991 = vsel %vm1517, %v3983, %v3863
        %v3993 = vsel %vm1526, %v3985, %v3877
        %v3995 = vsel %vm1526, %v3987, %v3879
        %v3997 = vsel %vm1526, %v3989, %v3881
        %v3999 = vsel %vm1526, %v3991, %v3883
        %v4001 = vsel %vm1535, %v3993, %v3897
        %v4003 = vsel %vm1535, %v3995, %v3899
        %v4005 = vsel %vm1535, %v3997, %v3901
        %v4007 = vsel %vm1535, %v3999, %v3903
        %v4009 = vsel %vm1544, %v4001, %v3925
        %v4011 = vsel %vm1544, %v4003, %v3927
        %v4013 = vsel %vm1544, %v4005, %v3929
        %v4015 = vsel %vm1544, %v4007, %v3931
        %v4017 = vsel %vm1553, %v4009, %v3945
        %v4020 = vsel %vm1553, %v4011, %v3947
        %v4023 = vsel %vm1553, %v4013, %v3949
        %v4026 = vsel %vm1553, %v4015, %v3951
        %v4028 = vld [vmem:[%s9] sm:$0xf]
        %v4029 = vld [vmem:[%s9 + $0x4] sm:$0xf]
        %v4030 = vld [vmem:[%s9 + $0x8] sm:$0xf]
        %v4031 = vld [vmem:[%s9 + $0xc] sm:$0xf]
        %v4032 = vld [vmem:[%s9 + $0x10] sm:$0xf]
        %v4033 = vld [vmem:[%s9 + $0x14] sm:$0xf]
        %v4034 = vld [vmem:[%s9 + $0x18] sm:$0xf]
        %v4035 = vld [vmem:[%s9 + $0x1c] sm:$0xf]
        %v4036 = vld [vmem:[%s9 + $0x20] sm:$0xf]
        %v4037 = vld [vmem:[%s9 + $0x24] sm:$0xf]
        %v4038 = vld [vmem:[%s9 + $0x28] sm:$0xf]
        %v4039 = vld [vmem:[%s9 + $0x2c] sm:$0xf]
        %v4040 = vld [vmem:[%s9 + $0x30] sm:$0xf]
        %v4041 = vld [vmem:[%s9 + $0x34] sm:$0xf]
        %v4042 = vld [vmem:[%s9 + $0x38] sm:$0xf]
        %v4043 = vld [vmem:[%s9 + $0x3c] sm:$0xf]
        %v4044 = vld [vmem:[%s9 + $0x40] sm:$0xf]
        %v4045 = vld [vmem:[%s9 + $0x44] sm:$0xf]
        %v4046 = vld [vmem:[%s10] sm:$0x1]
        %v4048 = vlaneseq
        %v4049 = vshrl.u32 %v4048, 7
        %v4050 = vsub.s32 0, %v4049
        %v4051 = vrot.slane %v4046, %v4050
        %v4071 = vunpack.c.l.b16 %v4028
        %v4072 = vunpack.c.l.b16 %v4029
        %v4073 = vunpack.c.l.b16 %v4030
        %v4074 = vunpack.c.l.b16 %v4031
        %v4075 = vunpack.c.l.b16 %v4032
        %v4076 = vunpack.c.l.b16 %v4033
        %v4077 = vunpack.c.l.b16 %v4034
        %v4078 = vunpack.c.l.b16 %v4035
        %v4079 = vunpack.c.l.b16 %v4036
        %v4080 = vunpack.c.l.b16 %v4037
        %v4081 = vunpack.c.l.b16 %v4038
        %v4082 = vunpack.c.l.b16 %v4039
        %v4083 = vunpack.c.l.b16 %v4040
        %v4084 = vunpack.c.l.b16 %v4041
        %v4085 = vunpack.c.l.b16 %v4042
        %v4086 = vunpack.c.l.b16 %v4043
        %v4087 = vunpack.c.l.b16 %v4044
        %v4088 = vunpack.c.l.b16 %v4045
        %v4089 = vpack.c.b16 %v4072, %v4071
        %v4090 = vpack.c.b16 %v4074, %v4073
        %v4091 = vpack.c.b16 %v4076, %v4075
        %v4092 = vpack.c.b16 %v4078, %v4077
        %v4093 = vpack.c.b16 %v4080, %v4079
        %v4094 = vpack.c.b16 %v4082, %v4081
        %v4095 = vpack.c.b16 %v4084, %v4083
        %v4096 = vpack.c.b16 %v4086, %v4085
        %v4097 = vpack.c.b16 %v4088, %v4087
        %v4108 = vsel %vm1496, %v3960, 0
        %v4111 = vsel %vm1496, %v3961, 0
        %v4114 = vsel %vm1496, %v3962, 0
        %v4117 = vsel %vm1496, %v3963, 0
        %4119 = vmatprep.subr.bf16.mxu0 0
        %4120 = vmatpush1.bf16.msra.mxu0 %v4096
        %4121 = vmatprep.subr.bf16.mxu0 0
        %4122 = vmatpush1.bf16.msra.mxu0 %v4095
        %4123 = vmatprep.subr.bf16.mxu0 0
        %4124 = vmatpush1.bf16.msra.mxu0 %v4094
        %4125 = vmatprep.subr.bf16.mxu0 0
        %4126 = vmatpush1.bf16.msra.mxu0 %v4093
        %4127 = vmatprep.subr.bf16.mxu0 0
        %4128 = vmatpush1.bf16.msra.mxu0 %v4092
        %4129 = vmatprep.subr.bf16.mxu0 0
        %4130 = vmatpush1.bf16.msra.mxu0 %v4091
        %4131 = vmatprep.subr.bf16.mxu0 0
        %4132 = vmatpush1.bf16.msra.mxu0 %v4090
        %4133 = vmatprep.subr.bf16.mxu0 0
        %4134 = vmatpush1.bf16.msra.mxu0 %v4089
        %4135 = vmatprep.subr.bf16.mxu0 0
        %4136 = vmatpush2.bf16.msra.mxu0 0
        %4137 = vmatprep.subr.bf16.mxu0 0
        %4138 = vmatpush2.bf16.msra.mxu0 0
        %4139 = vmatprep.subr.bf16.mxu0 0
        %4140 = vmatpush2.bf16.msra.mxu0 0
        %4141 = vmatprep.subr.bf16.mxu0 0
        %4142 = vmatpush2.bf16.msra.mxu0 0
        %4143 = vmatprep.subr.bf16.mxu0 0
        %4144 = vmatpush2.bf16.msra.mxu0 0
        %4145 = vmatprep.subr.bf16.mxu0 0
        %4146 = vmatpush2.bf16.msra.mxu0 0
        %4147 = vmatprep.subr.bf16.mxu0 0
        %4148 = vmatpush2.bf16.msra.mxu0 0
        %4149 = vmatprep.subr.bf16.mxu0 0
        %4150 = vmatpush2.bf16.msra.mxu0 %v4097
        %4151 = vmatprep.mubr.bf16.mxu0 %v4108
        %4152 = vmatmul.mubr.bf16.gmra.mxu0 %v4017
        %v4153 = vpop.f32.mrf.mxu0
        %v4154 = vadd.f32 %v4051, %v4153
        %v4155 = vpop.f32.mrf.mxu0
        %v4156 = vpop.f32.mrf.mxu0
        %v4157 = vadd.f32 %v4051, %v4156
        %v4158 = vpop.f32.mrf.mxu0
        %4159 = vmatprep.mubr.bf16.mxu0 %v4111
        %4160 = vmatmul.mubr.bf16.gmra.mxu0 %v4020
        %v4161 = vpop.f32.mrf.mxu0
        %v4162 = vadd.f32 %v4051, %v4161
        %v4163 = vpop.f32.mrf.mxu0
        %v4164 = vpop.f32.mrf.mxu0
        %v4165 = vadd.f32 %v4051, %v4164
        %v4166 = vpop.f32.mrf.mxu0
        %4167 = vmatprep.mubr.bf16.mxu0 %v4114
        %4168 = vmatmul.mubr.bf16.gmra.mxu0 %v4023
        %v4169 = vpop.f32.mrf.mxu0
        %v4170 = vadd.f32 %v4051, %v4169
        %v4171 = vpop.f32.mrf.mxu0
        %v4172 = vpop.f32.mrf.mxu0
        %v4173 = vadd.f32 %v4051, %v4172
        %v4174 = vpop.f32.mrf.mxu0
        %4175 = vmatprep.mubr.bf16.mxu0 %v4117
        %4176 = vmatmul.mubr.bf16.gmra.mxu0 %v4026
        %v4177 = vpop.f32.mrf.mxu0
        %v4178 = vadd.f32 %v4051, %v4177
        %v4179 = vpop.f32.mrf.mxu0
        %v4180 = vpop.f32.mrf.mxu0
        %v4181 = vadd.f32 %v4051, %v4180
        %v4182 = vpop.f32.mrf.mxu0
        %4183 = vdwg.mxu0
        %v4184 = vmax.f32 %v4154, 0.0
        %v4185 = vmax.f32 %v4157, 0.0
        %v4186 = vmax.f32 %v4162, 0.0
        %v4187 = vmax.f32 %v4165, 0.0
        %v4188 = vmax.f32 %v4170, 0.0
        %v4189 = vmax.f32 %v4173, 0.0
        %v4190 = vmax.f32 %v4178, 0.0
        %v4191 = vmax.f32 %v4181, 0.0
        %v4192 = vpack.c.bf16 %v4184, %v4184
        %v4193 = vpack.c.bf16 %v4185, %v4185
        %v4194 = vpack.c.bf16 %v4186, %v4186
        %v4195 = vpack.c.bf16 %v4187, %v4187
        %v4196 = vpack.c.bf16 %v4188, %v4188
        %v4197 = vpack.c.bf16 %v4189, %v4189
        %v4198 = vpack.c.bf16 %v4190, %v4190
        %v4199 = vpack.c.bf16 %v4191, %v4191
        %v4208 = vunpack.c.l.b16 %v4192
        %v4209 = vunpack.c.l.b16 %v4193
        %v4210 = vunpack.c.l.b16 %v4194
        %v4211 = vunpack.c.l.b16 %v4195
        %v4212 = vunpack.c.l.b16 %v4196
        %v4213 = vunpack.c.l.b16 %v4197
        %v4214 = vunpack.c.l.b16 %v4198
        %v4215 = vunpack.c.l.b16 %v4199
        %v4216 = vpack.c.b16 %v4208, %v4208
        %v4217 = vpack.c.b16 %v4209, %v4209
        %v4218 = vpack.c.b16 %v4210, %v4210
        %v4219 = vpack.c.b16 %v4211, %v4211
        %v4220 = vpack.c.b16 %v4212, %v4212
        %v4221 = vpack.c.b16 %v4213, %v4213
        %v4222 = vpack.c.b16 %v4214, %v4214
        %v4223 = vpack.c.b16 %v4215, %v4215
        %v4225 = vshrl.u32 %v4216, 16
        %v4227 = vrot.slane %v4225, 7
        %v4228 = vshll.u32 %v4216, 16
        %v4230 = vor.u32 %v4227, %v4228
        %v4231 = vrot.slane %v4227, 4
        %v4233 = vshrl.u32 %v4217, 16
        %v4235 = vrot.slane %v4233, 7
        %v4236 = vshll.u32 %v4217, 16
        %v4238 = vor.u32 %v4235, %v4236
        %v4239 = vrot.slane %v4235, 4
        %v4241 = vshrl.u32 %v4218, 16
        %v4243 = vrot.slane %v4241, 7
        %v4244 = vshll.u32 %v4218, 16
        %v4246 = vor.u32 %v4243, %v4244
        %v4247 = vrot.slane %v4243, 4
        %v4249 = vshrl.u32 %v4219, 16
        %v4251 = vrot.slane %v4249, 7
        %v4252 = vshll.u32 %v4219, 16
        %v4254 = vor.u32 %v4251, %v4252
        %v4255 = vrot.slane %v4251, 4
        %v4257 = vshrl.u32 %v4220, 16
        %v4259 = vrot.slane %v4257, 7
        %v4260 = vshll.u32 %v4220, 16
        %v4262 = vor.u32 %v4259, %v4260
        %v4263 = vrot.slane %v4259, 4
        %v4265 = vshrl.u32 %v4221, 16
        %v4267 = vrot.slane %v4265, 7
        %v4268 = vshll.u32 %v4221, 16
        %v4270 = vor.u32 %v4267, %v4268
        %v4271 = vrot.slane %v4267, 4
        %v4273 = vshrl.u32 %v4222, 16
        %v4275 = vrot.slane %v4273, 7
        %v4276 = vshll.u32 %v4222, 16
        %v4278 = vor.u32 %v4275, %v4276
        %v4279 = vrot.slane %v4275, 4
        %v4281 = vshrl.u32 %v4223, 16
        %v4283 = vrot.slane %v4281, 7
        %v4284 = vshll.u32 %v4223, 16
        %v4286 = vor.u32 %v4283, %v4284
        %v4287 = vrot.slane %v4283, 4
        %v4304 = vsel %vm697, %v4230, %v3408
        %4305 = vst [vmem:[%s694] sm:$0xf] %v4304
        %v4306 = vld [vmem:[%s694 + $0x4] sm:$0x1]
        %v4307 = vsel %vm703, %v4231, %v4306
        %4308 = vst [vmem:[%s694 + $0x4] sm:$0x1] %v4307
        %v4309 = vld [vmem:[%s694 + $0x8] sm:$0xf]
        %v4310 = vsel %vm697, %v4238, %v4309
        %4311 = vst [vmem:[%s694 + $0x8] sm:$0xf] %v4310
        %v4312 = vld [vmem:[%s694 + $0xc] sm:$0x1]
        %v4313 = vsel %vm703, %v4239, %v4312
        %4314 = vst [vmem:[%s694 + $0xc] sm:$0x1] %v4313
        %v4315 = vld [vmem:[%s694 + $0x10] sm:$0xf]
        %v4316 = vsel %vm697, %v4246, %v4315
        %4317 = vst [vmem:[%s694 + $0x10] sm:$0xf] %v4316
        %v4318 = vld [vmem:[%s694 + $0x14] sm:$0x1]
        %v4319 = vsel %vm703, %v4247, %v4318
        %4320 = vst [vmem:[%s694 + $0x14] sm:$0x1] %v4319
        %v4321 = vld [vmem:[%s694 + $0x18] sm:$0xf]
        %v4322 = vsel %vm697, %v4254, %v4321
        %4323 = vst [vmem:[%s694 + $0x18] sm:$0xf] %v4322
        %v4324 = vld [vmem:[%s694 + $0x1c] sm:$0x1]
        %v4325 = vsel %vm703, %v4255, %v4324
        %4326 = vst [vmem:[%s694 + $0x1c] sm:$0x1] %v4325
        %v4327 = vld [vmem:[%s694 + $0x20] sm:$0xf]
        %v4328 = vsel %vm697, %v4262, %v4327
        %4329 = vst [vmem:[%s694 + $0x20] sm:$0xf] %v4328
        %v4330 = vld [vmem:[%s694 + $0x24] sm:$0x1]
        %v4331 = vsel %vm703, %v4263, %v4330
        %4332 = vst [vmem:[%s694 + $0x24] sm:$0x1] %v4331
        %v4333 = vld [vmem:[%s694 + $0x28] sm:$0xf]
        %v4334 = vsel %vm697, %v4270, %v4333
        %4335 = vst [vmem:[%s694 + $0x28] sm:$0xf] %v4334
        %v4336 = vld [vmem:[%s694 + $0x2c] sm:$0x1]
        %v4337 = vsel %vm703, %v4271, %v4336
        %4338 = vst [vmem:[%s694 + $0x2c] sm:$0x1] %v4337
        %v4339 = vld [vmem:[%s694 + $0x30] sm:$0xf]
        %v4340 = vsel %vm697, %v4278, %v4339
        %4341 = vst [vmem:[%s694 + $0x30] sm:$0xf] %v4340
        %v4342 = vld [vmem:[%s694 + $0x34] sm:$0x1]
        %v4343 = vsel %vm703, %v4279, %v4342
        %4344 = vst [vmem:[%s694 + $0x34] sm:$0x1] %v4343
        %v4345 = vld [vmem:[%s694 + $0x38] sm:$0xf]
        %v4346 = vsel %vm697, %v4286, %v4345
        %4347 = vst [vmem:[%s694 + $0x38] sm:$0xf] %v4346
        %v4348 = vld [vmem:[%s694 + $0x3c] sm:$0x1]
        %v4349 = vsel %vm703, %v4287, %v4348
        %4350 = vst [vmem:[%s694 + $0x3c] sm:$0x1] %v4349
        %v4351 = vld [vmem:[#allocation2] sm:$0xf]
        %v4352 = vld [vmem:[#allocation2 + $0x8] sm:$0xf]
        %v4353 = vld [vmem:[#allocation2 + $0x10] sm:$0xf]
        %v4354 = vld [vmem:[#allocation2 + $0x18] sm:$0xf]
        %v4355 = vld [vmem:[#allocation2 + $0x20] sm:$0xf]
        %v4356 = vld [vmem:[#allocation2 + $0x28] sm:$0xf]
        %v4357 = vld [vmem:[#allocation2 + $0x30] sm:$0xf]
        %v4358 = vld [vmem:[#allocation2 + $0x38] sm:$0xf]
        %v4359 = vld [vmem:[#allocation2 + $0x4] sm:$0x1]
        %v4360 = vld [vmem:[#allocation2 + $0xc] sm:$0x1]
        %v4361 = vld [vmem:[#allocation2 + $0x14] sm:$0x1]
        %v4362 = vld [vmem:[#allocation2 + $0x1c] sm:$0x1]
        %v4363 = vld [vmem:[#allocation2 + $0x24] sm:$0x1]
        %v4364 = vld [vmem:[#allocation2 + $0x2c] sm:$0x1]
        %v4365 = vld [vmem:[#allocation2 + $0x34] sm:$0x1]
        %v4366 = vld [vmem:[#allocation2 + $0x3c] sm:$0x1]
        %v4368 = vshrl.u32 %v4351, 16
        %v4370 = vrot.slane %v4368, 4
        %v4371 = vshll.u32 %v4351, 16
        %v4373 = vrot.slane %v4371, 5
        %v4374 = vor.u32 %v4370, %v4373
        %v4375 = vrot.slane %v4374, 4
        %v4377 = vshll.u32 %v4359, 16
        %v4379 = vrot.slane %v4377, 5
        %v4380 = vsel %vm767, %v4375, %v4379
        %v4382 = vshrl.u32 %v4352, 16
        %v4384 = vrot.slane %v4382, 4
        %v4385 = vshll.u32 %v4352, 16
        %v4387 = vrot.slane %v4385, 5
        %v4388 = vor.u32 %v4384, %v4387
        %v4389 = vrot.slane %v4388, 4
        %v4391 = vshll.u32 %v4360, 16
        %v4393 = vrot.slane %v4391, 5
        %v4394 = vsel %vm767, %v4389, %v4393
        %v4396 = vshrl.u32 %v4353, 16
        %v4398 = vrot.slane %v4396, 4
        %v4399 = vshll.u32 %v4353, 16
        %v4401 = vrot.slane %v4399, 5
        %v4402 = vor.u32 %v4398, %v4401
        %v4403 = vrot.slane %v4402, 4
        %v4405 = vshll.u32 %v4361, 16
        %v4407 = vrot.slane %v4405, 5
        %v4408 = vsel %vm767, %v4403, %v4407
        %v4410 = vshrl.u32 %v4354, 16
        %v4412 = vrot.slane %v4410, 4
        %v4413 = vshll.u32 %v4354, 16
        %v4415 = vrot.slane %v4413, 5
        %v4416 = vor.u32 %v4412, %v4415
        %v4417 = vrot.slane %v4416, 4
        %v4419 = vshll.u32 %v4362, 16
        %v4421 = vrot.slane %v4419, 5
        %v4422 = vsel %vm767, %v4417, %v4421
        %v4424 = vshrl.u32 %v4355, 16
        %v4426 = vrot.slane %v4424, 4
        %v4427 = vshll.u32 %v4355, 16
        %v4429 = vrot.slane %v4427, 5
        %v4430 = vor.u32 %v4426, %v4429
        %v4431 = vrot.slane %v4430, 4
        %v4433 = vshll.u32 %v4363, 16
        %v4435 = vrot.slane %v4433, 5
        %v4436 = vsel %vm767, %v4431, %v4435
        %v4438 = vshrl.u32 %v4356, 16
        %v4440 = vrot.slane %v4438, 4
        %v4441 = vshll.u32 %v4356, 16
        %v4443 = vrot.slane %v4441, 5
        %v4444 = vor.u32 %v4440, %v4443
        %v4445 = vrot.slane %v4444, 4
        %v4447 = vshll.u32 %v4364, 16
        %v4449 = vrot.slane %v4447, 5
        %v4450 = vsel %vm767, %v4445, %v4449
        %v4452 = vshrl.u32 %v4357, 16
        %v4454 = vrot.slane %v4452, 4
        %v4455 = vshll.u32 %v4357, 16
        %v4457 = vrot.slane %v4455, 5
        %v4458 = vor.u32 %v4454, %v4457
        %v4459 = vrot.slane %v4458, 4
        %v4461 = vshll.u32 %v4365, 16
        %v4463 = vrot.slane %v4461, 5
        %v4464 = vsel %vm767, %v4459, %v4463
        %v4466 = vshrl.u32 %v4358, 16
        %v4468 = vrot.slane %v4466, 4
        %v4469 = vshll.u32 %v4358, 16
        %v4471 = vrot.slane %v4469, 5
        %v4472 = vor.u32 %v4468, %v4471
        %v4473 = vrot.slane %v4472, 4
        %v4475 = vshll.u32 %v4366, 16
        %v4477 = vrot.slane %v4475, 5
        %v4478 = vsel %vm767, %v4473, %v4477
        %v4479 = vld [vmem:[#allocation2] sm:$0xe]
        %v4480 = vld [vmem:[#allocation2 + $0x8] sm:$0xe]
        %v4481 = vld [vmem:[#allocation2 + $0x10] sm:$0xe]
        %v4482 = vld [vmem:[#allocation2 + $0x18] sm:$0xe]
        %v4483 = vld [vmem:[#allocation2 + $0x20] sm:$0xe]
        %v4484 = vld [vmem:[#allocation2 + $0x28] sm:$0xe]
        %v4485 = vld [vmem:[#allocation2 + $0x30] sm:$0xe]
        %v4486 = vld [vmem:[#allocation2 + $0x38] sm:$0xe]
        %v4503 = vrot.slane %v4479, 5
        %v4504 = vrot.slane %v4503, 4
        %v4505 = vrot.slane %v4359, 5
        %v4506 = vsel %vm906, %v4504, %v4505
        %v4507 = vrot.slane %v4480, 5
        %v4508 = vrot.slane %v4507, 4
        %v4509 = vrot.slane %v4360, 5
        %v4510 = vsel %vm906, %v4508, %v4509
        %v4511 = vrot.slane %v4481, 5
        %v4512 = vrot.slane %v4511, 4
        %v4513 = vrot.slane %v4361, 5
        %v4514 = vsel %vm906, %v4512, %v4513
        %v4515 = vrot.slane %v4482, 5
        %v4516 = vrot.slane %v4515, 4
        %v4517 = vrot.slane %v4362, 5
        %v4518 = vsel %vm906, %v4516, %v4517
        %v4519 = vrot.slane %v4483, 5
        %v4520 = vrot.slane %v4519, 4
        %v4521 = vrot.slane %v4363, 5
        %v4522 = vsel %vm906, %v4520, %v4521
        %v4523 = vrot.slane %v4484, 5
        %v4524 = vrot.slane %v4523, 4
        %v4525 = vrot.slane %v4364, 5
        %v4526 = vsel %vm906, %v4524, %v4525
        %v4527 = vrot.slane %v4485, 5
        %v4528 = vrot.slane %v4527, 4
        %v4529 = vrot.slane %v4365, 5
        %v4530 = vsel %vm906, %v4528, %v4529
        %v4531 = vrot.slane %v4486, 5
        %v4532 = vrot.slane %v4531, 4
        %v4533 = vrot.slane %v4366, 5
        %v4534 = vsel %vm906, %v4532, %v4533
        %v4535 = vld [vmem:[%s694] sm:$0xf]
        %v4536 = vld [vmem:[%s694 + $0x8] sm:$0xf]
        %v4537 = vld [vmem:[%s694 + $0x10] sm:$0xf]
        %v4538 = vld [vmem:[%s694 + $0x18] sm:$0xf]
        %v4539 = vld [vmem:[%s694 + $0x20] sm:$0xf]
        %v4540 = vld [vmem:[%s694 + $0x28] sm:$0xf]
        %v4541 = vld [vmem:[%s694 + $0x30] sm:$0xf]
        %v4542 = vld [vmem:[%s694 + $0x38] sm:$0xf]
        %v4543 = vld [vmem:[%s694 + $0x4] sm:$0x1]
        %v4544 = vld [vmem:[%s694 + $0xc] sm:$0x1]
        %v4545 = vld [vmem:[%s694 + $0x14] sm:$0x1]
        %v4546 = vld [vmem:[%s694 + $0x1c] sm:$0x1]
        %v4547 = vld [vmem:[%s694 + $0x24] sm:$0x1]
        %v4548 = vld [vmem:[%s694 + $0x2c] sm:$0x1]
        %v4549 = vld [vmem:[%s694 + $0x34] sm:$0x1]
        %v4550 = vld [vmem:[%s694 + $0x3c] sm:$0x1]
        %v4552 = vshrl.u32 %v4535, 16
        %v4554 = vrot.slane %v4552, 4
        %v4555 = vshll.u32 %v4535, 16
        %v4557 = vrot.slane %v4555, 5
        %v4558 = vor.u32 %v4554, %v4557
        %v4559 = vrot.slane %v4558, 4
        %v4561 = vshll.u32 %v4543, 16
        %v4563 = vrot.slane %v4561, 5
        %v4564 = vsel %vm767, %v4559, %v4563
        %v4566 = vshrl.u32 %v4536, 16
        %v4568 = vrot.slane %v4566, 4
        %v4569 = vshll.u32 %v4536, 16
        %v4571 = vrot.slane %v4569, 5
        %v4572 = vor.u32 %v4568, %v4571
        %v4573 = vrot.slane %v4572, 4
        %v4575 = vshll.u32 %v4544, 16
        %v4577 = vrot.slane %v4575, 5
        %v4578 = vsel %vm767, %v4573, %v4577
        %v4580 = vshrl.u32 %v4537, 16
        %v4582 = vrot.slane %v4580, 4
        %v4583 = vshll.u32 %v4537, 16
        %v4585 = vrot.slane %v4583, 5
        %v4586 = vor.u32 %v4582, %v4585
        %v4587 = vrot.slane %v4586, 4
        %v4589 = vshll.u32 %v4545, 16
        %v4591 = vrot.slane %v4589, 5
        %v4592 = vsel %vm767, %v4587, %v4591
        %v4594 = vshrl.u32 %v4538, 16
        %v4596 = vrot.slane %v4594, 4
        %v4597 = vshll.u32 %v4538, 16
        %v4599 = vrot.slane %v4597, 5
        %v4600 = vor.u32 %v4596, %v4599
        %v4601 = vrot.slane %v4600, 4
        %v4603 = vshll.u32 %v4546, 16
        %v4605 = vrot.slane %v4603, 5
        %v4606 = vsel %vm767, %v4601, %v4605
        %v4608 = vshrl.u32 %v4539, 16
        %v4610 = vrot.slane %v4608, 4
        %v4611 = vshll.u32 %v4539, 16
        %v4613 = vrot.slane %v4611, 5
        %v4614 = vor.u32 %v4610, %v4613
        %v4615 = vrot.slane %v4614, 4
        %v4617 = vshll.u32 %v4547, 16
        %v4619 = vrot.slane %v4617, 5
        %v4620 = vsel %vm767, %v4615, %v4619
        %v4622 = vshrl.u32 %v4540, 16
        %v4624 = vrot.slane %v4622, 4
        %v4625 = vshll.u32 %v4540, 16
        %v4627 = vrot.slane %v4625, 5
        %v4628 = vor.u32 %v4624, %v4627
        %v4629 = vrot.slane %v4628, 4
        %v4631 = vshll.u32 %v4548, 16
        %v4633 = vrot.slane %v4631, 5
        %v4634 = vsel %vm767, %v4629, %v4633
        %v4636 = vshrl.u32 %v4541, 16
        %v4638 = vrot.slane %v4636, 4
        %v4639 = vshll.u32 %v4541, 16
        %v4641 = vrot.slane %v4639, 5
        %v4642 = vor.u32 %v4638, %v4641
        %v4643 = vrot.slane %v4642, 4
        %v4645 = vshll.u32 %v4549, 16
        %v4647 = vrot.slane %v4645, 5
        %v4648 = vsel %vm767, %v4643, %v4647
        %v4650 = vshrl.u32 %v4542, 16
        %v4652 = vrot.slane %v4650, 4
        %v4653 = vshll.u32 %v4542, 16
        %v4655 = vrot.slane %v4653, 5
        %v4656 = vor.u32 %v4652, %v4655
        %v4657 = vrot.slane %v4656, 4
        %v4659 = vshll.u32 %v4550, 16
        %v4661 = vrot.slane %v4659, 5
        %v4662 = vsel %vm767, %v4657, %v4661
        %v4663 = vld [vmem:[%s694] sm:$0xe]
        %v4664 = vld [vmem:[%s694 + $0x8] sm:$0xe]
        %v4665 = vld [vmem:[%s694 + $0x10] sm:$0xe]
        %v4666 = vld [vmem:[%s694 + $0x18] sm:$0xe]
        %v4667 = vld [vmem:[%s694 + $0x20] sm:$0xe]
        %v4668 = vld [vmem:[%s694 + $0x28] sm:$0xe]
        %v4669 = vld [vmem:[%s694 + $0x30] sm:$0xe]
        %v4670 = vld [vmem:[%s694 + $0x38] sm:$0xe]
        %v4687 = vrot.slane %v4663, 5
        %v4688 = vrot.slane %v4687, 4
        %v4689 = vrot.slane %v4543, 5
        %v4690 = vsel %vm906, %v4688, %v4689
        %v4691 = vrot.slane %v4664, 5
        %v4692 = vrot.slane %v4691, 4
        %v4693 = vrot.slane %v4544, 5
        %v4694 = vsel %vm906, %v4692, %v4693
        %v4695 = vrot.slane %v4665, 5
        %v4696 = vrot.slane %v4695, 4
        %v4697 = vrot.slane %v4545, 5
        %v4698 = vsel %vm906, %v4696, %v4697
        %v4699 = vrot.slane %v4666, 5
        %v4700 = vrot.slane %v4699, 4
        %v4701 = vrot.slane %v4546, 5
        %v4702 = vsel %vm906, %v4700, %v4701
        %v4703 = vrot.slane %v4667, 5
        %v4704 = vrot.slane %v4703, 4
        %v4705 = vrot.slane %v4547, 5
        %v4706 = vsel %vm906, %v4704, %v4705
        %v4707 = vrot.slane %v4668, 5
        %v4708 = vrot.slane %v4707, 4
        %v4709 = vrot.slane %v4548, 5
        %v4710 = vsel %vm906, %v4708, %v4709
        %v4711 = vrot.slane %v4669, 5
        %v4712 = vrot.slane %v4711, 4
        %v4713 = vrot.slane %v4549, 5
        %v4714 = vsel %vm906, %v4712, %v4713
        %v4715 = vrot.slane %v4670, 5
        %v4716 = vrot.slane %v4715, 4
        %v4717 = vrot.slane %v4550, 5
        %v4718 = vsel %vm906, %v4716, %v4717
        %v4719 = vld [vmem:[%s1123] sm:$0xf]
        %v4720 = vld [vmem:[%s1123 + $0x8] sm:$0xf]
        %v4721 = vld [vmem:[%s1123 + $0x10] sm:$0xf]
        %v4722 = vld [vmem:[%s1123 + $0x18] sm:$0xf]
        %v4723 = vld [vmem:[%s1123 + $0x20] sm:$0xf]
        %v4724 = vld [vmem:[%s1123 + $0x28] sm:$0xf]
        %v4725 = vld [vmem:[%s1123 + $0x30] sm:$0xf]
        %v4726 = vld [vmem:[%s1123 + $0x38] sm:$0xf]
        %v4727 = vld [vmem:[%s1123 + $0x4] sm:$0x1]
        %v4728 = vld [vmem:[%s1123 + $0xc] sm:$0x1]
        %v4729 = vld [vmem:[%s1123 + $0x14] sm:$0x1]
        %v4730 = vld [vmem:[%s1123 + $0x1c] sm:$0x1]
        %v4731 = vld [vmem:[%s1123 + $0x24] sm:$0x1]
        %v4732 = vld [vmem:[%s1123 + $0x2c] sm:$0x1]
        %v4733 = vld [vmem:[%s1123 + $0x34] sm:$0x1]
        %v4734 = vld [vmem:[%s1123 + $0x3c] sm:$0x1]
        %v4736 = vshrl.u32 %v4719, 16
        %v4738 = vrot.slane %v4736, 4
        %v4739 = vshll.u32 %v4719, 16
        %v4741 = vrot.slane %v4739, 5
        %v4742 = vor.u32 %v4738, %v4741
        %v4743 = vrot.slane %v4742, 4
        %v4745 = vshll.u32 %v4727, 16
        %v4747 = vrot.slane %v4745, 5
        %v4748 = vsel %vm767, %v4743, %v4747
        %v4750 = vshrl.u32 %v4720, 16
        %v4752 = vrot.slane %v4750, 4
        %v4753 = vshll.u32 %v4720, 16
        %v4755 = vrot.slane %v4753, 5
        %v4756 = vor.u32 %v4752, %v4755
        %v4757 = vrot.slane %v4756, 4
        %v4759 = vshll.u32 %v4728, 16
        %v4761 = vrot.slane %v4759, 5
        %v4762 = vsel %vm767, %v4757, %v4761
        %v4764 = vshrl.u32 %v4721, 16
        %v4766 = vrot.slane %v4764, 4
        %v4767 = vshll.u32 %v4721, 16
        %v4769 = vrot.slane %v4767, 5
        %v4770 = vor.u32 %v4766, %v4769
        %v4771 = vrot.slane %v4770, 4
        %v4773 = vshll.u32 %v4729, 16
        %v4775 = vrot.slane %v4773, 5
        %v4776 = vsel %vm767, %v4771, %v4775
        %v4778 = vshrl.u32 %v4722, 16
        %v4780 = vrot.slane %v4778, 4
        %v4781 = vshll.u32 %v4722, 16
        %v4783 = vrot.slane %v4781, 5
        %v4784 = vor.u32 %v4780, %v4783
        %v4785 = vrot.slane %v4784, 4
        %v4787 = vshll.u32 %v4730, 16
        %v4789 = vrot.slane %v4787, 5
        %v4790 = vsel %vm767, %v4785, %v4789
        %v4792 = vshrl.u32 %v4723, 16
        %v4794 = vrot.slane %v4792, 4
        %v4795 = vshll.u32 %v4723, 16
        %v4797 = vrot.slane %v4795, 5
        %v4798 = vor.u32 %v4794, %v4797
        %v4799 = vrot.slane %v4798, 4
        %v4801 = vshll.u32 %v4731, 16
        %v4803 = vrot.slane %v4801, 5
        %v4804 = vsel %vm767, %v4799, %v4803
        %v4806 = vshrl.u32 %v4724, 16
        %v4808 = vrot.slane %v4806, 4
        %v4809 = vshll.u32 %v4724, 16
        %v4811 = vrot.slane %v4809, 5
        %v4812 = vor.u32 %v4808, %v4811
        %v4813 = vrot.slane %v4812, 4
        %v4815 = vshll.u32 %v4732, 16
        %v4817 = vrot.slane %v4815, 5
        %v4818 = vsel %vm767, %v4813, %v4817
        %v4820 = vshrl.u32 %v4725, 16
        %v4822 = vrot.slane %v4820, 4
        %v4823 = vshll.u32 %v4725, 16
        %v4825 = vrot.slane %v4823, 5
        %v4826 = vor.u32 %v4822, %v4825
        %v4827 = vrot.slane %v4826, 4
        %v4829 = vshll.u32 %v4733, 16
        %v4831 = vrot.slane %v4829, 5
        %v4832 = vsel %vm767, %v4827, %v4831
        %v4834 = vshrl.u32 %v4726, 16
        %v4836 = vrot.slane %v4834, 4
        %v4837 = vshll.u32 %v4726, 16
        %v4839 = vrot.slane %v4837, 5
        %v4840 = vor.u32 %v4836, %v4839
        %v4841 = vrot.slane %v4840, 4
        %v4843 = vshll.u32 %v4734, 16
        %v4845 = vrot.slane %v4843, 5
        %v4846 = vsel %vm767, %v4841, %v4845
        %v4847 = vld [vmem:[%s1123] sm:$0xe]
        %v4848 = vld [vmem:[%s1123 + $0x8] sm:$0xe]
        %v4849 = vld [vmem:[%s1123 + $0x10] sm:$0xe]
        %v4850 = vld [vmem:[%s1123 + $0x18] sm:$0xe]
        %v4851 = vld [vmem:[%s1123 + $0x20] sm:$0xe]
        %v4852 = vld [vmem:[%s1123 + $0x28] sm:$0xe]
        %v4853 = vld [vmem:[%s1123 + $0x30] sm:$0xe]
        %v4854 = vld [vmem:[%s1123 + $0x38] sm:$0xe]
        %v4871 = vrot.slane %v4847, 5
        %v4872 = vrot.slane %v4871, 4
        %v4873 = vrot.slane %v4727, 5
        %v4874 = vsel %vm906, %v4872, %v4873
        %v4875 = vrot.slane %v4848, 5
        %v4876 = vrot.slane %v4875, 4
        %v4877 = vrot.slane %v4728, 5
        %v4878 = vsel %vm906, %v4876, %v4877
        %v4879 = vrot.slane %v4849, 5
        %v4880 = vrot.slane %v4879, 4
        %v4881 = vrot.slane %v4729, 5
        %v4882 = vsel %vm906, %v4880, %v4881
        %v4883 = vrot.slane %v4850, 5
        %v4884 = vrot.slane %v4883, 4
        %v4885 = vrot.slane %v4730, 5
        %v4886 = vsel %vm906, %v4884, %v4885
        %v4887 = vrot.slane %v4851, 5
        %v4888 = vrot.slane %v4887, 4
        %v4889 = vrot.slane %v4731, 5
        %v4890 = vsel %vm906, %v4888, %v4889
        %v4891 = vrot.slane %v4852, 5
        %v4892 = vrot.slane %v4891, 4
        %v4893 = vrot.slane %v4732, 5
        %v4894 = vsel %vm906, %v4892, %v4893
        %v4895 = vrot.slane %v4853, 5
        %v4896 = vrot.slane %v4895, 4
        %v4897 = vrot.slane %v4733, 5
        %v4898 = vsel %vm906, %v4896, %v4897
        %v4899 = vrot.slane %v4854, 5
        %v4900 = vrot.slane %v4899, 4
        %v4901 = vrot.slane %v4734, 5
        %v4902 = vsel %vm906, %v4900, %v4901
        %v4911 = vunpack.c.l.b16 %v4351
        %v4912 = vunpack.c.l.b16 %v4352
        %v4913 = vunpack.c.l.b16 %v4353
        %v4914 = vunpack.c.l.b16 %v4354
        %v4915 = vunpack.c.l.b16 %v4355
        %v4916 = vunpack.c.l.b16 %v4356
        %v4917 = vunpack.c.l.b16 %v4357
        %v4918 = vunpack.c.l.b16 %v4358
        %v4919 = vpack.c.b16 %v4912, %v4911
        %v4920 = vpack.c.b16 %v4914, %v4913
        %v4921 = vpack.c.b16 %v4916, %v4915
        %v4922 = vpack.c.b16 %v4918, %v4917
        %v4923 = vunpack.c.l.b16 %v4380
        %v4924 = vunpack.c.l.b16 %v4394
        %v4925 = vunpack.c.l.b16 %v4408
        %v4926 = vunpack.c.l.b16 %v4422
        %v4927 = vunpack.c.l.b16 %v4436
        %v4928 = vunpack.c.l.b16 %v4450
        %v4929 = vunpack.c.l.b16 %v4464
        %v4930 = vunpack.c.l.b16 %v4478
        %v4931 = vpack.c.b16 %v4924, %v4923
        %v4932 = vpack.c.b16 %v4926, %v4925
        %v4933 = vpack.c.b16 %v4928, %v4927
        %v4934 = vpack.c.b16 %v4930, %v4929
        %4935 = vrot.lane.b32.xlu0 %v4931, 16
        %v4936 = vpop.permute.xlu0 %4935
        %4937 = vrot.lane.b32.xlu0 %v4932, 16
        %v4938 = vpop.permute.xlu0 %4937
        %4939 = vrot.lane.b32.xlu0 %v4933, 16
        %v4940 = vpop.permute.xlu0 %4939
        %4941 = vrot.lane.b32.xlu0 %v4934, 16
        %v4942 = vpop.permute.xlu0 %4941
        %v4943 = vunpack.c.l.b16 %v4506
        %v4944 = vunpack.c.l.b16 %v4510
        %v4945 = vunpack.c.l.b16 %v4514
        %v4946 = vunpack.c.l.b16 %v4518
        %v4947 = vunpack.c.l.b16 %v4522
        %v4948 = vunpack.c.l.b16 %v4526
        %v4949 = vunpack.c.l.b16 %v4530
        %v4950 = vunpack.c.l.b16 %v4534
        %v4951 = vpack.c.b16 %v4944, %v4943
        %v4952 = vpack.c.b16 %v4946, %v4945
        %v4953 = vpack.c.b16 %v4948, %v4947
        %v4954 = vpack.c.b16 %v4950, %v4949
        %4955 = vrot.lane.b32.xlu0 %v4951, 32
        %v4956 = vpop.permute.xlu0 %4955
        %4957 = vrot.lane.b32.xlu0 %v4952, 32
        %v4958 = vpop.permute.xlu0 %4957
        %4959 = vrot.lane.b32.xlu0 %v4953, 32
        %v4960 = vpop.permute.xlu0 %4959
        %4961 = vrot.lane.b32.xlu0 %v4954, 32
        %v4962 = vpop.permute.xlu0 %4961
        %v4971 = vunpack.c.l.b16 %v4535
        %v4972 = vunpack.c.l.b16 %v4536
        %v4973 = vunpack.c.l.b16 %v4537
        %v4974 = vunpack.c.l.b16 %v4538
        %v4975 = vunpack.c.l.b16 %v4539
        %v4976 = vunpack.c.l.b16 %v4540
        %v4977 = vunpack.c.l.b16 %v4541
        %v4978 = vunpack.c.l.b16 %v4542
        %v4979 = vpack.c.b16 %v4972, %v4971
        %v4980 = vpack.c.b16 %v4974, %v4973
        %v4981 = vpack.c.b16 %v4976, %v4975
        %v4982 = vpack.c.b16 %v4978, %v4977
        %4983 = vrot.lane.b32.xlu0 %v4979, 48
        %v4984 = vpop.permute.xlu0 %4983
        %4985 = vrot.lane.b32.xlu0 %v4980, 48
        %v4986 = vpop.permute.xlu0 %4985
        %4987 = vrot.lane.b32.xlu0 %v4981, 48
        %v4988 = vpop.permute.xlu0 %4987
        %4989 = vrot.lane.b32.xlu0 %v4982, 48
        %v4990 = vpop.permute.xlu0 %4989
        %v4991 = vunpack.c.l.b16 %v4564
        %v4992 = vunpack.c.l.b16 %v4578
        %v4993 = vunpack.c.l.b16 %v4592
        %v4994 = vunpack.c.l.b16 %v4606
        %v4995 = vunpack.c.l.b16 %v4620
        %v4996 = vunpack.c.l.b16 %v4634
        %v4997 = vunpack.c.l.b16 %v4648
        %v4998 = vunpack.c.l.b16 %v4662
        %v4999 = vpack.c.b16 %v4992, %v4991
        %v5000 = vpack.c.b16 %v4994, %v4993
        %v5001 = vpack.c.b16 %v4996, %v4995
        %v5002 = vpack.c.b16 %v4998, %v4997
        %5003 = vrot.lane.b32.xlu0 %v4999, 64
        %v5004 = vpop.permute.xlu0 %5003
        %5005 = vrot.lane.b32.xlu0 %v5000, 64
        %v5006 = vpop.permute.xlu0 %5005
        %5007 = vrot.lane.b32.xlu0 %v5001, 64
        %v5008 = vpop.permute.xlu0 %5007
        %5009 = vrot.lane.b32.xlu0 %v5002, 64
        %v5010 = vpop.permute.xlu0 %5009
        %v5011 = vunpack.c.l.b16 %v4690
        %v5012 = vunpack.c.l.b16 %v4694
        %v5013 = vunpack.c.l.b16 %v4698
        %v5014 = vunpack.c.l.b16 %v4702
        %v5015 = vunpack.c.l.b16 %v4706
        %v5016 = vunpack.c.l.b16 %v4710
        %v5017 = vunpack.c.l.b16 %v4714
        %v5018 = vunpack.c.l.b16 %v4718
        %v5019 = vpack.c.b16 %v5012, %v5011
        %v5020 = vpack.c.b16 %v5014, %v5013
        %v5021 = vpack.c.b16 %v5016, %v5015
        %v5022 = vpack.c.b16 %v5018, %v5017
        %5023 = vrot.lane.b32.xlu0 %v5019, 80
        %v5024 = vpop.permute.xlu0 %5023
        %5025 = vrot.lane.b32.xlu0 %v5020, 80
        %v5026 = vpop.permute.xlu0 %5025
        %5027 = vrot.lane.b32.xlu0 %v5021, 80
        %v5028 = vpop.permute.xlu0 %5027
        %5029 = vrot.lane.b32.xlu0 %v5022, 80
        %v5030 = vpop.permute.xlu0 %5029
        %v5039 = vunpack.c.l.b16 %v4719
        %v5040 = vunpack.c.l.b16 %v4720
        %v5041 = vunpack.c.l.b16 %v4721
        %v5042 = vunpack.c.l.b16 %v4722
        %v5043 = vunpack.c.l.b16 %v4723
        %v5044 = vunpack.c.l.b16 %v4724
        %v5045 = vunpack.c.l.b16 %v4725
        %v5046 = vunpack.c.l.b16 %v4726
        %v5047 = vpack.c.b16 %v5040, %v5039
        %v5048 = vpack.c.b16 %v5042, %v5041
        %v5049 = vpack.c.b16 %v5044, %v5043
        %v5050 = vpack.c.b16 %v5046, %v5045
        %5051 = vrot.lane.b32.xlu0 %v5047, 96
        %v5052 = vpop.permute.xlu0 %5051
        %5053 = vrot.lane.b32.xlu0 %v5048, 96
        %v5054 = vpop.permute.xlu0 %5053
        %5055 = vrot.lane.b32.xlu0 %v5049, 96
        %v5056 = vpop.permute.xlu0 %5055
        %5057 = vrot.lane.b32.xlu0 %v5050, 96
        %v5058 = vpop.permute.xlu0 %5057
        %v5059 = vunpack.c.l.b16 %v4748
        %v5060 = vunpack.c.l.b16 %v4762
        %v5061 = vunpack.c.l.b16 %v4776
        %v5062 = vunpack.c.l.b16 %v4790
        %v5063 = vunpack.c.l.b16 %v4804
        %v5064 = vunpack.c.l.b16 %v4818
        %v5065 = vunpack.c.l.b16 %v4832
        %v5066 = vunpack.c.l.b16 %v4846
        %v5067 = vpack.c.b16 %v5060, %v5059
        %v5068 = vpack.c.b16 %v5062, %v5061
        %v5069 = vpack.c.b16 %v5064, %v5063
        %v5070 = vpack.c.b16 %v5066, %v5065
        %5071 = vrot.lane.b32.xlu0 %v5067, 112
        %v5072 = vpop.permute.xlu0 %5071
        %5073 = vrot.lane.b32.xlu0 %v5068, 112
        %v5074 = vpop.permute.xlu0 %5073
        %5075 = vrot.lane.b32.xlu0 %v5069, 112
        %v5076 = vpop.permute.xlu0 %5075
        %5077 = vrot.lane.b32.xlu0 %v5070, 112
        %v5078 = vpop.permute.xlu0 %5077
        %v5079 = vunpack.c.l.b16 %v4874
        %v5080 = vunpack.c.l.b16 %v4878
        %v5081 = vunpack.c.l.b16 %v4882
        %v5082 = vunpack.c.l.b16 %v4886
        %v5083 = vunpack.c.l.b16 %v4890
        %v5084 = vunpack.c.l.b16 %v4894
        %v5085 = vunpack.c.l.b16 %v4898
        %v5086 = vunpack.c.l.b16 %v4902
        %v5087 = vpack.c.b16 %v5080, %v5079
        %v5088 = vpack.c.b16 %v5082, %v5081
        %v5089 = vpack.c.b16 %v5084, %v5083
        %v5090 = vpack.c.b16 %v5086, %v5085
        %v5093 = vsel %vm1496, %v4919, %v4936
        %v5096 = vsel %vm1496, %v4920, %v4938
        %v5099 = vsel %vm1496, %v4921, %v4940
        %v5102 = vsel %vm1496, %v4922, %v4942
        %v5104 = vsel %vm496, %v5093, %v4956
        %v5106 = vsel %vm496, %v5096, %v4958
        %v5108 = vsel %vm496, %v5099, %v4960
        %v5110 = vsel %vm496, %v5102, %v4962
        %v5112 = vsel %vm1517, %v5104, %v4984
        %v5114 = vsel %vm1517, %v5106, %v4986
        %v5116 = vsel %vm1517, %v5108, %v4988
        %v5118 = vsel %vm1517, %v5110, %v4990
        %v5120 = vsel %vm1526, %v5112, %v5004
        %v5122 = vsel %vm1526, %v5114, %v5006
        %v5124 = vsel %vm1526, %v5116, %v5008
        %v5126 = vsel %vm1526, %v5118, %v5010
        %v5128 = vsel %vm1535, %v5120, %v5024
        %v5130 = vsel %vm1535, %v5122, %v5026
        %v5132 = vsel %vm1535, %v5124, %v5028
        %v5134 = vsel %vm1535, %v5126, %v5030
        %v5136 = vsel %vm1544, %v5128, %v5052
        %v5138 = vsel %vm1544, %v5130, %v5054
        %v5140 = vsel %vm1544, %v5132, %v5056
        %v5142 = vsel %vm1544, %v5134, %v5058
        %v5144 = vsel %vm1553, %v5136, %v5072
        %v5147 = vsel %vm1553, %v5138, %v5074
        %v5150 = vsel %vm1553, %v5140, %v5076
        %v5153 = vsel %vm1553, %v5142, %v5078
        %v5155 = vld [vmem:[%s11] sm:$0xf]
        %v5156 = vld [vmem:[%s11 + $0x4] sm:$0xf]
        %v5157 = vld [vmem:[%s11 + $0x8] sm:$0xf]
        %v5158 = vld [vmem:[%s11 + $0xc] sm:$0xf]
        %v5159 = vld [vmem:[%s11 + $0x10] sm:$0xf]
        %v5160 = vld [vmem:[%s11 + $0x14] sm:$0xf]
        %v5161 = vld [vmem:[%s11 + $0x18] sm:$0xf]
        %v5162 = vld [vmem:[%s11 + $0x1c] sm:$0xf]
        %v5163 = vld [vmem:[%s11 + $0x20] sm:$0xf]
        %v5164 = vld [vmem:[%s11 + $0x24] sm:$0xf]
        %v5165 = vld [vmem:[%s11 + $0x28] sm:$0xf]
        %v5166 = vld [vmem:[%s11 + $0x2c] sm:$0xf]
        %v5167 = vld [vmem:[%s11 + $0x30] sm:$0xf]
        %v5168 = vld [vmem:[%s11 + $0x34] sm:$0xf]
        %v5169 = vld [vmem:[%s11 + $0x38] sm:$0xf]
        %v5170 = vld [vmem:[%s11 + $0x3c] sm:$0xf]
        %v5171 = vld [vmem:[%s11 + $0x40] sm:$0xf]
        %v5172 = vld [vmem:[%s11 + $0x44] sm:$0xf]
        %v5173 = vld [vmem:[%s12] sm:$0x1]
        %v5175 = vlaneseq
        %v5176 = vshrl.u32 %v5175, 7
        %v5177 = vsub.s32 0, %v5176
        %v5178 = vrot.slane %v5173, %v5177
        %v5198 = vunpack.c.l.b16 %v5155
        %v5199 = vunpack.c.l.b16 %v5156
        %v5200 = vunpack.c.l.b16 %v5157
        %v5201 = vunpack.c.l.b16 %v5158
        %v5202 = vunpack.c.l.b16 %v5159
        %v5203 = vunpack.c.l.b16 %v5160
        %v5204 = vunpack.c.l.b16 %v5161
        %v5205 = vunpack.c.l.b16 %v5162
        %v5206 = vunpack.c.l.b16 %v5163
        %v5207 = vunpack.c.l.b16 %v5164
        %v5208 = vunpack.c.l.b16 %v5165
        %v5209 = vunpack.c.l.b16 %v5166
        %v5210 = vunpack.c.l.b16 %v5167
        %v5211 = vunpack.c.l.b16 %v5168
        %v5212 = vunpack.c.l.b16 %v5169
        %v5213 = vunpack.c.l.b16 %v5170
        %v5214 = vunpack.c.l.b16 %v5171
        %v5215 = vunpack.c.l.b16 %v5172
        %v5216 = vpack.c.b16 %v5199, %v5198
        %v5217 = vpack.c.b16 %v5201, %v5200
        %v5218 = vpack.c.b16 %v5203, %v5202
        %v5219 = vpack.c.b16 %v5205, %v5204
        %v5220 = vpack.c.b16 %v5207, %v5206
        %v5221 = vpack.c.b16 %v5209, %v5208
        %v5222 = vpack.c.b16 %v5211, %v5210
        %v5223 = vpack.c.b16 %v5213, %v5212
        %v5224 = vpack.c.b16 %v5215, %v5214
        %v5235 = vsel %vm1496, %v5087, 0
        %v5238 = vsel %vm1496, %v5088, 0
        %v5241 = vsel %vm1496, %v5089, 0
        %v5244 = vsel %vm1496, %v5090, 0
        %5246 = vmatprep.subr.bf16.mxu0 0
        %5247 = vmatpush1.bf16.msra.mxu0 %v5223
        %5248 = vmatprep.subr.bf16.mxu0 0
        %5249 = vmatpush1.bf16.msra.mxu0 %v5222
        %5250 = vmatprep.subr.bf16.mxu0 0
        %5251 = vmatpush1.bf16.msra.mxu0 %v5221
        %5252 = vmatprep.subr.bf16.mxu0 0
        %5253 = vmatpush1.bf16.msra.mxu0 %v5220
        %5254 = vmatprep.subr.bf16.mxu0 0
        %5255 = vmatpush1.bf16.msra.mxu0 %v5219
        %5256 = vmatprep.subr.bf16.mxu0 0
        %5257 = vmatpush1.bf16.msra.mxu0 %v5218
        %5258 = vmatprep.subr.bf16.mxu0 0
        %5259 = vmatpush1.bf16.msra.mxu0 %v5217
        %5260 = vmatprep.subr.bf16.mxu0 0
        %5261 = vmatpush1.bf16.msra.mxu0 %v5216
        %5262 = vmatprep.subr.bf16.mxu0 0
        %5263 = vmatpush2.bf16.msra.mxu0 0
        %5264 = vmatprep.subr.bf16.mxu0 0
        %5265 = vmatpush2.bf16.msra.mxu0 0
        %5266 = vmatprep.subr.bf16.mxu0 0
        %5267 = vmatpush2.bf16.msra.mxu0 0
        %5268 = vmatprep.subr.bf16.mxu0 0
        %5269 = vmatpush2.bf16.msra.mxu0 0
        %5270 = vmatprep.subr.bf16.mxu0 0
        %5271 = vmatpush2.bf16.msra.mxu0 0
        %5272 = vmatprep.subr.bf16.mxu0 0
        %5273 = vmatpush2.bf16.msra.mxu0 0
        %5274 = vmatprep.subr.bf16.mxu0 0
        %5275 = vmatpush2.bf16.msra.mxu0 0
        %5276 = vmatprep.subr.bf16.mxu0 0
        %5277 = vmatpush2.bf16.msra.mxu0 %v5224
        %5278 = vmatprep.mubr.bf16.mxu0 %v5235
        %5279 = vmatmul.mubr.bf16.gmra.mxu0 %v5144
        %v5280 = vpop.f32.mrf.mxu0
        %v5281 = vadd.f32 %v5178, %v5280
        %v5282 = vpop.f32.mrf.mxu0
        %v5283 = vpop.f32.mrf.mxu0
        %v5284 = vadd.f32 %v5178, %v5283
        %v5285 = vpop.f32.mrf.mxu0
        %5286 = vmatprep.mubr.bf16.mxu0 %v5238
        %5287 = vmatmul.mubr.bf16.gmra.mxu0 %v5147
        %v5288 = vpop.f32.mrf.mxu0
        %v5289 = vadd.f32 %v5178, %v5288
        %v5290 = vpop.f32.mrf.mxu0
        %v5291 = vpop.f32.mrf.mxu0
        %v5292 = vadd.f32 %v5178, %v5291
        %v5293 = vpop.f32.mrf.mxu0
        %5294 = vmatprep.mubr.bf16.mxu0 %v5241
        %5295 = vmatmul.mubr.bf16.gmra.mxu0 %v5150
        %v5296 = vpop.f32.mrf.mxu0
        %v5297 = vadd.f32 %v5178, %v5296
        %v5298 = vpop.f32.mrf.mxu0
        %v5299 = vpop.f32.mrf.mxu0
        %v5300 = vadd.f32 %v5178, %v5299
        %v5301 = vpop.f32.mrf.mxu0
        %5302 = vmatprep.mubr.bf16.mxu0 %v5244
        %5303 = vmatmul.mubr.bf16.gmra.mxu0 %v5153
        %v5304 = vpop.f32.mrf.mxu0
        %v5305 = vadd.f32 %v5178, %v5304
        %v5306 = vpop.f32.mrf.mxu0
        %v5307 = vpop.f32.mrf.mxu0
        %v5308 = vadd.f32 %v5178, %v5307
        %v5309 = vpop.f32.mrf.mxu0
        %5310 = vdwg.mxu0
        %v5311 = vmax.f32 %v5281, 0.0
        %v5312 = vmax.f32 %v5284, 0.0
        %v5313 = vmax.f32 %v5289, 0.0
        %v5314 = vmax.f32 %v5292, 0.0
        %v5315 = vmax.f32 %v5297, 0.0
        %v5316 = vmax.f32 %v5300, 0.0
        %v5317 = vmax.f32 %v5305, 0.0
        %v5318 = vmax.f32 %v5308, 0.0
        %5327 = vrot.lane.b32.xlu0 %v4184, 64
        %v5328 = vpop.permute.xlu0 %5327
        %5329 = vrot.lane.b32.xlu0 %v4185, 64
        %v5330 = vpop.permute.xlu0 %5329
        %5331 = vrot.lane.b32.xlu0 %v4186, 64
        %v5332 = vpop.permute.xlu0 %5331
        %5333 = vrot.lane.b32.xlu0 %v4187, 64
        %v5334 = vpop.permute.xlu0 %5333
        %5335 = vrot.lane.b32.xlu0 %v4188, 64
        %v5336 = vpop.permute.xlu0 %5335
        %5337 = vrot.lane.b32.xlu0 %v4189, 64
        %v5338 = vpop.permute.xlu0 %5337
        %5339 = vrot.lane.b32.xlu0 %v4190, 64
        %v5340 = vpop.permute.xlu0 %5339
        %5341 = vrot.lane.b32.xlu0 %v4191, 64
        %v5342 = vpop.permute.xlu0 %5341
        %5359 = vrot.lane.b32.xlu0 %v5311, 80
        %v5360 = vpop.permute.xlu0 %5359
        %5361 = vrot.lane.b32.xlu0 %v5312, 80
        %v5362 = vpop.permute.xlu0 %5361
        %5363 = vrot.lane.b32.xlu0 %v5313, 80
        %v5364 = vpop.permute.xlu0 %5363
        %5365 = vrot.lane.b32.xlu0 %v5314, 80
        %v5366 = vpop.permute.xlu0 %5365
        %5367 = vrot.lane.b32.xlu0 %v5315, 80
        %v5368 = vpop.permute.xlu0 %5367
        %5369 = vrot.lane.b32.xlu0 %v5316, 80
        %v5370 = vpop.permute.xlu0 %5369
        %5371 = vrot.lane.b32.xlu0 %v5317, 80
        %v5372 = vpop.permute.xlu0 %5371
        %5373 = vrot.lane.b32.xlu0 %v5318, 80
        %v5374 = vpop.permute.xlu0 %5373
        %v5383 = vsel %vm1526, %v2929, %v5328
        %v5384 = vsel %vm1526, %v2930, %v5330
        %v5385 = vsel %vm1526, %v2931, %v5332
        %v5386 = vsel %vm1526, %v2932, %v5334
        %v5387 = vsel %vm1526, %v2933, %v5336
        %v5388 = vsel %vm1526, %v2934, %v5338
        %v5389 = vsel %vm1526, %v2935, %v5340
        %v5390 = vsel %vm1526, %v2936, %v5342
        %v5391 = vsel %vm1535, %v5383, %v5360
        %v5392 = vsel %vm1535, %v5384, %v5362
        %v5393 = vsel %vm1535, %v5385, %v5364
        %v5394 = vsel %vm1535, %v5386, %v5366
        %v5395 = vsel %vm1535, %v5387, %v5368
        %v5396 = vsel %vm1535, %v5388, %v5370
        %v5397 = vsel %vm1535, %v5389, %v5372
        %v5398 = vsel %vm1535, %v5390, %v5374
        %v5399 = vsel %vm1544, %v5391, 0.0
        %v5400 = vsel %vm1544, %v5392, 0.0
        %v5401 = vsel %vm1544, %v5393, 0.0
        %v5402 = vsel %vm1544, %v5394, 0.0
        %v5403 = vsel %vm1544, %v5395, 0.0
        %v5404 = vsel %vm1544, %v5396, 0.0
        %v5405 = vsel %vm1544, %v5397, 0.0
        %v5406 = vsel %vm1544, %v5398, 0.0
        %5407 = vst [vmem:[%s433] sm:$0xff] %v5399
        %5408 = vst [vmem:[%s433 + $0x8] sm:$0xff] %v5400
        %5409 = vst [vmem:[%s433 + $0x10] sm:$0xff] %v5401
        %5410 = vst [vmem:[%s433 + $0x18] sm:$0xff] %v5402
        %5411 = vst [vmem:[%s433 + $0x20] sm:$0xff] %v5403
        %5412 = vst [vmem:[%s433 + $0x28] sm:$0xff] %v5404
        %5413 = vst [vmem:[%s433 + $0x30] sm:$0xff] %v5405
        %5414 = vst [vmem:[%s433 + $0x38] sm:$0xff] %v5406
        %s5415 = sand.u32 %s313, 1
        %s5416 = scalar_lea.sflag [#allocation4], %s5415
        %s5417 = sand.u32 %s313, 1
        %s5418 = smul.addr %s5417, 64
        %s5419 = scalar_lea.vmem [#allocation3], %s5418
        // Predicated region
        $region73: #{tpu_custom_call.1} parent=71 // pred_check
          %p5420 = pneg %p323
        $region74: #{tpu_custom_call.1} parent=71 // pred_check_branch
          %5422 = sbr.rel (%p5420) target = $region76
        $region75: #{tpu_custom_call.1} parent=71 // pred_region
          %s5424 = ssub.s32 1024, 1024
          %5425 = vsyncadd %s5416, %s5424
          %s5426 = smul.addr %s27, 8
          %s5427 = smul.addr %s5426, 128
          %s5428 = scalar_lea.hbm %s13, %s5427
          %s5429 = sshll.u32 %s5419, 4
          %s5430 = int_to_ptr.vmem [resolvable:$true] %s5429
          %5435 = dma.vmem_to_hbm [thread:$0]  %s5430, 1024, %s5428, %s5416, 128, 128, 8
        $region76: #{tpu_custom_call.1} parent=71 // pred_fallthru
          _
      $region72: #{tpu_custom_call.1} parent=5 // pred_fallthru
        _
      %p5436 = scmp.le.s32.totalorder 2, %s22
      // Predicated region
      $region77: #{tpu_custom_call.1} parent=5 // pred_check
        %p5437 = pneg %p5436
      $region78: #{tpu_custom_call.1} parent=5 // pred_check_branch
        %5439 = sbr.rel (%p5437) target = $region80
      $region79: #{tpu_custom_call.1} parent=5 // pred_region
        %s5440 = ssub.s32 %s22, 2
        // Predicated region
        $region81: #{tpu_custom_call.1} parent=79 // pred_check
          %p5441 = pneg %p329
        $region82: #{tpu_custom_call.1} parent=79 // pred_check_branch
          %5443 = sbr.rel (%p5441) target = $region84
        $region83: #{tpu_custom_call.1} parent=79 // pred_region
          %s5444 = sand.u32 %s314, 1
          %s5445 = scalar_lea.sflag [#allocation4], %s5444
          %s5446 = sand.u32 %s314, 1
          %s5447 = smul.addr %s5446, 64
          %s5448 = scalar_lea.vmem [#allocation3], %s5447
          %5449 = dma.done %s5445, 1024
        $region84: #{tpu_custom_call.1} parent=79 // pred_fallthru
          _
      $region80: #{tpu_custom_call.1} parent=5 // pred_fallthru
        _
    $region6: #{tpu_custom_call.1} parent=1 // loop_footer
      %s26 = sadd.s32 1, %s22
    $region7: #{tpu_custom_call.1} parent=1 // loop_footer_branch
      %21 = sbr.rel target = $region3
    $region8: #{tpu_custom_call.1} parent=1 // loop_exit
      _
    %5450 = vsyncpa [#allocation4], 1
    %s5451 = scalar_lea.sflag [#allocation4], 1
    %5452 = vsyncpa %s5451, 1

</llo_original>
